<compile_context>
chip_gen: v6e
topology: v6e:2x2x1
jax: 0.10.0
libtpu: 0.0.40
codegen_flags: <defaults>
</compile_context>

<pallas_src>
import jax
import jax.numpy as jnp
import numpy as np
from jax import lax
from jax.experimental import pallas as pl
from jax.experimental.pallas import tpu as pltpu


# ----------------------------------------------------------------------------------------
# Kernel
# ----------------------------------------------------------------------------------------
def pointer_decoder_kernel(
    emb_ref, dec_in_ref, h0_ref, c0_ref, ctx_in_ref,
    w_ih_ref, w_hh_ref, b_cat_ref, w_h2_ref, w_out_a_ref,
    b_il_ref, b_out_ref, w_cl_ref, b_cl_ref, v_ref,
    alphas_ref, ptrs_ref, h_out_ref, c_out_ref,
):
    emb = emb_ref[...]                       # [Bt, S, E]   (act dtype)
    Bt, S, _ = emb.shape
    H = h0_ref.shape[-1]
    T = alphas_ref.shape[1]
    act_dtype = emb.dtype

    w_ih = w_ih_ref[...]                     # [E, 4H]   input_to_hidden (mxu dtype)
    w_hh = w_hh_ref[...]                     # [H, 4H]   hidden_to_hidden
    w_h2 = w_h2_ref[...]                     # [H, 2H]   [att.input_linear | hidden_out(h_t half)]
    w_out_a = w_out_a_ref[...]               # [H, H]    hidden_out (attn-output half)
    w_cl = w_cl_ref[...]                     # [H, H]    att.context_linear (conv1d k=1)
    # Loop-invariant broadcasts hoisted once (JAX does not CSE broadcast_in_dim).
    b_cat = jnp.broadcast_to(b_cat_ref[...], (Bt, 4 * H))     # f32
    b_il = jnp.broadcast_to(b_il_ref[...], (Bt, H))           # f32
    b_out = jnp.broadcast_to(b_out_ref[...], (Bt, H))         # f32
    v3 = v_ref[...].reshape(1, 1, H)                          # act dtype

    def mm(a, w):
        # MXU matmul: operands in the (possibly bf16) weight dtype, f32 accumulation.
        return jnp.dot(a.astype(w.dtype), w, preferred_element_type=jnp.float32)

    # Conv1d(kernel=1) over context is step-independent -> one matmul per batch tile.
    ctx = (mm(ctx_in_ref[...].reshape(Bt * S, H), w_cl) + b_cl_ref[...]
           ).reshape(Bt, S, H).astype(act_dtype)               # [Bt, S, H]

    col = lax.broadcasted_iota(jnp.int32, (Bt, S), 1)          # position ids (hoisted)
    neg_inf = jnp.float32(-jnp.inf)

    def step(t, h, c, mask, x):
        # ---- LSTM cell: two matmuls into one f32 gate accumulator (no per-step concat) ----
        gates = mm(x, w_ih) + mm(h, w_hh) + b_cat              # [Bt, 4H] f32
        i_g = jax.nn.sigmoid(gates[:, 0 * H:1 * H])
        f_g = jax.nn.sigmoid(gates[:, 1 * H:2 * H])
        g_g = jnp.tanh(gates[:, 2 * H:3 * H])
        o_g = jax.nn.sigmoid(gates[:, 3 * H:4 * H])
        c_t = f_g * c + i_g * g_g
        h_t = o_g * jnp.tanh(c_t)

        # ---- PointerAttention (input_linear + h_t half of hidden_out fused: one matmul) ----
        hlin = mm(h_t, w_h2)                                   # [Bt, 2H] f32
        inp = hlin[:, :H] + b_il                               # [Bt, H]  f32
        u = jnp.tanh(inp.astype(act_dtype)[:, None, :] + ctx)  # [Bt, S, H] (EUP tanh)
        att = jnp.sum(u * v3, axis=2, dtype=jnp.float32)       # [Bt, S] lane reduce, f32 acc
        att = jnp.where(mask == 0.0, neg_inf, att)             # att[mask] = -inf
        att_max = jnp.max(att, axis=1, keepdims=True)
        e = jnp.exp(att - att_max)
        # Exact normalization: approx reciprocal error would feed back recurrently.
        alpha = e * (1.0 / jnp.sum(e, axis=1, keepdims=True))  # [Bt, S] f32

        # alpha @ ctx as VPU multiply + sublane reduce (no M=1 MXU matmuls).
        hidden_state = jnp.sum(alpha.astype(act_dtype)[:, :, None] * ctx,
                               axis=1, dtype=jnp.float32)       # [Bt, H] f32
        hidden_t = jnp.tanh(mm(hidden_state, w_out_a) + hlin[:, H:] + b_out)

        # ---- pointer selection / mask update / next decoder input ----
        # Masked positions already have alpha == 0 (exp(-inf)), so argmax(alpha) ==
        # argmax(alpha * mask); min-index tie-break matches torch .max() first-match.
        mval = jnp.max(alpha, axis=1, keepdims=True)
        idx = jnp.min(jnp.where(alpha == mval, col, S), axis=1)    # [Bt] int32
        sel = col == idx[:, None]                                  # [Bt, S] bool
        new_mask = jnp.where(sel, 0.0, mask)
        one_hot = sel.astype(act_dtype)
        new_x = jnp.sum(one_hot[:, :, None] * emb, axis=1)         # [Bt, E] one-hot gather (VPU)

        # Per-step stores straight into the VMEM-resident output blocks (no [Bt,T,S] carry).
        alphas_ref[:, pl.ds(t, 1), :] = alpha[:, None, :]
        ptrs_ref[:, pl.ds(t, 1)] = idx[:, None]
        return hidden_t, c_t, new_mask, new_x

    h = h0_ref[...]                          # f32
    c = c0_ref[...]                          # f32
    mask = jnp.ones((Bt, S), jnp.float32)
    x = dec_in_ref[...]                      # act dtype

    if T <= 32:
        # Carry is tiny now, so full trace-time unroll is fine (LLO scheduling visibility).
        for t in range(T):
            h, c, mask, x = step(t, h, c, mask, x)
    else:
        h, c, mask, x = lax.fori_loop(
            0, T, lambda t, carry: step(t, *carry), (h, c, mask, x), unroll=2)

    h_out_ref[...] = h
    c_out_ref[...] = c


# ----------------------------------------------------------------------------------------
# Parameter init (torch parameter shapes)
# ----------------------------------------------------------------------------------------
def init_params(key, embedding_dim, hidden_dim):
    E, H = embedding_dim, hidden_dim
    ks = jax.random.split(key, 11)

    def lin(kw, kb, out_dim, in_dim):
        bound = 1.0 / jnp.sqrt(jnp.float32(in_dim))
        w = jax.random.uniform(kw, (out_dim, in_dim), jnp.float32, -bound, bound)
        b = jax.random.uniform(kb, (out_dim,), jnp.float32, -bound, bound)
        return w, b

    p = {}
    p["w_ih"], p["b_ih"] = lin(ks[0], ks[1], 4 * H, E)      # input_to_hidden
    p["w_hh"], p["b_hh"] = lin(ks[2], ks[3], 4 * H, H)      # hidden_to_hidden
    p["w_out"], p["b_out"] = lin(ks[4], ks[5], H, 2 * H)    # hidden_out
    p["w_il"], p["b_il"] = lin(ks[6], ks[7], H, H)          # att.input_linear
    p["w_cl"], p["b_cl"] = lin(ks[8], ks[9], H, H)          # att.context_linear (conv1d k=1)
    p["V"] = jax.random.uniform(ks[10], (H,), jnp.float32, -1.0, 1.0)
    return p


# ----------------------------------------------------------------------------------------
# Generation-aware dtype / tiling decisions
# ----------------------------------------------------------------------------------------
def _dtype_mode_auto():
    try:
        kind = jax.devices()[0].device_kind.lower()
    except Exception:
        return "f32"
    if "v6" in kind or "v7" in kind:
        return "bf16"        # bf16 MXU operands + bf16 elementwise (bf16 VPU/EUP)
    if "v5" in kind or "v4" in kind:
        return "bf16_mxu"    # bf16 MXU operands only; elementwise stays f32 (no bf16 VPU/EUP)
    return "f32"


def _vmem_capacity_bytes():
    try:
        return int(pltpu.get_tpu_info().vmem_capacity_bytes)
    except Exception:
        return 64 * 1024 * 1024          # conservative (v7x per-TensorCore)


def _vmem_bytes_estimate(bt, S, T, E, H, emb_b, ctxin_b, act_b):
    f32 = 4
    # double-buffered pipelined input / output blocks
    inp = 2 * bt * (S * E * emb_b + S * H * ctxin_b + E * act_b + 2 * H * f32)
    out = 2 * bt * (T * S * f32 + T * 4 + 2 * H * f32)
    # dominant in-kernel live tensors: ctx, u, promoted reduce temps, per-step vectors
    body = bt * (2 * S * H * act_b + S * H * f32 + 6 * S * f32 + 12 * H * f32)
    # resident weights (double-buffered by the pipeline machinery)
    w = 2 * ((E + 3 * H) * 4 * H * 2 + 4 * 4 * H * f32)
    return inp + out + body + w + (1 << 20)      # + slack


def _pick_b_tile(B, S, T, E, H, emb_b, ctxin_b, act_b, budget):
    cands = [c for c in (256, 128, 64, 32, 16, 8) if c <= B and B % c == 0]
    if not cands:
        cands = [B]
    fits = [c for c in cands
            if _vmem_bytes_estimate(c, S, T, E, H, emb_b, ctxin_b, act_b) <= budget]
    pool = fits if fits else [cands[-1]]           # smallest candidate if nothing fits
    multi = [c for c in pool if B // c >= 2]       # prefer >=2 grid steps (v7x megacore)
    return max(multi) if multi else max(pool)


# ----------------------------------------------------------------------------------------
# Wrapper
# ----------------------------------------------------------------------------------------
def pointer_decoder(embedded_inputs, decoder_input, h0, c0, context, params,
                    output_length=None, b_tile=None, dtype_mode=None):
    B, S, E = embedded_inputs.shape
    H = h0.shape[-1]
    T = int(output_length) if output_length is not None else S
    assert T <= S, "decode length must not exceed sequence length (mask exhaustion -> NaNs)"

    if dtype_mode is None:
        dtype_mode = _dtype_mode_auto()
    if dtype_mode == "bf16":
        mxu_dtype, act_dtype = jnp.bfloat16, jnp.bfloat16
    elif dtype_mode == "bf16_mxu":
        mxu_dtype, act_dtype = jnp.bfloat16, jnp.float32
    else:
        mxu_dtype, act_dtype = jnp.float32, jnp.float32

    emb = embedded_inputs.astype(act_dtype)
    dec = decoder_input.astype(act_dtype)
    ctx_in = context.astype(mxu_dtype)          # only feeds the context_linear matmul
    h0 = h0.astype(jnp.float32)
    c0 = c0.astype(jnp.float32)

    emb_b = jnp.dtype(act_dtype).itemsize
    ctxin_b = jnp.dtype(mxu_dtype).itemsize
    act_b = jnp.dtype(act_dtype).itemsize

    cap = _vmem_capacity_bytes()
    if b_tile is None:
        b_tile = _pick_b_tile(B, S, T, E, H, emb_b, ctxin_b, act_b, budget=cap // 2)
    assert B % b_tile == 0
    nb = B // b_tile
    est = _vmem_bytes_estimate(b_tile, S, T, E, H, emb_b, ctxin_b, act_b)
    vmem_limit = int(min(int(cap * 0.9), max(32 * 1024 * 1024, 2 * est)))

    # Weight prep: transpose to [in, out], fuse, cast MXU operands; biases stay f32.
    w_ih_t = params["w_ih"].T.astype(mxu_dtype)                     # [E, 4H]
    w_hh_t = params["w_hh"].T.astype(mxu_dtype)                     # [H, 4H]
    b_cat = (params["b_ih"] + params["b_hh"]).reshape(1, -1).astype(jnp.float32)
    w_out_t = params["w_out"].T                                     # [2H, H]
    w_out_a = w_out_t[:H].astype(mxu_dtype)                         # attn-output half
    w_h2 = jnp.concatenate([params["w_il"].T, w_out_t[H:]], axis=1).astype(mxu_dtype)  # [H, 2H]
    b_il = params["b_il"].reshape(1, -1).astype(jnp.float32)
    b_out = params["b_out"].reshape(1, -1).astype(jnp.float32)
    w_cl_t = params["w_cl"].T.astype(mxu_dtype)                     # [H, H]
    b_cl = params["b_cl"].reshape(1, -1).astype(jnp.float32)
    V = params["V"].reshape(1, -1).astype(act_dtype)

    weights = (w_ih_t, w_hh_t, b_cat, w_h2, w_out_a, b_il, b_out, w_cl_t, b_cl, V)
    args = (emb, dec, h0, c0, ctx_in) + weights

    def _resident_spec(arr):
        nd = arr.ndim
        return pl.BlockSpec(arr.shape, lambda i, _nd=nd: (0,) * _nd)

    in_specs = [
        pl.BlockSpec((b_tile, S, E), lambda i: (i, 0, 0)),   # embedded_inputs
        pl.BlockSpec((b_tile, E), lambda i: (i, 0)),         # decoder_input
        pl.BlockSpec((b_tile, H), lambda i: (i, 0)),         # h0
        pl.BlockSpec((b_tile, H), lambda i: (i, 0)),         # c0
        pl.BlockSpec((b_tile, S, H), lambda i: (i, 0, 0)),   # context
    ] + [_resident_spec(w) for w in weights]

    out_shapes = (
        jax.ShapeDtypeStruct((B, T, S), jnp.float32),        # alphas, final layout
        jax.ShapeDtypeStruct((B, T), jnp.int32),             # pointer indices, final layout
        jax.ShapeDtypeStruct((B, H), jnp.float32),           # final h
        jax.ShapeDtypeStruct((B, H), jnp.float32),           # final c
    )
    out_specs = (
        pl.BlockSpec((b_tile, T, S), lambda i: (i, 0, 0)),
        pl.BlockSpec((b_tile, T), lambda i: (i, 0)),
        pl.BlockSpec((b_tile, H), lambda i: (i, 0)),
        pl.BlockSpec((b_tile, H), lambda i: (i, 0)),
    )

    alphas, ptrs, h_f, c_f = pl.pallas_call(
        pointer_decoder_kernel,
        out_shape=out_shapes,
        grid=(nb,),
        in_specs=in_specs,
        out_specs=out_specs,
        input_output_aliases={2: 2, 3: 3},   # h0 -> h_out, c0 -> c_out
        compiler_params=pltpu.CompilerParams(
            dimension_semantics=("parallel",),
            vmem_limit_bytes=vmem_limit),
    )(*args)

    return (alphas, ptrs), (h_f, c_f)


# ----------------------------------------------------------------------------------------
# Pure-JAX reference (torch-faithful) and validation helpers
# ----------------------------------------------------------------------------------------
def pointer_decoder_ref(embedded_inputs, decoder_input, h0, c0, context, params, T):
    B, S, _ = embedded_inputs.shape
    H = h0.shape[-1]
    w_ih, b_ih = params["w_ih"], params["b_ih"]
    w_hh, b_hh = params["w_hh"], params["b_hh"]
    w_out, b_out = params["w_out"], params["b_out"]
    w_il, b_il = params["w_il"], params["b_il"]
    w_cl, b_cl = params["w_cl"], params["b_cl"]
    V = params["V"]

    ctx = jnp.einsum("bsh,kh->bsk", context, w_cl) + b_cl      # conv1d(k=1) == per-pos linear
    mask = jnp.ones((B, S), jnp.float32)
    h, c, x = h0, c0, decoder_input
    col = jnp.arange(S)
    alphas, ptrs = [], []
    for _ in range(T):
        gates = x @ w_ih.T + b_ih + h @ w_hh.T + b_hh
        i_g = jax.nn.sigmoid(gates[:, :H])
        f_g = jax.nn.sigmoid(gates[:, H:2 * H])
        g_g = jnp.tanh(gates[:, 2 * H:3 * H])
        o_g = jax.nn.sigmoid(gates[:, 3 * H:])
        c = f_g * c + i_g * g_g
        h_t = o_g * jnp.tanh(c)
        inp = h_t @ w_il.T + b_il
        u = jnp.tanh(inp[:, None, :] + ctx)
        att = jnp.sum(u * V[None, None, :], axis=2)
        att = jnp.where(mask == 0.0, -jnp.inf, att)
        alpha = jax.nn.softmax(att, axis=1)
        hidden_state = jnp.einsum("bs,bsh->bh", alpha, ctx)
        h = jnp.tanh(jnp.concatenate([hidden_state, h_t], axis=1) @ w_out.T + b_out)
        masked_outs = alpha * mask
        mval = jnp.max(masked_outs, axis=1, keepdims=True)
        idx = jnp.min(jnp.where(masked_outs == mval, col[None, :], S), axis=1)
        one_hot = (col[None, :] == idx[:, None]).astype(jnp.float32)
        mask = mask * (1.0 - one_hot)
        x = jnp.einsum("bs,bse->be", one_hot, embedded_inputs)
        alphas.append(alpha)
        ptrs.append(idx)
    return (jnp.stack(alphas, axis=1), jnp.stack(ptrs, axis=1).astype(jnp.int32), h, c)


def _check_trajectory(alphas, ptrs, h, c, S):
    """Semantic invariants that hold exactly in every dtype mode."""
    B, T, _ = alphas.shape
    assert np.all(np.isfinite(alphas)) and np.all(np.isfinite(h)) and np.all(np.isfinite(c))
    assert np.all(ptrs >= 0) and np.all(ptrs < S)
    for b in range(B):
        assert len(set(ptrs[b].tolist())) == T, "pointer repeated before mask exhaustion"
    assert np.all(alphas >= -1e-6)
    np.testing.assert_allclose(alphas.sum(-1), 1.0, atol=1e-2)
    for b in range(B):
        for t in range(1, T):
            assert np.all(alphas[b, t, ptrs[b, :t]] <= 1e-6), "masked position got probability"
    assert np.all(np.abs(h) <= 1.0 + 1e-6)


# ----------------------------------------------------------------------------------------
# Demo / self-test
# ----------------------------------------------------------------------------------------
if __name__ == "__main__":
    B, S, E, H = 2, 8, 16, 32
    key = jax.random.PRNGKey(0)
    keys = jax.random.split(key, 7)
    emb = jax.random.normal(keys[0], (B, S, E), jnp.float32)
    dec = jax.random.normal(keys[1], (B, E), jnp.float32)
    h0 = jax.random.normal(keys[2], (B, H), jnp.float32)
    c0 = jax.random.normal(keys[3], (B, H), jnp.float32)
    ctx = jax.random.normal(keys[4], (B, S, H), jnp.float32)
    params = init_params(keys[5], E, H)

    with jax.default_matmul_precision("highest"):
        ref_alphas, ref_ptrs, ref_h, ref_c = pointer_decoder_ref(emb, dec, h0, c0, ctx, params, S)

    # f32 mode: tight comparison against the torch-faithful reference.
    (alphas, ptrs), (h_f, c_f) = pointer_decoder(emb, dec, h0, c0, ctx, params, dtype_mode="f32")
    jax.block_until_ready((alphas, ptrs, h_f, c_f))
    assert alphas.shape == (B, S, S) and ptrs.shape == (B, S)
    assert h_f.shape == (B, H) and c_f.shape == (B, H)

    a_np, p_np = np.asarray(alphas), np.asarray(ptrs)
    ra, rp = np.asarray(ref_alphas), np.asarray(ref_ptrs)
    np.testing.assert_allclose(a_np[:, 0], ra[:, 0], atol=5e-2)
    srt = np.sort(ra[:, 0], axis=1)
    clear = (srt[:, -1] - srt[:, -2]) > 0.05        # only compare argmax on non-near-ties
    np.testing.assert_array_equal(p_np[clear, 0], rp[clear, 0])
    if np.array_equal(p_np, rp):                    # identical trajectory -> full comparison
        np.testing.assert_allclose(a_np, ra, atol=5e-2)
        np.testing.assert_allclose(np.asarray(h_f), np.asarray(ref_h), atol=5e-2)
    _check_trajectory(a_np, p_np, np.asarray(h_f), np.asarray(c_f), S)

    # Auto dtype mode (bf16 on v6e/v7x, bf16-MXU-only on v5e): semantic invariants.
    (a_auto, p_auto), (h_auto, c_auto) = pointer_decoder(emb, dec, h0, c0, ctx, params)
    jax.block_until_ready((a_auto, p_auto, h_auto, c_auto))
    _check_trajectory(np.asarray(a_auto), np.asarray(p_auto),
                      np.asarray(h_auto), np.asarray(c_auto), S)

    # Larger batch: real batch grid; tiled vs single-tile must agree exactly (f32 mode).
    B2 = 16
    k2 = jax.random.split(keys[6], 5)
    emb2 = jax.random.normal(k2[0], (B2, S, E), jnp.float32)
    dec2 = jax.random.normal(k2[1], (B2, E), jnp.float32)
    h02 = jax.random.normal(k2[2], (B2, H), jnp.float32)
    c02 = jax.random.normal(k2[3], (B2, H), jnp.float32)
    ctx2 = jax.random.normal(k2[4], (B2, S, H), jnp.float32)

    (a_t, p_t), (h_t2, c_t2) = pointer_decoder(emb2, dec2, h02, c02, ctx2, params,
                                               b_tile=8, dtype_mode="f32")
    (a_u, p_u), (h_u2, c_u2) = pointer_decoder(emb2, dec2, h02, c02, ctx2, params,
                                               b_tile=16, dtype_mode="f32")
    jax.block_until_ready((a_t, p_t, h_t2, c_t2, a_u, p_u, h_u2, c_u2))
    np.testing.assert_array_equal(np.asarray(p_t), np.asarray(p_u))
    np.testing.assert_allclose(np.asarray(a_t), np.asarray(a_u), rtol=0, atol=1e-6)
    np.testing.assert_allclose(np.asarray(h_t2), np.asarray(h_u2), rtol=0, atol=1e-6)
    np.testing.assert_allclose(np.asarray(c_t2), np.asarray(c_u2), rtol=0, atol=1e-6)
    _check_trajectory(np.asarray(a_t), np.asarray(p_t), np.asarray(h_t2), np.asarray(c_t2), S)

    # Auto-tiling + auto-dtype path on the larger batch (exercises _pick_b_tile / megacore pref).
    (a_a2, p_a2), (h_a2, c_a2) = pointer_decoder(emb2, dec2, h02, c02, ctx2, params)
    jax.block_until_ready((a_a2, p_a2, h_a2, c_a2))
    _check_trajectory(np.asarray(a_a2), np.asarray(p_a2),
                      np.asarray(h_a2), np.asarray(c_a2), S)

    print("KERNEL_OK")
</pallas_src>

<mosaic_0001>
module attributes {stable_mosaic.version = 11 : i64} {
  func.func @pointer_decoder_kernel(%arg0: i32, %arg1: memref<2x8x16xf32, #tpu.memory_space<vmem>>, %arg2: memref<2x16xf32, #tpu.memory_space<vmem>>, %arg3: memref<2x32xf32, #tpu.memory_space<vmem>>, %arg4: memref<2x32xf32, #tpu.memory_space<vmem>>, %arg5: memref<2x8x32xf32, #tpu.memory_space<vmem>>, %arg6: memref<16x128xf32, #tpu.memory_space<vmem>>, %arg7: memref<32x128xf32, #tpu.memory_space<vmem>>, %arg8: memref<1x128xf32, #tpu.memory_space<vmem>>, %arg9: memref<32x64xf32, #tpu.memory_space<vmem>>, %arg10: memref<32x32xf32, #tpu.memory_space<vmem>>, %arg11: memref<1x32xf32, #tpu.memory_space<vmem>>, %arg12: memref<1x32xf32, #tpu.memory_space<vmem>>, %arg13: memref<32x32xf32, #tpu.memory_space<vmem>>, %arg14: memref<1x32xf32, #tpu.memory_space<vmem>>, %arg15: memref<1x32xf32, #tpu.memory_space<vmem>>, %arg16: memref<2x8x8xf32, #tpu.memory_space<vmem>>, %arg17: memref<2x8xi32, #tpu.memory_space<vmem>>, %arg18: memref<2x32xf32, #tpu.memory_space<vmem>>, %arg19: memref<2x32xf32, #tpu.memory_space<vmem>>) attributes {dimension_semantics = [#tpu.dimension_semantics<parallel>], iteration_bounds = array<i64: 1>, scalar_prefetch = 0 : i64, scratch_operands = 0 : i64, tpu.core_type = #tpu.core_type<tc>, window_params = [{transform_indices = @transform_0, window_bounds = array<i64: 2, 8, 16>}, {transform_indices = @transform_1, window_bounds = array<i64: 2, 16>}, {transform_indices = @transform_2, window_bounds = array<i64: 2, 32>}, {transform_indices = @transform_3, window_bounds = array<i64: 2, 32>}, {transform_indices = @transform_4, window_bounds = array<i64: 2, 8, 32>}, {pipeline_mode = #tpu.pipeline_mode<synchronous>, transform_indices = @transform_5, window_bounds = array<i64: 16, 128>}, {pipeline_mode = #tpu.pipeline_mode<synchronous>, transform_indices = @transform_6, window_bounds = array<i64: 32, 128>}, {pipeline_mode = #tpu.pipeline_mode<synchronous>, transform_indices = @transform_7, window_bounds = array<i64: 1, 128>}, {pipeline_mode = #tpu.pipeline_mode<synchronous>, transform_indices = @transform_8, window_bounds = array<i64: 32, 64>}, {pipeline_mode = #tpu.pipeline_mode<synchronous>, transform_indices = @transform_9, window_bounds = array<i64: 32, 32>}, {pipeline_mode = #tpu.pipeline_mode<synchronous>, transform_indices = @transform_10, window_bounds = array<i64: 1, 32>}, {pipeline_mode = #tpu.pipeline_mode<synchronous>, transform_indices = @transform_11, window_bounds = array<i64: 1, 32>}, {pipeline_mode = #tpu.pipeline_mode<synchronous>, transform_indices = @transform_12, window_bounds = array<i64: 32, 32>}, {pipeline_mode = #tpu.pipeline_mode<synchronous>, transform_indices = @transform_13, window_bounds = array<i64: 1, 32>}, {pipeline_mode = #tpu.pipeline_mode<synchronous>, transform_indices = @transform_14, window_bounds = array<i64: 1, 32>}, {transform_indices = @transform_15, window_bounds = array<i64: 2, 8, 8>}, {transform_indices = @transform_16, window_bounds = array<i64: 2, 8>}, {transform_indices = @transform_17, window_bounds = array<i64: 2, 32>}, {transform_indices = @transform_18, window_bounds = array<i64: 2, 32>}]} {
    %c0 = arith.constant 0 : index
    %c0_0 = arith.constant 0 : index
    %c0_1 = arith.constant 0 : index
    %0 = vector.load %arg1[%c0, %c0_0, %c0_1] : memref<2x8x16xf32, #tpu.memory_space<vmem>>, vector<2x8x16xf32>
    %c0_2 = arith.constant 0 : index
    %c0_3 = arith.constant 0 : index
    %1 = vector.load %arg6[%c0_2, %c0_3] : memref<16x128xf32, #tpu.memory_space<vmem>>, vector<16x128xf32>
    %c0_4 = arith.constant 0 : index
    %c0_5 = arith.constant 0 : index
    %2 = vector.load %arg7[%c0_4, %c0_5] : memref<32x128xf32, #tpu.memory_space<vmem>>, vector<32x128xf32>
    %c0_6 = arith.constant 0 : index
    %c0_7 = arith.constant 0 : index
    %3 = vector.load %arg9[%c0_6, %c0_7] : memref<32x64xf32, #tpu.memory_space<vmem>>, vector<32x64xf32>
    %c0_8 = arith.constant 0 : index
    %c0_9 = arith.constant 0 : index
    %4 = vector.load %arg10[%c0_8, %c0_9] : memref<32x32xf32, #tpu.memory_space<vmem>>, vector<32x32xf32>
    %c0_10 = arith.constant 0 : index
    %c0_11 = arith.constant 0 : index
    %5 = vector.load %arg13[%c0_10, %c0_11] : memref<32x32xf32, #tpu.memory_space<vmem>>, vector<32x32xf32>
    %c0_12 = arith.constant 0 : index
    %c0_13 = arith.constant 0 : index
    %6 = vector.load %arg8[%c0_12, %c0_13] : memref<1x128xf32, #tpu.memory_space<vmem>>, vector<1x128xf32>
    %7 = vector.shape_cast %6 : vector<1x128xf32> to vector<1x128xf32>
    %8 = vector.broadcast %7 : vector<1x128xf32> to vector<2x128xf32>
    %c0_14 = arith.constant 0 : index
    %c0_15 = arith.constant 0 : index
    %9 = vector.load %arg11[%c0_14, %c0_15] : memref<1x32xf32, #tpu.memory_space<vmem>>, vector<1x32xf32>
    %10 = vector.shape_cast %9 : vector<1x32xf32> to vector<1x32xf32>
    %11 = vector.broadcast %10 : vector<1x32xf32> to vector<2x32xf32>
    %c0_16 = arith.constant 0 : index
    %c0_17 = arith.constant 0 : index
    %12 = vector.load %arg12[%c0_16, %c0_17] : memref<1x32xf32, #tpu.memory_space<vmem>>, vector<1x32xf32>
    %13 = vector.shape_cast %12 : vector<1x32xf32> to vector<1x32xf32>
    %14 = vector.broadcast %13 : vector<1x32xf32> to vector<2x32xf32>
    %c0_18 = arith.constant 0 : index
    %c0_19 = arith.constant 0 : index
    %15 = vector.load %arg15[%c0_18, %c0_19] : memref<1x32xf32, #tpu.memory_space<vmem>>, vector<1x32xf32>
    %16 = vector.shape_cast %15 : vector<1x32xf32> to vector<1x1x32xf32>
    %c0_20 = arith.constant 0 : index
    %c0_21 = arith.constant 0 : index
    %c0_22 = arith.constant 0 : index
    %17 = vector.load %arg5[%c0_20, %c0_21, %c0_22] : memref<2x8x32xf32, #tpu.memory_space<vmem>>, vector<2x8x32xf32>
    %18 = vector.shape_cast %17 : vector<2x8x32xf32> to vector<16x32xf32>
    %cst = arith.constant dense<0.000000e+00> : vector<16x32xf32>
    %19 = tpu.matmul %18, %5, %cst {dimension_numbers = #tpu.dot_dimension_numbers<[1], [0], [0], [1], [0, 0, 1, 1], [], []>} : vector<16x32xf32>, vector<32x32xf32>, vector<16x32xf32> -> vector<16x32xf32>
    %c0_23 = arith.constant 0 : index
    %c0_24 = arith.constant 0 : index
    %20 = vector.load %arg14[%c0_23, %c0_24] : memref<1x32xf32, #tpu.memory_space<vmem>>, vector<1x32xf32>
    %21 = vector.broadcast %20 : vector<1x32xf32> to vector<16x32xf32>
    %22 = arith.addf %19, %21 : vector<16x32xf32>
    %23 = vector.shape_cast %22 : vector<16x32xf32> to vector<2x8x32xf32>
    %24 = tpu.iota {dimensions = array<i32: 1>} : vector<2x8xi32>
    %c0_25 = arith.constant 0 : index
    %c0_26 = arith.constant 0 : index
    %25 = vector.load %arg3[%c0_25, %c0_26] : memref<2x32xf32, #tpu.memory_space<vmem>>, vector<2x32xf32>
    %c0_27 = arith.constant 0 : index
    %c0_28 = arith.constant 0 : index
    %26 = vector.load %arg4[%c0_27, %c0_28] : memref<2x32xf32, #tpu.memory_space<vmem>>, vector<2x32xf32>
    %cst_29 = arith.constant 1.000000e+00 : f32
    %27 = vector.broadcast %cst_29 : f32 to vector<2x8xf32>
    %c0_30 = arith.constant 0 : index
    %c0_31 = arith.constant 0 : index
    %28 = vector.load %arg2[%c0_30, %c0_31] : memref<2x16xf32, #tpu.memory_space<vmem>>, vector<2x16xf32>
    %cst_32 = arith.constant dense<0.000000e+00> : vector<2x128xf32>
    %29 = tpu.matmul %28, %1, %cst_32 {dimension_numbers = #tpu.dot_dimension_numbers<[1], [0], [0], [1], [0, 0, 1, 1], [], []>} : vector<2x16xf32>, vector<16x128xf32>, vector<2x128xf32> -> vector<2x128xf32>
    %cst_33 = arith.constant dense<0.000000e+00> : vector<2x128xf32>
    %30 = tpu.matmul %25, %2, %cst_33 {dimension_numbers = #tpu.dot_dimension_numbers<[1], [0], [0], [1], [0, 0, 1, 1], [], []>} : vector<2x32xf32>, vector<32x128xf32>, vector<2x128xf32> -> vector<2x128xf32>
    %31 = arith.addf %29, %30 : vector<2x128xf32>
    %32 = arith.addf %31, %8 : vector<2x128xf32>
    %33 = vector.extract_strided_slice %32 {offsets = [0, 0], sizes = [2, 32], strides = [1, 1]} : vector<2x128xf32> to vector<2x32xf32>
    %34 = arith.negf %33 : vector<2x32xf32>
    %35 = math.exp %34 : vector<2x32xf32>
    %cst_34 = arith.constant 1.000000e+00 : f32
    %36 = vector.broadcast %cst_34 : f32 to vector<2x32xf32>
    %37 = arith.addf %36, %35 : vector<2x32xf32>
    %38 = arith.divf %36, %37 : vector<2x32xf32>
    %39 = vector.extract_strided_slice %32 {offsets = [0, 32], sizes = [2, 32], strides = [1, 1]} : vector<2x128xf32> to vector<2x32xf32>
    %40 = arith.negf %39 : vector<2x32xf32>
    %41 = math.exp %40 : vector<2x32xf32>
    %cst_35 = arith.constant 1.000000e+00 : f32
    %42 = vector.broadcast %cst_35 : f32 to vector<2x32xf32>
    %43 = arith.addf %42, %41 : vector<2x32xf32>
    %44 = arith.divf %42, %43 : vector<2x32xf32>
    %45 = vector.extract_strided_slice %32 {offsets = [0, 64], sizes = [2, 32], strides = [1, 1]} : vector<2x128xf32> to vector<2x32xf32>
    %46 = math.tanh %45 : vector<2x32xf32>
    %47 = vector.extract_strided_slice %32 {offsets = [0, 96], sizes = [2, 32], strides = [1, 1]} : vector<2x128xf32> to vector<2x32xf32>
    %48 = arith.negf %47 : vector<2x32xf32>
    %49 = math.exp %48 : vector<2x32xf32>
    %cst_36 = arith.constant 1.000000e+00 : f32
    %50 = vector.broadcast %cst_36 : f32 to vector<2x32xf32>
    %51 = arith.addf %50, %49 : vector<2x32xf32>
    %52 = arith.divf %50, %51 : vector<2x32xf32>
    %53 = arith.mulf %44, %26 : vector<2x32xf32>
    %54 = arith.mulf %38, %46 : vector<2x32xf32>
    %55 = arith.addf %53, %54 : vector<2x32xf32>
    %56 = math.tanh %55 : vector<2x32xf32>
    %57 = arith.mulf %52, %56 : vector<2x32xf32>
    %cst_37 = arith.constant dense<0.000000e+00> : vector<2x64xf32>
    %58 = tpu.matmul %57, %3, %cst_37 {dimension_numbers = #tpu.dot_dimension_numbers<[1], [0], [0], [1], [0, 0, 1, 1], [], []>} : vector<2x32xf32>, vector<32x64xf32>, vector<2x64xf32> -> vector<2x64xf32>
    %59 = vector.extract_strided_slice %58 {offsets = [0, 0], sizes = [2, 32], strides = [1, 1]} : vector<2x64xf32> to vector<2x32xf32>
    %60 = arith.addf %59, %11 : vector<2x32xf32>
    %61 = vector.shape_cast %60 : vector<2x32xf32> to vector<2x1x32xf32>
    %62 = vector.broadcast %61 : vector<2x1x32xf32> to vector<2x8x32xf32>
    %63 = arith.addf %62, %23 : vector<2x8x32xf32>
    %64 = math.tanh %63 : vector<2x8x32xf32>
    %65 = vector.broadcast %16 : vector<1x1x32xf32> to vector<2x8x32xf32>
    %66 = arith.mulf %64, %65 : vector<2x8x32xf32>
    %cst_38 = arith.constant dense<0.000000e+00> : vector<2x8xf32>
    %67 = vector.multi_reduction <add>, %66, %cst_38 [2] : vector<2x8x32xf32> to vector<2x8xf32>
    %cst_39 = arith.constant 0.000000e+00 : f32
    %68 = vector.broadcast %cst_39 : f32 to vector<2x8xf32>
    %69 = arith.cmpf oeq, %27, %68 : vector<2x8xf32>
    %cst_40 = arith.constant 0xFF800000 : f32
    %70 = vector.broadcast %cst_40 : f32 to vector<2x8xf32>
    %71 = arith.select %69, %70, %67 : vector<2x8xi1>, vector<2x8xf32>
    %cst_41 = arith.constant dense<0xFF800000> : vector<2xf32>
    %72 = vector.multi_reduction <maximumf>, %71, %cst_41 [1] : vector<2x8xf32> to vector<2xf32>
    %73 = vector.shape_cast %72 : vector<2xf32> to vector<2x1xf32>
    %74 = vector.broadcast %73 : vector<2x1xf32> to vector<2x8xf32>
    %75 = arith.subf %71, %74 : vector<2x8xf32>
    %76 = math.exp %75 : vector<2x8xf32>
    %cst_42 = arith.constant dense<0.000000e+00> : vector<2xf32>
    %77 = vector.multi_reduction <add>, %76, %cst_42 [1] : vector<2x8xf32> to vector<2xf32>
    %78 = vector.shape_cast %77 : vector<2xf32> to vector<2x1xf32>
    %cst_43 = arith.constant 1.000000e+00 : f32
    %79 = vector.broadcast %cst_43 : f32 to vector<2x1xf32>
    %80 = arith.divf %79, %78 : vector<2x1xf32>
    %81 = vector.broadcast %80 : vector<2x1xf32> to vector<2x8xf32>
    %82 = arith.mulf %76, %81 : vector<2x8xf32>
    %83 = vector.shape_cast %82 : vector<2x8xf32> to vector<2x8x1xf32>
    %84 = vector.broadcast %83 : vector<2x8x1xf32> to vector<2x8x32xf32>
    %85 = arith.mulf %84, %23 : vector<2x8x32xf32>
    %cst_44 = arith.constant dense<0.000000e+00> : vector<2x32xf32>
    %86 = vector.multi_reduction <add>, %85, %cst_44 [1] : vector<2x8x32xf32> to vector<2x32xf32>
    %cst_45 = arith.constant dense<0.000000e+00> : vector<2x32xf32>
    %87 = tpu.matmul %86, %4, %cst_45 {dimension_numbers = #tpu.dot_dimension_numbers<[1], [0], [0], [1], [0, 0, 1, 1], [], []>} : vector<2x32xf32>, vector<32x32xf32>, vector<2x32xf32> -> vector<2x32xf32>
    %88 = vector.extract_strided_slice %58 {offsets = [0, 32], sizes = [2, 32], strides = [1, 1]} : vector<2x64xf32> to vector<2x32xf32>
    %89 = arith.addf %87, %88 : vector<2x32xf32>
    %90 = arith.addf %89, %14 : vector<2x32xf32>
    %91 = math.tanh %90 : vector<2x32xf32>
    %cst_46 = arith.constant dense<0xFF800000> : vector<2xf32>
    %92 = vector.multi_reduction <maximumf>, %82, %cst_46 [1] : vector<2x8xf32> to vector<2xf32>
    %93 = vector.shape_cast %92 : vector<2xf32> to vector<2x1xf32>
    %94 = vector.broadcast %93 : vector<2x1xf32> to vector<2x8xf32>
    %95 = arith.cmpf oeq, %82, %94 : vector<2x8xf32>
    %c8_i32 = arith.constant 8 : i32
    %96 = vector.broadcast %c8_i32 : i32 to vector<2x8xi32>
    %97 = arith.select %95, %24, %96 : vector<2x8xi1>, vector<2x8xi32>
    %cst_47 = arith.constant dense<2147483647> : vector<2xi32>
    %98 = vector.multi_reduction <minsi>, %97, %cst_47 [1] : vector<2x8xi32> to vector<2xi32>
    %99 = vector.shape_cast %98 : vector<2xi32> to vector<2x1xi32>
    %100 = vector.broadcast %99 : vector<2x1xi32> to vector<2x8xi32>
    %101 = arith.cmpi eq, %24, %100 : vector<2x8xi32>
    %cst_48 = arith.constant 0.000000e+00 : f32
    %102 = vector.broadcast %cst_48 : f32 to vector<2x8xf32>
    %103 = arith.select %101, %102, %27 : vector<2x8xi1>, vector<2x8xf32>
    %104 = arith.extui %101 : vector<2x8xi1> to vector<2x8xi32>
    %105 = arith.sitofp %104 : vector<2x8xi32> to vector<2x8xf32>
    %106 = vector.shape_cast %105 : vector<2x8xf32> to vector<2x8x1xf32>
    %107 = vector.broadcast %106 : vector<2x8x1xf32> to vector<2x8x16xf32>
    %108 = arith.mulf %107, %0 : vector<2x8x16xf32>
    %cst_49 = arith.constant dense<0.000000e+00> : vector<2x16xf32>
    %109 = vector.multi_reduction <add>, %108, %cst_49 [1] : vector<2x8x16xf32> to vector<2x16xf32>
    %110 = vector.shape_cast %82 : vector<2x8xf32> to vector<2x1x8xf32>
    %c0_50 = arith.constant 0 : index
    %c0_51 = arith.constant 0 : index
    %c0_52 = arith.constant 0 : index
    %111 = vector.load %arg16[%c0_50, %c0_51, %c0_52] : memref<2x8x8xf32, #tpu.memory_space<vmem>>, vector<2x1x8xf32>
    tpu.vector_store %arg16[%c0_50, %c0_51, %c0_52], %110 {strides = array<i32>} : memref<2x8x8xf32, #tpu.memory_space<vmem>>, vector<2x1x8xf32>,
    %112 = vector.shape_cast %98 : vector<2xi32> to vector<2x1xi32>
    %c0_53 = arith.constant 0 : index
    %c0_54 = arith.constant 0 : index
    %113 = vector.load %arg17[%c0_53, %c0_54] : memref<2x8xi32, #tpu.memory_space<vmem>>, vector<2x1xi32>
    tpu.vector_store %arg17[%c0_53, %c0_54], %112 {strides = array<i32>} : memref<2x8xi32, #tpu.memory_space<vmem>>, vector<2x1xi32>,
    %cst_55 = arith.constant dense<0.000000e+00> : vector<2x128xf32>
    %114 = tpu.matmul %109, %1, %cst_55 {dimension_numbers = #tpu.dot_dimension_numbers<[1], [0], [0], [1], [0, 0, 1, 1], [], []>} : vector<2x16xf32>, vector<16x128xf32>, vector<2x128xf32> -> vector<2x128xf32>
    %cst_56 = arith.constant dense<0.000000e+00> : vector<2x128xf32>
    %115 = tpu.matmul %91, %2, %cst_56 {dimension_numbers = #tpu.dot_dimension_numbers<[1], [0], [0], [1], [0, 0, 1, 1], [], []>} : vector<2x32xf32>, vector<32x128xf32>, vector<2x128xf32> -> vector<2x128xf32>
    %116 = arith.addf %114, %115 : vector<2x128xf32>
    %117 = arith.addf %116, %8 : vector<2x128xf32>
    %118 = vector.extract_strided_slice %117 {offsets = [0, 0], sizes = [2, 32], strides = [1, 1]} : vector<2x128xf32> to vector<2x32xf32>
    %119 = arith.negf %118 : vector<2x32xf32>
    %120 = math.exp %119 : vector<2x32xf32>
    %cst_57 = arith.constant 1.000000e+00 : f32
    %121 = vector.broadcast %cst_57 : f32 to vector<2x32xf32>
    %122 = arith.addf %121, %120 : vector<2x32xf32>
    %123 = arith.divf %121, %122 : vector<2x32xf32>
    %124 = vector.extract_strided_slice %117 {offsets = [0, 32], sizes = [2, 32], strides = [1, 1]} : vector<2x128xf32> to vector<2x32xf32>
    %125 = arith.negf %124 : vector<2x32xf32>
    %126 = math.exp %125 : vector<2x32xf32>
    %cst_58 = arith.constant 1.000000e+00 : f32
    %127 = vector.broadcast %cst_58 : f32 to vector<2x32xf32>
    %128 = arith.addf %127, %126 : vector<2x32xf32>
    %129 = arith.divf %127, %128 : vector<2x32xf32>
    %130 = vector.extract_strided_slice %117 {offsets = [0, 64], sizes = [2, 32], strides = [1, 1]} : vector<2x128xf32> to vector<2x32xf32>
    %131 = math.tanh %130 : vector<2x32xf32>
    %132 = vector.extract_strided_slice %117 {offsets = [0, 96], sizes = [2, 32], strides = [1, 1]} : vector<2x128xf32> to vector<2x32xf32>
    %133 = arith.negf %132 : vector<2x32xf32>
    %134 = math.exp %133 : vector<2x32xf32>
    %cst_59 = arith.constant 1.000000e+00 : f32
    %135 = vector.broadcast %cst_59 : f32 to vector<2x32xf32>
    %136 = arith.addf %135, %134 : vector<2x32xf32>
    %137 = arith.divf %135, %136 : vector<2x32xf32>
    %138 = arith.mulf %129, %55 : vector<2x32xf32>
    %139 = arith.mulf %123, %131 : vector<2x32xf32>
    %140 = arith.addf %138, %139 : vector<2x32xf32>
    %141 = math.tanh %140 : vector<2x32xf32>
    %142 = arith.mulf %137, %141 : vector<2x32xf32>
    %cst_60 = arith.constant dense<0.000000e+00> : vector<2x64xf32>
    %143 = tpu.matmul %142, %3, %cst_60 {dimension_numbers = #tpu.dot_dimension_numbers<[1], [0], [0], [1], [0, 0, 1, 1], [], []>} : vector<2x32xf32>, vector<32x64xf32>, vector<2x64xf32> -> vector<2x64xf32>
    %144 = vector.extract_strided_slice %143 {offsets = [0, 0], sizes = [2, 32], strides = [1, 1]} : vector<2x64xf32> to vector<2x32xf32>
    %145 = arith.addf %144, %11 : vector<2x32xf32>
    %146 = vector.shape_cast %145 : vector<2x32xf32> to vector<2x1x32xf32>
    %147 = vector.broadcast %146 : vector<2x1x32xf32> to vector<2x8x32xf32>
    %148 = arith.addf %147, %23 : vector<2x8x32xf32>
    %149 = math.tanh %148 : vector<2x8x32xf32>
    %150 = vector.broadcast %16 : vector<1x1x32xf32> to vector<2x8x32xf32>
    %151 = arith.mulf %149, %150 : vector<2x8x32xf32>
    %cst_61 = arith.constant dense<0.000000e+00> : vector<2x8xf32>
    %152 = vector.multi_reduction <add>, %151, %cst_61 [2] : vector<2x8x32xf32> to vector<2x8xf32>
    %cst_62 = arith.constant 0.000000e+00 : f32
    %153 = vector.broadcast %cst_62 : f32 to vector<2x8xf32>
    %154 = arith.cmpf oeq, %103, %153 : vector<2x8xf32>
    %cst_63 = arith.constant 0xFF800000 : f32
    %155 = vector.broadcast %cst_63 : f32 to vector<2x8xf32>
    %156 = arith.select %154, %155, %152 : vector<2x8xi1>, vector<2x8xf32>
    %cst_64 = arith.constant dense<0xFF800000> : vector<2xf32>
    %157 = vector.multi_reduction <maximumf>, %156, %cst_64 [1] : vector<2x8xf32> to vector<2xf32>
    %158 = vector.shape_cast %157 : vector<2xf32> to vector<2x1xf32>
    %159 = vector.broadcast %158 : vector<2x1xf32> to vector<2x8xf32>
    %160 = arith.subf %156, %159 : vector<2x8xf32>
    %161 = math.exp %160 : vector<2x8xf32>
    %cst_65 = arith.constant dense<0.000000e+00> : vector<2xf32>
    %162 = vector.multi_reduction <add>, %161, %cst_65 [1] : vector<2x8xf32> to vector<2xf32>
    %163 = vector.shape_cast %162 : vector<2xf32> to vector<2x1xf32>
    %cst_66 = arith.constant 1.000000e+00 : f32
    %164 = vector.broadcast %cst_66 : f32 to vector<2x1xf32>
    %165 = arith.divf %164, %163 : vector<2x1xf32>
    %166 = vector.broadcast %165 : vector<2x1xf32> to vector<2x8xf32>
    %167 = arith.mulf %161, %166 : vector<2x8xf32>
    %168 = vector.shape_cast %167 : vector<2x8xf32> to vector<2x8x1xf32>
    %169 = vector.broadcast %168 : vector<2x8x1xf32> to vector<2x8x32xf32>
    %170 = arith.mulf %169, %23 : vector<2x8x32xf32>
    %cst_67 = arith.constant dense<0.000000e+00> : vector<2x32xf32>
    %171 = vector.multi_reduction <add>, %170, %cst_67 [1] : vector<2x8x32xf32> to vector<2x32xf32>
    %cst_68 = arith.constant dense<0.000000e+00> : vector<2x32xf32>
    %172 = tpu.matmul %171, %4, %cst_68 {dimension_numbers = #tpu.dot_dimension_numbers<[1], [0], [0], [1], [0, 0, 1, 1], [], []>} : vector<2x32xf32>, vector<32x32xf32>, vector<2x32xf32> -> vector<2x32xf32>
    %173 = vector.extract_strided_slice %143 {offsets = [0, 32], sizes = [2, 32], strides = [1, 1]} : vector<2x64xf32> to vector<2x32xf32>
    %174 = arith.addf %172, %173 : vector<2x32xf32>
    %175 = arith.addf %174, %14 : vector<2x32xf32>
    %176 = math.tanh %175 : vector<2x32xf32>
    %cst_69 = arith.constant dense<0xFF800000> : vector<2xf32>
    %177 = vector.multi_reduction <maximumf>, %167, %cst_69 [1] : vector<2x8xf32> to vector<2xf32>
    %178 = vector.shape_cast %177 : vector<2xf32> to vector<2x1xf32>
    %179 = vector.broadcast %178 : vector<2x1xf32> to vector<2x8xf32>
    %180 = arith.cmpf oeq, %167, %179 : vector<2x8xf32>
    %c8_i32_70 = arith.constant 8 : i32
    %181 = vector.broadcast %c8_i32_70 : i32 to vector<2x8xi32>
    %182 = arith.select %180, %24, %181 : vector<2x8xi1>, vector<2x8xi32>
    %cst_71 = arith.constant dense<2147483647> : vector<2xi32>
    %183 = vector.multi_reduction <minsi>, %182, %cst_71 [1] : vector<2x8xi32> to vector<2xi32>
    %184 = vector.shape_cast %183 : vector<2xi32> to vector<2x1xi32>
    %185 = vector.broadcast %184 : vector<2x1xi32> to vector<2x8xi32>
    %186 = arith.cmpi eq, %24, %185 : vector<2x8xi32>
    %cst_72 = arith.constant 0.000000e+00 : f32
    %187 = vector.broadcast %cst_72 : f32 to vector<2x8xf32>
    %188 = arith.select %186, %187, %103 : vector<2x8xi1>, vector<2x8xf32>
    %189 = arith.extui %186 : vector<2x8xi1> to vector<2x8xi32>
    %190 = arith.sitofp %189 : vector<2x8xi32> to vector<2x8xf32>
    %191 = vector.shape_cast %190 : vector<2x8xf32> to vector<2x8x1xf32>
    %192 = vector.broadcast %191 : vector<2x8x1xf32> to vector<2x8x16xf32>
    %193 = arith.mulf %192, %0 : vector<2x8x16xf32>
    %cst_73 = arith.constant dense<0.000000e+00> : vector<2x16xf32>
    %194 = vector.multi_reduction <add>, %193, %cst_73 [1] : vector<2x8x16xf32> to vector<2x16xf32>
    %195 = vector.shape_cast %167 : vector<2x8xf32> to vector<2x1x8xf32>
    %c0_74 = arith.constant 0 : index
    %c1 = arith.constant 1 : index
    %c0_75 = arith.constant 0 : index
    %196 = vector.load %arg16[%c0_74, %c1, %c0_75] : memref<2x8x8xf32, #tpu.memory_space<vmem>>, vector<2x1x8xf32>
    tpu.vector_store %arg16[%c0_74, %c1, %c0_75], %195 {strides = array<i32>} : memref<2x8x8xf32, #tpu.memory_space<vmem>>, vector<2x1x8xf32>,
    %197 = vector.shape_cast %183 : vector<2xi32> to vector<2x1xi32>
    %c0_76 = arith.constant 0 : index
    %c1_77 = arith.constant 1 : index
    %198 = vector.load %arg17[%c0_76, %c1_77] : memref<2x8xi32, #tpu.memory_space<vmem>>, vector<2x1xi32>
    tpu.vector_store %arg17[%c0_76, %c1_77], %197 {strides = array<i32>} : memref<2x8xi32, #tpu.memory_space<vmem>>, vector<2x1xi32>,
    %cst_78 = arith.constant dense<0.000000e+00> : vector<2x128xf32>
    %199 = tpu.matmul %194, %1, %cst_78 {dimension_numbers = #tpu.dot_dimension_numbers<[1], [0], [0], [1], [0, 0, 1, 1], [], []>} : vector<2x16xf32>, vector<16x128xf32>, vector<2x128xf32> -> vector<2x128xf32>
    %cst_79 = arith.constant dense<0.000000e+00> : vector<2x128xf32>
    %200 = tpu.matmul %176, %2, %cst_79 {dimension_numbers = #tpu.dot_dimension_numbers<[1], [0], [0], [1], [0, 0, 1, 1], [], []>} : vector<2x32xf32>, vector<32x128xf32>, vector<2x128xf32> -> vector<2x128xf32>
    %201 = arith.addf %199, %200 : vector<2x128xf32>
    %202 = arith.addf %201, %8 : vector<2x128xf32>
    %203 = vector.extract_strided_slice %202 {offsets = [0, 0], sizes = [2, 32], strides = [1, 1]} : vector<2x128xf32> to vector<2x32xf32>
    %204 = arith.negf %203 : vector<2x32xf32>
    %205 = math.exp %204 : vector<2x32xf32>
    %cst_80 = arith.constant 1.000000e+00 : f32
    %206 = vector.broadcast %cst_80 : f32 to vector<2x32xf32>
    %207 = arith.addf %206, %205 : vector<2x32xf32>
    %208 = arith.divf %206, %207 : vector<2x32xf32>
    %209 = vector.extract_strided_slice %202 {offsets = [0, 32], sizes = [2, 32], strides = [1, 1]} : vector<2x128xf32> to vector<2x32xf32>
    %210 = arith.negf %209 : vector<2x32xf32>
    %211 = math.exp %210 : vector<2x32xf32>
    %cst_81 = arith.constant 1.000000e+00 : f32
    %212 = vector.broadcast %cst_81 : f32 to vector<2x32xf32>
    %213 = arith.addf %212, %211 : vector<2x32xf32>
    %214 = arith.divf %212, %213 : vector<2x32xf32>
    %215 = vector.extract_strided_slice %202 {offsets = [0, 64], sizes = [2, 32], strides = [1, 1]} : vector<2x128xf32> to vector<2x32xf32>
    %216 = math.tanh %215 : vector<2x32xf32>
    %217 = vector.extract_strided_slice %202 {offsets = [0, 96], sizes = [2, 32], strides = [1, 1]} : vector<2x128xf32> to vector<2x32xf32>
    %218 = arith.negf %217 : vector<2x32xf32>
    %219 = math.exp %218 : vector<2x32xf32>
    %cst_82 = arith.constant 1.000000e+00 : f32
    %220 = vector.broadcast %cst_82 : f32 to vector<2x32xf32>
    %221 = arith.addf %220, %219 : vector<2x32xf32>
    %222 = arith.divf %220, %221 : vector<2x32xf32>
    %223 = arith.mulf %214, %140 : vector<2x32xf32>
    %224 = arith.mulf %208, %216 : vector<2x32xf32>
    %225 = arith.addf %223, %224 : vector<2x32xf32>
    %226 = math.tanh %225 : vector<2x32xf32>
    %227 = arith.mulf %222, %226 : vector<2x32xf32>
    %cst_83 = arith.constant dense<0.000000e+00> : vector<2x64xf32>
    %228 = tpu.matmul %227, %3, %cst_83 {dimension_numbers = #tpu.dot_dimension_numbers<[1], [0], [0], [1], [0, 0, 1, 1], [], []>} : vector<2x32xf32>, vector<32x64xf32>, vector<2x64xf32> -> vector<2x64xf32>
    %229 = vector.extract_strided_slice %228 {offsets = [0, 0], sizes = [2, 32], strides = [1, 1]} : vector<2x64xf32> to vector<2x32xf32>
    %230 = arith.addf %229, %11 : vector<2x32xf32>
    %231 = vector.shape_cast %230 : vector<2x32xf32> to vector<2x1x32xf32>
    %232 = vector.broadcast %231 : vector<2x1x32xf32> to vector<2x8x32xf32>
    %233 = arith.addf %232, %23 : vector<2x8x32xf32>
    %234 = math.tanh %233 : vector<2x8x32xf32>
    %235 = vector.broadcast %16 : vector<1x1x32xf32> to vector<2x8x32xf32>
    %236 = arith.mulf %234, %235 : vector<2x8x32xf32>
    %cst_84 = arith.constant dense<0.000000e+00> : vector<2x8xf32>
    %237 = vector.multi_reduction <add>, %236, %cst_84 [2] : vector<2x8x32xf32> to vector<2x8xf32>
    %cst_85 = arith.constant 0.000000e+00 : f32
    %238 = vector.broadcast %cst_85 : f32 to vector<2x8xf32>
    %239 = arith.cmpf oeq, %188, %238 : vector<2x8xf32>
    %cst_86 = arith.constant 0xFF800000 : f32
    %240 = vector.broadcast %cst_86 : f32 to vector<2x8xf32>
    %241 = arith.select %239, %240, %237 : vector<2x8xi1>, vector<2x8xf32>
    %cst_87 = arith.constant dense<0xFF800000> : vector<2xf32>
    %242 = vector.multi_reduction <maximumf>, %241, %cst_87 [1] : vector<2x8xf32> to vector<2xf32>
    %243 = vector.shape_cast %242 : vector<2xf32> to vector<2x1xf32>
    %244 = vector.broadcast %243 : vector<2x1xf32> to vector<2x8xf32>
    %245 = arith.subf %241, %244 : vector<2x8xf32>
    %246 = math.exp %245 : vector<2x8xf32>
    %cst_88 = arith.constant dense<0.000000e+00> : vector<2xf32>
    %247 = vector.multi_reduction <add>, %246, %cst_88 [1] : vector<2x8xf32> to vector<2xf32>
    %248 = vector.shape_cast %247 : vector<2xf32> to vector<2x1xf32>
    %cst_89 = arith.constant 1.000000e+00 : f32
    %249 = vector.broadcast %cst_89 : f32 to vector<2x1xf32>
    %250 = arith.divf %249, %248 : vector<2x1xf32>
    %251 = vector.broadcast %250 : vector<2x1xf32> to vector<2x8xf32>
    %252 = arith.mulf %246, %251 : vector<2x8xf32>
    %253 = vector.shape_cast %252 : vector<2x8xf32> to vector<2x8x1xf32>
    %254 = vector.broadcast %253 : vector<2x8x1xf32> to vector<2x8x32xf32>
    %255 = arith.mulf %254, %23 : vector<2x8x32xf32>
    %cst_90 = arith.constant dense<0.000000e+00> : vector<2x32xf32>
    %256 = vector.multi_reduction <add>, %255, %cst_90 [1] : vector<2x8x32xf32> to vector<2x32xf32>
    %cst_91 = arith.constant dense<0.000000e+00> : vector<2x32xf32>
    %257 = tpu.matmul %256, %4, %cst_91 {dimension_numbers = #tpu.dot_dimension_numbers<[1], [0], [0], [1], [0, 0, 1, 1], [], []>} : vector<2x32xf32>, vector<32x32xf32>, vector<2x32xf32> -> vector<2x32xf32>
    %258 = vector.extract_strided_slice %228 {offsets = [0, 32], sizes = [2, 32], strides = [1, 1]} : vector<2x64xf32> to vector<2x32xf32>
    %259 = arith.addf %257, %258 : vector<2x32xf32>
    %260 = arith.addf %259, %14 : vector<2x32xf32>
    %261 = math.tanh %260 : vector<2x32xf32>
    %cst_92 = arith.constant dense<0xFF800000> : vector<2xf32>
    %262 = vector.multi_reduction <maximumf>, %252, %cst_92 [1] : vector<2x8xf32> to vector<2xf32>
    %263 = vector.shape_cast %262 : vector<2xf32> to vector<2x1xf32>
    %264 = vector.broadcast %263 : vector<2x1xf32> to vector<2x8xf32>
    %265 = arith.cmpf oeq, %252, %264 : vector<2x8xf32>
    %c8_i32_93 = arith.constant 8 : i32
    %266 = vector.broadcast %c8_i32_93 : i32 to vector<2x8xi32>
    %267 = arith.select %265, %24, %266 : vector<2x8xi1>, vector<2x8xi32>
    %cst_94 = arith.constant dense<2147483647> : vector<2xi32>
    %268 = vector.multi_reduction <minsi>, %267, %cst_94 [1] : vector<2x8xi32> to vector<2xi32>
    %269 = vector.shape_cast %268 : vector<2xi32> to vector<2x1xi32>
    %270 = vector.broadcast %269 : vector<2x1xi32> to vector<2x8xi32>
    %271 = arith.cmpi eq, %24, %270 : vector<2x8xi32>
    %cst_95 = arith.constant 0.000000e+00 : f32
    %272 = vector.broadcast %cst_95 : f32 to vector<2x8xf32>
    %273 = arith.select %271, %272, %188 : vector<2x8xi1>, vector<2x8xf32>
    %274 = arith.extui %271 : vector<2x8xi1> to vector<2x8xi32>
    %275 = arith.sitofp %274 : vector<2x8xi32> to vector<2x8xf32>
    %276 = vector.shape_cast %275 : vector<2x8xf32> to vector<2x8x1xf32>
    %277 = vector.broadcast %276 : vector<2x8x1xf32> to vector<2x8x16xf32>
    %278 = arith.mulf %277, %0 : vector<2x8x16xf32>
    %cst_96 = arith.constant dense<0.000000e+00> : vector<2x16xf32>
    %279 = vector.multi_reduction <add>, %278, %cst_96 [1] : vector<2x8x16xf32> to vector<2x16xf32>
    %280 = vector.shape_cast %252 : vector<2x8xf32> to vector<2x1x8xf32>
    %c0_97 = arith.constant 0 : index
    %c2 = arith.constant 2 : index
    %c0_98 = arith.constant 0 : index
    %281 = vector.load %arg16[%c0_97, %c2, %c0_98] : memref<2x8x8xf32, #tpu.memory_space<vmem>>, vector<2x1x8xf32>
    tpu.vector_store %arg16[%c0_97, %c2, %c0_98], %280 {strides = array<i32>} : memref<2x8x8xf32, #tpu.memory_space<vmem>>, vector<2x1x8xf32>,
    %282 = vector.shape_cast %268 : vector<2xi32> to vector<2x1xi32>
    %c0_99 = arith.constant 0 : index
    %c2_100 = arith.constant 2 : index
    %283 = vector.load %arg17[%c0_99, %c2_100] : memref<2x8xi32, #tpu.memory_space<vmem>>, vector<2x1xi32>
    tpu.vector_store %arg17[%c0_99, %c2_100], %282 {strides = array<i32>} : memref<2x8xi32, #tpu.memory_space<vmem>>, vector<2x1xi32>,
    %cst_101 = arith.constant dense<0.000000e+00> : vector<2x128xf32>
    %284 = tpu.matmul %279, %1, %cst_101 {dimension_numbers = #tpu.dot_dimension_numbers<[1], [0], [0], [1], [0, 0, 1, 1], [], []>} : vector<2x16xf32>, vector<16x128xf32>, vector<2x128xf32> -> vector<2x128xf32>
    %cst_102 = arith.constant dense<0.000000e+00> : vector<2x128xf32>
    %285 = tpu.matmul %261, %2, %cst_102 {dimension_numbers = #tpu.dot_dimension_numbers<[1], [0], [0], [1], [0, 0, 1, 1], [], []>} : vector<2x32xf32>, vector<32x128xf32>, vector<2x128xf32> -> vector<2x128xf32>
    %286 = arith.addf %284, %285 : vector<2x128xf32>
    %287 = arith.addf %286, %8 : vector<2x128xf32>
    %288 = vector.extract_strided_slice %287 {offsets = [0, 0], sizes = [2, 32], strides = [1, 1]} : vector<2x128xf32> to vector<2x32xf32>
    %289 = arith.negf %288 : vector<2x32xf32>
    %290 = math.exp %289 : vector<2x32xf32>
    %cst_103 = arith.constant 1.000000e+00 : f32
    %291 = vector.broadcast %cst_103 : f32 to vector<2x32xf32>
    %292 = arith.addf %291, %290 : vector<2x32xf32>
    %293 = arith.divf %291, %292 : vector<2x32xf32>
    %294 = vector.extract_strided_slice %287 {offsets = [0, 32], sizes = [2, 32], strides = [1, 1]} : vector<2x128xf32> to vector<2x32xf32>
    %295 = arith.negf %294 : vector<2x32xf32>
    %296 = math.exp %295 : vector<2x32xf32>
    %cst_104 = arith.constant 1.000000e+00 : f32
    %297 = vector.broadcast %cst_104 : f32 to vector<2x32xf32>
    %298 = arith.addf %297, %296 : vector<2x32xf32>
    %299 = arith.divf %297, %298 : vector<2x32xf32>
    %300 = vector.extract_strided_slice %287 {offsets = [0, 64], sizes = [2, 32], strides = [1, 1]} : vector<2x128xf32> to vector<2x32xf32>
    %301 = math.tanh %300 : vector<2x32xf32>
    %302 = vector.extract_strided_slice %287 {offsets = [0, 96], sizes = [2, 32], strides = [1, 1]} : vector<2x128xf32> to vector<2x32xf32>
    %303 = arith.negf %302 : vector<2x32xf32>
    %304 = math.exp %303 : vector<2x32xf32>
    %cst_105 = arith.constant 1.000000e+00 : f32
    %305 = vector.broadcast %cst_105 : f32 to vector<2x32xf32>
    %306 = arith.addf %305, %304 : vector<2x32xf32>
    %307 = arith.divf %305, %306 : vector<2x32xf32>
    %308 = arith.mulf %299, %225 : vector<2x32xf32>
    %309 = arith.mulf %293, %301 : vector<2x32xf32>
    %310 = arith.addf %308, %309 : vector<2x32xf32>
    %311 = math.tanh %310 : vector<2x32xf32>
    %312 = arith.mulf %307, %311 : vector<2x32xf32>
    %cst_106 = arith.constant dense<0.000000e+00> : vector<2x64xf32>
    %313 = tpu.matmul %312, %3, %cst_106 {dimension_numbers = #tpu.dot_dimension_numbers<[1], [0], [0], [1], [0, 0, 1, 1], [], []>} : vector<2x32xf32>, vector<32x64xf32>, vector<2x64xf32> -> vector<2x64xf32>
    %314 = vector.extract_strided_slice %313 {offsets = [0, 0], sizes = [2, 32], strides = [1, 1]} : vector<2x64xf32> to vector<2x32xf32>
    %315 = arith.addf %314, %11 : vector<2x32xf32>
    %316 = vector.shape_cast %315 : vector<2x32xf32> to vector<2x1x32xf32>
    %317 = vector.broadcast %316 : vector<2x1x32xf32> to vector<2x8x32xf32>
    %318 = arith.addf %317, %23 : vector<2x8x32xf32>
    %319 = math.tanh %318 : vector<2x8x32xf32>
    %320 = vector.broadcast %16 : vector<1x1x32xf32> to vector<2x8x32xf32>
    %321 = arith.mulf %319, %320 : vector<2x8x32xf32>
    %cst_107 = arith.constant dense<0.000000e+00> : vector<2x8xf32>
    %322 = vector.multi_reduction <add>, %321, %cst_107 [2] : vector<2x8x32xf32> to vector<2x8xf32>
    %cst_108 = arith.constant 0.000000e+00 : f32
    %323 = vector.broadcast %cst_108 : f32 to vector<2x8xf32>
    %324 = arith.cmpf oeq, %273, %323 : vector<2x8xf32>
    %cst_109 = arith.constant 0xFF800000 : f32
    %325 = vector.broadcast %cst_109 : f32 to vector<2x8xf32>
    %326 = arith.select %324, %325, %322 : vector<2x8xi1>, vector<2x8xf32>
    %cst_110 = arith.constant dense<0xFF800000> : vector<2xf32>
    %327 = vector.multi_reduction <maximumf>, %326, %cst_110 [1] : vector<2x8xf32> to vector<2xf32>
    %328 = vector.shape_cast %327 : vector<2xf32> to vector<2x1xf32>
    %329 = vector.broadcast %328 : vector<2x1xf32> to vector<2x8xf32>
    %330 = arith.subf %326, %329 : vector<2x8xf32>
    %331 = math.exp %330 : vector<2x8xf32>
    %cst_111 = arith.constant dense<0.000000e+00> : vector<2xf32>
    %332 = vector.multi_reduction <add>, %331, %cst_111 [1] : vector<2x8xf32> to vector<2xf32>
    %333 = vector.shape_cast %332 : vector<2xf32> to vector<2x1xf32>
    %cst_112 = arith.constant 1.000000e+00 : f32
    %334 = vector.broadcast %cst_112 : f32 to vector<2x1xf32>
    %335 = arith.divf %334, %333 : vector<2x1xf32>
    %336 = vector.broadcast %335 : vector<2x1xf32> to vector<2x8xf32>
    %337 = arith.mulf %331, %336 : vector<2x8xf32>
    %338 = vector.shape_cast %337 : vector<2x8xf32> to vector<2x8x1xf32>
    %339 = vector.broadcast %338 : vector<2x8x1xf32> to vector<2x8x32xf32>
    %340 = arith.mulf %339, %23 : vector<2x8x32xf32>
    %cst_113 = arith.constant dense<0.000000e+00> : vector<2x32xf32>
    %341 = vector.multi_reduction <add>, %340, %cst_113 [1] : vector<2x8x32xf32> to vector<2x32xf32>
    %cst_114 = arith.constant dense<0.000000e+00> : vector<2x32xf32>
    %342 = tpu.matmul %341, %4, %cst_114 {dimension_numbers = #tpu.dot_dimension_numbers<[1], [0], [0], [1], [0, 0, 1, 1], [], []>} : vector<2x32xf32>, vector<32x32xf32>, vector<2x32xf32> -> vector<2x32xf32>
    %343 = vector.extract_strided_slice %313 {offsets = [0, 32], sizes = [2, 32], strides = [1, 1]} : vector<2x64xf32> to vector<2x32xf32>
    %344 = arith.addf %342, %343 : vector<2x32xf32>
    %345 = arith.addf %344, %14 : vector<2x32xf32>
    %346 = math.tanh %345 : vector<2x32xf32>
    %cst_115 = arith.constant dense<0xFF800000> : vector<2xf32>
    %347 = vector.multi_reduction <maximumf>, %337, %cst_115 [1] : vector<2x8xf32> to vector<2xf32>
    %348 = vector.shape_cast %347 : vector<2xf32> to vector<2x1xf32>
    %349 = vector.broadcast %348 : vector<2x1xf32> to vector<2x8xf32>
    %350 = arith.cmpf oeq, %337, %349 : vector<2x8xf32>
    %c8_i32_116 = arith.constant 8 : i32
    %351 = vector.broadcast %c8_i32_116 : i32 to vector<2x8xi32>
    %352 = arith.select %350, %24, %351 : vector<2x8xi1>, vector<2x8xi32>
    %cst_117 = arith.constant dense<2147483647> : vector<2xi32>
    %353 = vector.multi_reduction <minsi>, %352, %cst_117 [1] : vector<2x8xi32> to vector<2xi32>
    %354 = vector.shape_cast %353 : vector<2xi32> to vector<2x1xi32>
    %355 = vector.broadcast %354 : vector<2x1xi32> to vector<2x8xi32>
    %356 = arith.cmpi eq, %24, %355 : vector<2x8xi32>
    %cst_118 = arith.constant 0.000000e+00 : f32
    %357 = vector.broadcast %cst_118 : f32 to vector<2x8xf32>
    %358 = arith.select %356, %357, %273 : vector<2x8xi1>, vector<2x8xf32>
    %359 = arith.extui %356 : vector<2x8xi1> to vector<2x8xi32>
    %360 = arith.sitofp %359 : vector<2x8xi32> to vector<2x8xf32>
    %361 = vector.shape_cast %360 : vector<2x8xf32> to vector<2x8x1xf32>
    %362 = vector.broadcast %361 : vector<2x8x1xf32> to vector<2x8x16xf32>
    %363 = arith.mulf %362, %0 : vector<2x8x16xf32>
    %cst_119 = arith.constant dense<0.000000e+00> : vector<2x16xf32>
    %364 = vector.multi_reduction <add>, %363, %cst_119 [1] : vector<2x8x16xf32> to vector<2x16xf32>
    %365 = vector.shape_cast %337 : vector<2x8xf32> to vector<2x1x8xf32>
    %c0_120 = arith.constant 0 : index
    %c3 = arith.constant 3 : index
    %c0_121 = arith.constant 0 : index
    %366 = vector.load %arg16[%c0_120, %c3, %c0_121] : memref<2x8x8xf32, #tpu.memory_space<vmem>>, vector<2x1x8xf32>
    tpu.vector_store %arg16[%c0_120, %c3, %c0_121], %365 {strides = array<i32>} : memref<2x8x8xf32, #tpu.memory_space<vmem>>, vector<2x1x8xf32>,
    %367 = vector.shape_cast %353 : vector<2xi32> to vector<2x1xi32>
    %c0_122 = arith.constant 0 : index
    %c3_123 = arith.constant 3 : index
    %368 = vector.load %arg17[%c0_122, %c3_123] : memref<2x8xi32, #tpu.memory_space<vmem>>, vector<2x1xi32>
    tpu.vector_store %arg17[%c0_122, %c3_123], %367 {strides = array<i32>} : memref<2x8xi32, #tpu.memory_space<vmem>>, vector<2x1xi32>,
    %cst_124 = arith.constant dense<0.000000e+00> : vector<2x128xf32>
    %369 = tpu.matmul %364, %1, %cst_124 {dimension_numbers = #tpu.dot_dimension_numbers<[1], [0], [0], [1], [0, 0, 1, 1], [], []>} : vector<2x16xf32>, vector<16x128xf32>, vector<2x128xf32> -> vector<2x128xf32>
    %cst_125 = arith.constant dense<0.000000e+00> : vector<2x128xf32>
    %370 = tpu.matmul %346, %2, %cst_125 {dimension_numbers = #tpu.dot_dimension_numbers<[1], [0], [0], [1], [0, 0, 1, 1], [], []>} : vector<2x32xf32>, vector<32x128xf32>, vector<2x128xf32> -> vector<2x128xf32>
    %371 = arith.addf %369, %370 : vector<2x128xf32>
    %372 = arith.addf %371, %8 : vector<2x128xf32>
    %373 = vector.extract_strided_slice %372 {offsets = [0, 0], sizes = [2, 32], strides = [1, 1]} : vector<2x128xf32> to vector<2x32xf32>
    %374 = arith.negf %373 : vector<2x32xf32>
    %375 = math.exp %374 : vector<2x32xf32>
    %cst_126 = arith.constant 1.000000e+00 : f32
    %376 = vector.broadcast %cst_126 : f32 to vector<2x32xf32>
    %377 = arith.addf %376, %375 : vector<2x32xf32>
    %378 = arith.divf %376, %377 : vector<2x32xf32>
    %379 = vector.extract_strided_slice %372 {offsets = [0, 32], sizes = [2, 32], strides = [1, 1]} : vector<2x128xf32> to vector<2x32xf32>
    %380 = arith.negf %379 : vector<2x32xf32>
    %381 = math.exp %380 : vector<2x32xf32>
    %cst_127 = arith.constant 1.000000e+00 : f32
    %382 = vector.broadcast %cst_127 : f32 to vector<2x32xf32>
    %383 = arith.addf %382, %381 : vector<2x32xf32>
    %384 = arith.divf %382, %383 : vector<2x32xf32>
    %385 = vector.extract_strided_slice %372 {offsets = [0, 64], sizes = [2, 32], strides = [1, 1]} : vector<2x128xf32> to vector<2x32xf32>
    %386 = math.tanh %385 : vector<2x32xf32>
    %387 = vector.extract_strided_slice %372 {offsets = [0, 96], sizes = [2, 32], strides = [1, 1]} : vector<2x128xf32> to vector<2x32xf32>
    %388 = arith.negf %387 : vector<2x32xf32>
    %389 = math.exp %388 : vector<2x32xf32>
    %cst_128 = arith.constant 1.000000e+00 : f32
    %390 = vector.broadcast %cst_128 : f32 to vector<2x32xf32>
    %391 = arith.addf %390, %389 : vector<2x32xf32>
    %392 = arith.divf %390, %391 : vector<2x32xf32>
    %393 = arith.mulf %384, %310 : vector<2x32xf32>
    %394 = arith.mulf %378, %386 : vector<2x32xf32>
    %395 = arith.addf %393, %394 : vector<2x32xf32>
    %396 = math.tanh %395 : vector<2x32xf32>
    %397 = arith.mulf %392, %396 : vector<2x32xf32>
    %cst_129 = arith.constant dense<0.000000e+00> : vector<2x64xf32>
    %398 = tpu.matmul %397, %3, %cst_129 {dimension_numbers = #tpu.dot_dimension_numbers<[1], [0], [0], [1], [0, 0, 1, 1], [], []>} : vector<2x32xf32>, vector<32x64xf32>, vector<2x64xf32> -> vector<2x64xf32>
    %399 = vector.extract_strided_slice %398 {offsets = [0, 0], sizes = [2, 32], strides = [1, 1]} : vector<2x64xf32> to vector<2x32xf32>
    %400 = arith.addf %399, %11 : vector<2x32xf32>
    %401 = vector.shape_cast %400 : vector<2x32xf32> to vector<2x1x32xf32>
    %402 = vector.broadcast %401 : vector<2x1x32xf32> to vector<2x8x32xf32>
    %403 = arith.addf %402, %23 : vector<2x8x32xf32>
    %404 = math.tanh %403 : vector<2x8x32xf32>
    %405 = vector.broadcast %16 : vector<1x1x32xf32> to vector<2x8x32xf32>
    %406 = arith.mulf %404, %405 : vector<2x8x32xf32>
    %cst_130 = arith.constant dense<0.000000e+00> : vector<2x8xf32>
    %407 = vector.multi_reduction <add>, %406, %cst_130 [2] : vector<2x8x32xf32> to vector<2x8xf32>
    %cst_131 = arith.constant 0.000000e+00 : f32
    %408 = vector.broadcast %cst_131 : f32 to vector<2x8xf32>
    %409 = arith.cmpf oeq, %358, %408 : vector<2x8xf32>
    %cst_132 = arith.constant 0xFF800000 : f32
    %410 = vector.broadcast %cst_132 : f32 to vector<2x8xf32>
    %411 = arith.select %409, %410, %407 : vector<2x8xi1>, vector<2x8xf32>
    %cst_133 = arith.constant dense<0xFF800000> : vector<2xf32>
    %412 = vector.multi_reduction <maximumf>, %411, %cst_133 [1] : vector<2x8xf32> to vector<2xf32>
    %413 = vector.shape_cast %412 : vector<2xf32> to vector<2x1xf32>
    %414 = vector.broadcast %413 : vector<2x1xf32> to vector<2x8xf32>
    %415 = arith.subf %411, %414 : vector<2x8xf32>
    %416 = math.exp %415 : vector<2x8xf32>
    %cst_134 = arith.constant dense<0.000000e+00> : vector<2xf32>
    %417 = vector.multi_reduction <add>, %416, %cst_134 [1] : vector<2x8xf32> to vector<2xf32>
    %418 = vector.shape_cast %417 : vector<2xf32> to vector<2x1xf32>
    %cst_135 = arith.constant 1.000000e+00 : f32
    %419 = vector.broadcast %cst_135 : f32 to vector<2x1xf32>
    %420 = arith.divf %419, %418 : vector<2x1xf32>
    %421 = vector.broadcast %420 : vector<2x1xf32> to vector<2x8xf32>
    %422 = arith.mulf %416, %421 : vector<2x8xf32>
    %423 = vector.shape_cast %422 : vector<2x8xf32> to vector<2x8x1xf32>
    %424 = vector.broadcast %423 : vector<2x8x1xf32> to vector<2x8x32xf32>
    %425 = arith.mulf %424, %23 : vector<2x8x32xf32>
    %cst_136 = arith.constant dense<0.000000e+00> : vector<2x32xf32>
    %426 = vector.multi_reduction <add>, %425, %cst_136 [1] : vector<2x8x32xf32> to vector<2x32xf32>
    %cst_137 = arith.constant dense<0.000000e+00> : vector<2x32xf32>
    %427 = tpu.matmul %426, %4, %cst_137 {dimension_numbers = #tpu.dot_dimension_numbers<[1], [0], [0], [1], [0, 0, 1, 1], [], []>} : vector<2x32xf32>, vector<32x32xf32>, vector<2x32xf32> -> vector<2x32xf32>
    %428 = vector.extract_strided_slice %398 {offsets = [0, 32], sizes = [2, 32], strides = [1, 1]} : vector<2x64xf32> to vector<2x32xf32>
    %429 = arith.addf %427, %428 : vector<2x32xf32>
    %430 = arith.addf %429, %14 : vector<2x32xf32>
    %431 = math.tanh %430 : vector<2x32xf32>
    %cst_138 = arith.constant dense<0xFF800000> : vector<2xf32>
    %432 = vector.multi_reduction <maximumf>, %422, %cst_138 [1] : vector<2x8xf32> to vector<2xf32>
    %433 = vector.shape_cast %432 : vector<2xf32> to vector<2x1xf32>
    %434 = vector.broadcast %433 : vector<2x1xf32> to vector<2x8xf32>
    %435 = arith.cmpf oeq, %422, %434 : vector<2x8xf32>
    %c8_i32_139 = arith.constant 8 : i32
    %436 = vector.broadcast %c8_i32_139 : i32 to vector<2x8xi32>
    %437 = arith.select %435, %24, %436 : vector<2x8xi1>, vector<2x8xi32>
    %cst_140 = arith.constant dense<2147483647> : vector<2xi32>
    %438 = vector.multi_reduction <minsi>, %437, %cst_140 [1] : vector<2x8xi32> to vector<2xi32>
    %439 = vector.shape_cast %438 : vector<2xi32> to vector<2x1xi32>
    %440 = vector.broadcast %439 : vector<2x1xi32> to vector<2x8xi32>
    %441 = arith.cmpi eq, %24, %440 : vector<2x8xi32>
    %cst_141 = arith.constant 0.000000e+00 : f32
    %442 = vector.broadcast %cst_141 : f32 to vector<2x8xf32>
    %443 = arith.select %441, %442, %358 : vector<2x8xi1>, vector<2x8xf32>
    %444 = arith.extui %441 : vector<2x8xi1> to vector<2x8xi32>
    %445 = arith.sitofp %444 : vector<2x8xi32> to vector<2x8xf32>
    %446 = vector.shape_cast %445 : vector<2x8xf32> to vector<2x8x1xf32>
    %447 = vector.broadcast %446 : vector<2x8x1xf32> to vector<2x8x16xf32>
    %448 = arith.mulf %447, %0 : vector<2x8x16xf32>
    %cst_142 = arith.constant dense<0.000000e+00> : vector<2x16xf32>
    %449 = vector.multi_reduction <add>, %448, %cst_142 [1] : vector<2x8x16xf32> to vector<2x16xf32>
    %450 = vector.shape_cast %422 : vector<2x8xf32> to vector<2x1x8xf32>
    %c0_143 = arith.constant 0 : index
    %c4 = arith.constant 4 : index
    %c0_144 = arith.constant 0 : index
    %451 = vector.load %arg16[%c0_143, %c4, %c0_144] : memref<2x8x8xf32, #tpu.memory_space<vmem>>, vector<2x1x8xf32>
    tpu.vector_store %arg16[%c0_143, %c4, %c0_144], %450 {strides = array<i32>} : memref<2x8x8xf32, #tpu.memory_space<vmem>>, vector<2x1x8xf32>,
    %452 = vector.shape_cast %438 : vector<2xi32> to vector<2x1xi32>
    %c0_145 = arith.constant 0 : index
    %c4_146 = arith.constant 4 : index
    %453 = vector.load %arg17[%c0_145, %c4_146] : memref<2x8xi32, #tpu.memory_space<vmem>>, vector<2x1xi32>
    tpu.vector_store %arg17[%c0_145, %c4_146], %452 {strides = array<i32>} : memref<2x8xi32, #tpu.memory_space<vmem>>, vector<2x1xi32>,
    %cst_147 = arith.constant dense<0.000000e+00> : vector<2x128xf32>
    %454 = tpu.matmul %449, %1, %cst_147 {dimension_numbers = #tpu.dot_dimension_numbers<[1], [0], [0], [1], [0, 0, 1, 1], [], []>} : vector<2x16xf32>, vector<16x128xf32>, vector<2x128xf32> -> vector<2x128xf32>
    %cst_148 = arith.constant dense<0.000000e+00> : vector<2x128xf32>
    %455 = tpu.matmul %431, %2, %cst_148 {dimension_numbers = #tpu.dot_dimension_numbers<[1], [0], [0], [1], [0, 0, 1, 1], [], []>} : vector<2x32xf32>, vector<32x128xf32>, vector<2x128xf32> -> vector<2x128xf32>
    %456 = arith.addf %454, %455 : vector<2x128xf32>
    %457 = arith.addf %456, %8 : vector<2x128xf32>
    %458 = vector.extract_strided_slice %457 {offsets = [0, 0], sizes = [2, 32], strides = [1, 1]} : vector<2x128xf32> to vector<2x32xf32>
    %459 = arith.negf %458 : vector<2x32xf32>
    %460 = math.exp %459 : vector<2x32xf32>
    %cst_149 = arith.constant 1.000000e+00 : f32
    %461 = vector.broadcast %cst_149 : f32 to vector<2x32xf32>
    %462 = arith.addf %461, %460 : vector<2x32xf32>
    %463 = arith.divf %461, %462 : vector<2x32xf32>
    %464 = vector.extract_strided_slice %457 {offsets = [0, 32], sizes = [2, 32], strides = [1, 1]} : vector<2x128xf32> to vector<2x32xf32>
    %465 = arith.negf %464 : vector<2x32xf32>
    %466 = math.exp %465 : vector<2x32xf32>
    %cst_150 = arith.constant 1.000000e+00 : f32
    %467 = vector.broadcast %cst_150 : f32 to vector<2x32xf32>
    %468 = arith.addf %467, %466 : vector<2x32xf32>
    %469 = arith.divf %467, %468 : vector<2x32xf32>
    %470 = vector.extract_strided_slice %457 {offsets = [0, 64], sizes = [2, 32], strides = [1, 1]} : vector<2x128xf32> to vector<2x32xf32>
    %471 = math.tanh %470 : vector<2x32xf32>
    %472 = vector.extract_strided_slice %457 {offsets = [0, 96], sizes = [2, 32], strides = [1, 1]} : vector<2x128xf32> to vector<2x32xf32>
    %473 = arith.negf %472 : vector<2x32xf32>
    %474 = math.exp %473 : vector<2x32xf32>
    %cst_151 = arith.constant 1.000000e+00 : f32
    %475 = vector.broadcast %cst_151 : f32 to vector<2x32xf32>
    %476 = arith.addf %475, %474 : vector<2x32xf32>
    %477 = arith.divf %475, %476 : vector<2x32xf32>
    %478 = arith.mulf %469, %395 : vector<2x32xf32>
    %479 = arith.mulf %463, %471 : vector<2x32xf32>
    %480 = arith.addf %478, %479 : vector<2x32xf32>
    %481 = math.tanh %480 : vector<2x32xf32>
    %482 = arith.mulf %477, %481 : vector<2x32xf32>
    %cst_152 = arith.constant dense<0.000000e+00> : vector<2x64xf32>
    %483 = tpu.matmul %482, %3, %cst_152 {dimension_numbers = #tpu.dot_dimension_numbers<[1], [0], [0], [1], [0, 0, 1, 1], [], []>} : vector<2x32xf32>, vector<32x64xf32>, vector<2x64xf32> -> vector<2x64xf32>
    %484 = vector.extract_strided_slice %483 {offsets = [0, 0], sizes = [2, 32], strides = [1, 1]} : vector<2x64xf32> to vector<2x32xf32>
    %485 = arith.addf %484, %11 : vector<2x32xf32>
    %486 = vector.shape_cast %485 : vector<2x32xf32> to vector<2x1x32xf32>
    %487 = vector.broadcast %486 : vector<2x1x32xf32> to vector<2x8x32xf32>
    %488 = arith.addf %487, %23 : vector<2x8x32xf32>
    %489 = math.tanh %488 : vector<2x8x32xf32>
    %490 = vector.broadcast %16 : vector<1x1x32xf32> to vector<2x8x32xf32>
    %491 = arith.mulf %489, %490 : vector<2x8x32xf32>
    %cst_153 = arith.constant dense<0.000000e+00> : vector<2x8xf32>
    %492 = vector.multi_reduction <add>, %491, %cst_153 [2] : vector<2x8x32xf32> to vector<2x8xf32>
    %cst_154 = arith.constant 0.000000e+00 : f32
    %493 = vector.broadcast %cst_154 : f32 to vector<2x8xf32>
    %494 = arith.cmpf oeq, %443, %493 : vector<2x8xf32>
    %cst_155 = arith.constant 0xFF800000 : f32
    %495 = vector.broadcast %cst_155 : f32 to vector<2x8xf32>
    %496 = arith.select %494, %495, %492 : vector<2x8xi1>, vector<2x8xf32>
    %cst_156 = arith.constant dense<0xFF800000> : vector<2xf32>
    %497 = vector.multi_reduction <maximumf>, %496, %cst_156 [1] : vector<2x8xf32> to vector<2xf32>
    %498 = vector.shape_cast %497 : vector<2xf32> to vector<2x1xf32>
    %499 = vector.broadcast %498 : vector<2x1xf32> to vector<2x8xf32>
    %500 = arith.subf %496, %499 : vector<2x8xf32>
    %501 = math.exp %500 : vector<2x8xf32>
    %cst_157 = arith.constant dense<0.000000e+00> : vector<2xf32>
    %502 = vector.multi_reduction <add>, %501, %cst_157 [1] : vector<2x8xf32> to vector<2xf32>
    %503 = vector.shape_cast %502 : vector<2xf32> to vector<2x1xf32>
    %cst_158 = arith.constant 1.000000e+00 : f32
    %504 = vector.broadcast %cst_158 : f32 to vector<2x1xf32>
    %505 = arith.divf %504, %503 : vector<2x1xf32>
    %506 = vector.broadcast %505 : vector<2x1xf32> to vector<2x8xf32>
    %507 = arith.mulf %501, %506 : vector<2x8xf32>
    %508 = vector.shape_cast %507 : vector<2x8xf32> to vector<2x8x1xf32>
    %509 = vector.broadcast %508 : vector<2x8x1xf32> to vector<2x8x32xf32>
    %510 = arith.mulf %509, %23 : vector<2x8x32xf32>
    %cst_159 = arith.constant dense<0.000000e+00> : vector<2x32xf32>
    %511 = vector.multi_reduction <add>, %510, %cst_159 [1] : vector<2x8x32xf32> to vector<2x32xf32>
    %cst_160 = arith.constant dense<0.000000e+00> : vector<2x32xf32>
    %512 = tpu.matmul %511, %4, %cst_160 {dimension_numbers = #tpu.dot_dimension_numbers<[1], [0], [0], [1], [0, 0, 1, 1], [], []>} : vector<2x32xf32>, vector<32x32xf32>, vector<2x32xf32> -> vector<2x32xf32>
    %513 = vector.extract_strided_slice %483 {offsets = [0, 32], sizes = [2, 32], strides = [1, 1]} : vector<2x64xf32> to vector<2x32xf32>
    %514 = arith.addf %512, %513 : vector<2x32xf32>
    %515 = arith.addf %514, %14 : vector<2x32xf32>
    %516 = math.tanh %515 : vector<2x32xf32>
    %cst_161 = arith.constant dense<0xFF800000> : vector<2xf32>
    %517 = vector.multi_reduction <maximumf>, %507, %cst_161 [1] : vector<2x8xf32> to vector<2xf32>
    %518 = vector.shape_cast %517 : vector<2xf32> to vector<2x1xf32>
    %519 = vector.broadcast %518 : vector<2x1xf32> to vector<2x8xf32>
    %520 = arith.cmpf oeq, %507, %519 : vector<2x8xf32>
    %c8_i32_162 = arith.constant 8 : i32
    %521 = vector.broadcast %c8_i32_162 : i32 to vector<2x8xi32>
    %522 = arith.select %520, %24, %521 : vector<2x8xi1>, vector<2x8xi32>
    %cst_163 = arith.constant dense<2147483647> : vector<2xi32>
    %523 = vector.multi_reduction <minsi>, %522, %cst_163 [1] : vector<2x8xi32> to vector<2xi32>
    %524 = vector.shape_cast %523 : vector<2xi32> to vector<2x1xi32>
    %525 = vector.broadcast %524 : vector<2x1xi32> to vector<2x8xi32>
    %526 = arith.cmpi eq, %24, %525 : vector<2x8xi32>
    %cst_164 = arith.constant 0.000000e+00 : f32
    %527 = vector.broadcast %cst_164 : f32 to vector<2x8xf32>
    %528 = arith.select %526, %527, %443 : vector<2x8xi1>, vector<2x8xf32>
    %529 = arith.extui %526 : vector<2x8xi1> to vector<2x8xi32>
    %530 = arith.sitofp %529 : vector<2x8xi32> to vector<2x8xf32>
    %531 = vector.shape_cast %530 : vector<2x8xf32> to vector<2x8x1xf32>
    %532 = vector.broadcast %531 : vector<2x8x1xf32> to vector<2x8x16xf32>
    %533 = arith.mulf %532, %0 : vector<2x8x16xf32>
    %cst_165 = arith.constant dense<0.000000e+00> : vector<2x16xf32>
    %534 = vector.multi_reduction <add>, %533, %cst_165 [1] : vector<2x8x16xf32> to vector<2x16xf32>
    %535 = vector.shape_cast %507 : vector<2x8xf32> to vector<2x1x8xf32>
    %c0_166 = arith.constant 0 : index
    %c5 = arith.constant 5 : index
    %c0_167 = arith.constant 0 : index
    %536 = vector.load %arg16[%c0_166, %c5, %c0_167] : memref<2x8x8xf32, #tpu.memory_space<vmem>>, vector<2x1x8xf32>
    tpu.vector_store %arg16[%c0_166, %c5, %c0_167], %535 {strides = array<i32>} : memref<2x8x8xf32, #tpu.memory_space<vmem>>, vector<2x1x8xf32>,
    %537 = vector.shape_cast %523 : vector<2xi32> to vector<2x1xi32>
    %c0_168 = arith.constant 0 : index
    %c5_169 = arith.constant 5 : index
    %538 = vector.load %arg17[%c0_168, %c5_169] : memref<2x8xi32, #tpu.memory_space<vmem>>, vector<2x1xi32>
    tpu.vector_store %arg17[%c0_168, %c5_169], %537 {strides = array<i32>} : memref<2x8xi32, #tpu.memory_space<vmem>>, vector<2x1xi32>,
    %cst_170 = arith.constant dense<0.000000e+00> : vector<2x128xf32>
    %539 = tpu.matmul %534, %1, %cst_170 {dimension_numbers = #tpu.dot_dimension_numbers<[1], [0], [0], [1], [0, 0, 1, 1], [], []>} : vector<2x16xf32>, vector<16x128xf32>, vector<2x128xf32> -> vector<2x128xf32>
    %cst_171 = arith.constant dense<0.000000e+00> : vector<2x128xf32>
    %540 = tpu.matmul %516, %2, %cst_171 {dimension_numbers = #tpu.dot_dimension_numbers<[1], [0], [0], [1], [0, 0, 1, 1], [], []>} : vector<2x32xf32>, vector<32x128xf32>, vector<2x128xf32> -> vector<2x128xf32>
    %541 = arith.addf %539, %540 : vector<2x128xf32>
    %542 = arith.addf %541, %8 : vector<2x128xf32>
    %543 = vector.extract_strided_slice %542 {offsets = [0, 0], sizes = [2, 32], strides = [1, 1]} : vector<2x128xf32> to vector<2x32xf32>
    %544 = arith.negf %543 : vector<2x32xf32>
    %545 = math.exp %544 : vector<2x32xf32>
    %cst_172 = arith.constant 1.000000e+00 : f32
    %546 = vector.broadcast %cst_172 : f32 to vector<2x32xf32>
    %547 = arith.addf %546, %545 : vector<2x32xf32>
    %548 = arith.divf %546, %547 : vector<2x32xf32>
    %549 = vector.extract_strided_slice %542 {offsets = [0, 32], sizes = [2, 32], strides = [1, 1]} : vector<2x128xf32> to vector<2x32xf32>
    %550 = arith.negf %549 : vector<2x32xf32>
    %551 = math.exp %550 : vector<2x32xf32>
    %cst_173 = arith.constant 1.000000e+00 : f32
    %552 = vector.broadcast %cst_173 : f32 to vector<2x32xf32>
    %553 = arith.addf %552, %551 : vector<2x32xf32>
    %554 = arith.divf %552, %553 : vector<2x32xf32>
    %555 = vector.extract_strided_slice %542 {offsets = [0, 64], sizes = [2, 32], strides = [1, 1]} : vector<2x128xf32> to vector<2x32xf32>
    %556 = math.tanh %555 : vector<2x32xf32>
    %557 = vector.extract_strided_slice %542 {offsets = [0, 96], sizes = [2, 32], strides = [1, 1]} : vector<2x128xf32> to vector<2x32xf32>
    %558 = arith.negf %557 : vector<2x32xf32>
    %559 = math.exp %558 : vector<2x32xf32>
    %cst_174 = arith.constant 1.000000e+00 : f32
    %560 = vector.broadcast %cst_174 : f32 to vector<2x32xf32>
    %561 = arith.addf %560, %559 : vector<2x32xf32>
    %562 = arith.divf %560, %561 : vector<2x32xf32>
    %563 = arith.mulf %554, %480 : vector<2x32xf32>
    %564 = arith.mulf %548, %556 : vector<2x32xf32>
    %565 = arith.addf %563, %564 : vector<2x32xf32>
    %566 = math.tanh %565 : vector<2x32xf32>
    %567 = arith.mulf %562, %566 : vector<2x32xf32>
    %cst_175 = arith.constant dense<0.000000e+00> : vector<2x64xf32>
    %568 = tpu.matmul %567, %3, %cst_175 {dimension_numbers = #tpu.dot_dimension_numbers<[1], [0], [0], [1], [0, 0, 1, 1], [], []>} : vector<2x32xf32>, vector<32x64xf32>, vector<2x64xf32> -> vector<2x64xf32>
    %569 = vector.extract_strided_slice %568 {offsets = [0, 0], sizes = [2, 32], strides = [1, 1]} : vector<2x64xf32> to vector<2x32xf32>
    %570 = arith.addf %569, %11 : vector<2x32xf32>
    %571 = vector.shape_cast %570 : vector<2x32xf32> to vector<2x1x32xf32>
    %572 = vector.broadcast %571 : vector<2x1x32xf32> to vector<2x8x32xf32>
    %573 = arith.addf %572, %23 : vector<2x8x32xf32>
    %574 = math.tanh %573 : vector<2x8x32xf32>
    %575 = vector.broadcast %16 : vector<1x1x32xf32> to vector<2x8x32xf32>
    %576 = arith.mulf %574, %575 : vector<2x8x32xf32>
    %cst_176 = arith.constant dense<0.000000e+00> : vector<2x8xf32>
    %577 = vector.multi_reduction <add>, %576, %cst_176 [2] : vector<2x8x32xf32> to vector<2x8xf32>
    %cst_177 = arith.constant 0.000000e+00 : f32
    %578 = vector.broadcast %cst_177 : f32 to vector<2x8xf32>
    %579 = arith.cmpf oeq, %528, %578 : vector<2x8xf32>
    %cst_178 = arith.constant 0xFF800000 : f32
    %580 = vector.broadcast %cst_178 : f32 to vector<2x8xf32>
    %581 = arith.select %579, %580, %577 : vector<2x8xi1>, vector<2x8xf32>
    %cst_179 = arith.constant dense<0xFF800000> : vector<2xf32>
    %582 = vector.multi_reduction <maximumf>, %581, %cst_179 [1] : vector<2x8xf32> to vector<2xf32>
    %583 = vector.shape_cast %582 : vector<2xf32> to vector<2x1xf32>
    %584 = vector.broadcast %583 : vector<2x1xf32> to vector<2x8xf32>
    %585 = arith.subf %581, %584 : vector<2x8xf32>
    %586 = math.exp %585 : vector<2x8xf32>
    %cst_180 = arith.constant dense<0.000000e+00> : vector<2xf32>
    %587 = vector.multi_reduction <add>, %586, %cst_180 [1] : vector<2x8xf32> to vector<2xf32>
    %588 = vector.shape_cast %587 : vector<2xf32> to vector<2x1xf32>
    %cst_181 = arith.constant 1.000000e+00 : f32
    %589 = vector.broadcast %cst_181 : f32 to vector<2x1xf32>
    %590 = arith.divf %589, %588 : vector<2x1xf32>
    %591 = vector.broadcast %590 : vector<2x1xf32> to vector<2x8xf32>
    %592 = arith.mulf %586, %591 : vector<2x8xf32>
    %593 = vector.shape_cast %592 : vector<2x8xf32> to vector<2x8x1xf32>
    %594 = vector.broadcast %593 : vector<2x8x1xf32> to vector<2x8x32xf32>
    %595 = arith.mulf %594, %23 : vector<2x8x32xf32>
    %cst_182 = arith.constant dense<0.000000e+00> : vector<2x32xf32>
    %596 = vector.multi_reduction <add>, %595, %cst_182 [1] : vector<2x8x32xf32> to vector<2x32xf32>
    %cst_183 = arith.constant dense<0.000000e+00> : vector<2x32xf32>
    %597 = tpu.matmul %596, %4, %cst_183 {dimension_numbers = #tpu.dot_dimension_numbers<[1], [0], [0], [1], [0, 0, 1, 1], [], []>} : vector<2x32xf32>, vector<32x32xf32>, vector<2x32xf32> -> vector<2x32xf32>
    %598 = vector.extract_strided_slice %568 {offsets = [0, 32], sizes = [2, 32], strides = [1, 1]} : vector<2x64xf32> to vector<2x32xf32>
    %599 = arith.addf %597, %598 : vector<2x32xf32>
    %600 = arith.addf %599, %14 : vector<2x32xf32>
    %601 = math.tanh %600 : vector<2x32xf32>
    %cst_184 = arith.constant dense<0xFF800000> : vector<2xf32>
    %602 = vector.multi_reduction <maximumf>, %592, %cst_184 [1] : vector<2x8xf32> to vector<2xf32>
    %603 = vector.shape_cast %602 : vector<2xf32> to vector<2x1xf32>
    %604 = vector.broadcast %603 : vector<2x1xf32> to vector<2x8xf32>
    %605 = arith.cmpf oeq, %592, %604 : vector<2x8xf32>
    %c8_i32_185 = arith.constant 8 : i32
    %606 = vector.broadcast %c8_i32_185 : i32 to vector<2x8xi32>
    %607 = arith.select %605, %24, %606 : vector<2x8xi1>, vector<2x8xi32>
    %cst_186 = arith.constant dense<2147483647> : vector<2xi32>
    %608 = vector.multi_reduction <minsi>, %607, %cst_186 [1] : vector<2x8xi32> to vector<2xi32>
    %609 = vector.shape_cast %608 : vector<2xi32> to vector<2x1xi32>
    %610 = vector.broadcast %609 : vector<2x1xi32> to vector<2x8xi32>
    %611 = arith.cmpi eq, %24, %610 : vector<2x8xi32>
    %cst_187 = arith.constant 0.000000e+00 : f32
    %612 = vector.broadcast %cst_187 : f32 to vector<2x8xf32>
    %613 = arith.select %611, %612, %528 : vector<2x8xi1>, vector<2x8xf32>
    %614 = arith.extui %611 : vector<2x8xi1> to vector<2x8xi32>
    %615 = arith.sitofp %614 : vector<2x8xi32> to vector<2x8xf32>
    %616 = vector.shape_cast %615 : vector<2x8xf32> to vector<2x8x1xf32>
    %617 = vector.broadcast %616 : vector<2x8x1xf32> to vector<2x8x16xf32>
    %618 = arith.mulf %617, %0 : vector<2x8x16xf32>
    %cst_188 = arith.constant dense<0.000000e+00> : vector<2x16xf32>
    %619 = vector.multi_reduction <add>, %618, %cst_188 [1] : vector<2x8x16xf32> to vector<2x16xf32>
    %620 = vector.shape_cast %592 : vector<2x8xf32> to vector<2x1x8xf32>
    %c0_189 = arith.constant 0 : index
    %c6 = arith.constant 6 : index
    %c0_190 = arith.constant 0 : index
    %621 = vector.load %arg16[%c0_189, %c6, %c0_190] : memref<2x8x8xf32, #tpu.memory_space<vmem>>, vector<2x1x8xf32>
    tpu.vector_store %arg16[%c0_189, %c6, %c0_190], %620 {strides = array<i32>} : memref<2x8x8xf32, #tpu.memory_space<vmem>>, vector<2x1x8xf32>,
    %622 = vector.shape_cast %608 : vector<2xi32> to vector<2x1xi32>
    %c0_191 = arith.constant 0 : index
    %c6_192 = arith.constant 6 : index
    %623 = vector.load %arg17[%c0_191, %c6_192] : memref<2x8xi32, #tpu.memory_space<vmem>>, vector<2x1xi32>
    tpu.vector_store %arg17[%c0_191, %c6_192], %622 {strides = array<i32>} : memref<2x8xi32, #tpu.memory_space<vmem>>, vector<2x1xi32>,
    %cst_193 = arith.constant dense<0.000000e+00> : vector<2x128xf32>
    %624 = tpu.matmul %619, %1, %cst_193 {dimension_numbers = #tpu.dot_dimension_numbers<[1], [0], [0], [1], [0, 0, 1, 1], [], []>} : vector<2x16xf32>, vector<16x128xf32>, vector<2x128xf32> -> vector<2x128xf32>
    %cst_194 = arith.constant dense<0.000000e+00> : vector<2x128xf32>
    %625 = tpu.matmul %601, %2, %cst_194 {dimension_numbers = #tpu.dot_dimension_numbers<[1], [0], [0], [1], [0, 0, 1, 1], [], []>} : vector<2x32xf32>, vector<32x128xf32>, vector<2x128xf32> -> vector<2x128xf32>
    %626 = arith.addf %624, %625 : vector<2x128xf32>
    %627 = arith.addf %626, %8 : vector<2x128xf32>
    %628 = vector.extract_strided_slice %627 {offsets = [0, 0], sizes = [2, 32], strides = [1, 1]} : vector<2x128xf32> to vector<2x32xf32>
    %629 = arith.negf %628 : vector<2x32xf32>
    %630 = math.exp %629 : vector<2x32xf32>
    %cst_195 = arith.constant 1.000000e+00 : f32
    %631 = vector.broadcast %cst_195 : f32 to vector<2x32xf32>
    %632 = arith.addf %631, %630 : vector<2x32xf32>
    %633 = arith.divf %631, %632 : vector<2x32xf32>
    %634 = vector.extract_strided_slice %627 {offsets = [0, 32], sizes = [2, 32], strides = [1, 1]} : vector<2x128xf32> to vector<2x32xf32>
    %635 = arith.negf %634 : vector<2x32xf32>
    %636 = math.exp %635 : vector<2x32xf32>
    %cst_196 = arith.constant 1.000000e+00 : f32
    %637 = vector.broadcast %cst_196 : f32 to vector<2x32xf32>
    %638 = arith.addf %637, %636 : vector<2x32xf32>
    %639 = arith.divf %637, %638 : vector<2x32xf32>
    %640 = vector.extract_strided_slice %627 {offsets = [0, 64], sizes = [2, 32], strides = [1, 1]} : vector<2x128xf32> to vector<2x32xf32>
    %641 = math.tanh %640 : vector<2x32xf32>
    %642 = vector.extract_strided_slice %627 {offsets = [0, 96], sizes = [2, 32], strides = [1, 1]} : vector<2x128xf32> to vector<2x32xf32>
    %643 = arith.negf %642 : vector<2x32xf32>
    %644 = math.exp %643 : vector<2x32xf32>
    %cst_197 = arith.constant 1.000000e+00 : f32
    %645 = vector.broadcast %cst_197 : f32 to vector<2x32xf32>
    %646 = arith.addf %645, %644 : vector<2x32xf32>
    %647 = arith.divf %645, %646 : vector<2x32xf32>
    %648 = arith.mulf %639, %565 : vector<2x32xf32>
    %649 = arith.mulf %633, %641 : vector<2x32xf32>
    %650 = arith.addf %648, %649 : vector<2x32xf32>
    %651 = math.tanh %650 : vector<2x32xf32>
    %652 = arith.mulf %647, %651 : vector<2x32xf32>
    %cst_198 = arith.constant dense<0.000000e+00> : vector<2x64xf32>
    %653 = tpu.matmul %652, %3, %cst_198 {dimension_numbers = #tpu.dot_dimension_numbers<[1], [0], [0], [1], [0, 0, 1, 1], [], []>} : vector<2x32xf32>, vector<32x64xf32>, vector<2x64xf32> -> vector<2x64xf32>
    %654 = vector.extract_strided_slice %653 {offsets = [0, 0], sizes = [2, 32], strides = [1, 1]} : vector<2x64xf32> to vector<2x32xf32>
    %655 = arith.addf %654, %11 : vector<2x32xf32>
    %656 = vector.shape_cast %655 : vector<2x32xf32> to vector<2x1x32xf32>
    %657 = vector.broadcast %656 : vector<2x1x32xf32> to vector<2x8x32xf32>
    %658 = arith.addf %657, %23 : vector<2x8x32xf32>
    %659 = math.tanh %658 : vector<2x8x32xf32>
    %660 = vector.broadcast %16 : vector<1x1x32xf32> to vector<2x8x32xf32>
    %661 = arith.mulf %659, %660 : vector<2x8x32xf32>
    %cst_199 = arith.constant dense<0.000000e+00> : vector<2x8xf32>
    %662 = vector.multi_reduction <add>, %661, %cst_199 [2] : vector<2x8x32xf32> to vector<2x8xf32>
    %cst_200 = arith.constant 0.000000e+00 : f32
    %663 = vector.broadcast %cst_200 : f32 to vector<2x8xf32>
    %664 = arith.cmpf oeq, %613, %663 : vector<2x8xf32>
    %cst_201 = arith.constant 0xFF800000 : f32
    %665 = vector.broadcast %cst_201 : f32 to vector<2x8xf32>
    %666 = arith.select %664, %665, %662 : vector<2x8xi1>, vector<2x8xf32>
    %cst_202 = arith.constant dense<0xFF800000> : vector<2xf32>
    %667 = vector.multi_reduction <maximumf>, %666, %cst_202 [1] : vector<2x8xf32> to vector<2xf32>
    %668 = vector.shape_cast %667 : vector<2xf32> to vector<2x1xf32>
    %669 = vector.broadcast %668 : vector<2x1xf32> to vector<2x8xf32>
    %670 = arith.subf %666, %669 : vector<2x8xf32>
    %671 = math.exp %670 : vector<2x8xf32>
    %cst_203 = arith.constant dense<0.000000e+00> : vector<2xf32>
    %672 = vector.multi_reduction <add>, %671, %cst_203 [1] : vector<2x8xf32> to vector<2xf32>
    %673 = vector.shape_cast %672 : vector<2xf32> to vector<2x1xf32>
    %cst_204 = arith.constant 1.000000e+00 : f32
    %674 = vector.broadcast %cst_204 : f32 to vector<2x1xf32>
    %675 = arith.divf %674, %673 : vector<2x1xf32>
    %676 = vector.broadcast %675 : vector<2x1xf32> to vector<2x8xf32>
    %677 = arith.mulf %671, %676 : vector<2x8xf32>
    %678 = vector.shape_cast %677 : vector<2x8xf32> to vector<2x8x1xf32>
    %679 = vector.broadcast %678 : vector<2x8x1xf32> to vector<2x8x32xf32>
    %680 = arith.mulf %679, %23 : vector<2x8x32xf32>
    %cst_205 = arith.constant dense<0.000000e+00> : vector<2x32xf32>
    %681 = vector.multi_reduction <add>, %680, %cst_205 [1] : vector<2x8x32xf32> to vector<2x32xf32>
    %cst_206 = arith.constant dense<0.000000e+00> : vector<2x32xf32>
    %682 = tpu.matmul %681, %4, %cst_206 {dimension_numbers = #tpu.dot_dimension_numbers<[1], [0], [0], [1], [0, 0, 1, 1], [], []>} : vector<2x32xf32>, vector<32x32xf32>, vector<2x32xf32> -> vector<2x32xf32>
    %683 = vector.extract_strided_slice %653 {offsets = [0, 32], sizes = [2, 32], strides = [1, 1]} : vector<2x64xf32> to vector<2x32xf32>
    %684 = arith.addf %682, %683 : vector<2x32xf32>
    %685 = arith.addf %684, %14 : vector<2x32xf32>
    %686 = math.tanh %685 : vector<2x32xf32>
    %cst_207 = arith.constant dense<0xFF800000> : vector<2xf32>
    %687 = vector.multi_reduction <maximumf>, %677, %cst_207 [1] : vector<2x8xf32> to vector<2xf32>
    %688 = vector.shape_cast %687 : vector<2xf32> to vector<2x1xf32>
    %689 = vector.broadcast %688 : vector<2x1xf32> to vector<2x8xf32>
    %690 = arith.cmpf oeq, %677, %689 : vector<2x8xf32>
    %c8_i32_208 = arith.constant 8 : i32
    %691 = vector.broadcast %c8_i32_208 : i32 to vector<2x8xi32>
    %692 = arith.select %690, %24, %691 : vector<2x8xi1>, vector<2x8xi32>
    %cst_209 = arith.constant dense<2147483647> : vector<2xi32>
    %693 = vector.multi_reduction <minsi>, %692, %cst_209 [1] : vector<2x8xi32> to vector<2xi32>
    %694 = vector.shape_cast %677 : vector<2x8xf32> to vector<2x1x8xf32>
    %c0_210 = arith.constant 0 : index
    %c7 = arith.constant 7 : index
    %c0_211 = arith.constant 0 : index
    %695 = vector.load %arg16[%c0_210, %c7, %c0_211] : memref<2x8x8xf32, #tpu.memory_space<vmem>>, vector<2x1x8xf32>
    tpu.vector_store %arg16[%c0_210, %c7, %c0_211], %694 {strides = array<i32>} : memref<2x8x8xf32, #tpu.memory_space<vmem>>, vector<2x1x8xf32>,
    %696 = vector.shape_cast %693 : vector<2xi32> to vector<2x1xi32>
    %c0_212 = arith.constant 0 : index
    %c7_213 = arith.constant 7 : index
    %697 = vector.load %arg17[%c0_212, %c7_213] : memref<2x8xi32, #tpu.memory_space<vmem>>, vector<2x1xi32>
    tpu.vector_store %arg17[%c0_212, %c7_213], %696 {strides = array<i32>} : memref<2x8xi32, #tpu.memory_space<vmem>>, vector<2x1xi32>,
    %c0_214 = arith.constant 0 : index
    %c0_215 = arith.constant 0 : index
    %698 = vector.load %arg18[%c0_214, %c0_215] : memref<2x32xf32, #tpu.memory_space<vmem>>, vector<2x32xf32>
    tpu.vector_store %arg18[%c0_214, %c0_215], %686 {strides = array<i32>} : memref<2x32xf32, #tpu.memory_space<vmem>>, vector<2x32xf32>,
    %c0_216 = arith.constant 0 : index
    %c0_217 = arith.constant 0 : index
    %699 = vector.load %arg19[%c0_216, %c0_217] : memref<2x32xf32, #tpu.memory_space<vmem>>, vector<2x32xf32>
    tpu.vector_store %arg19[%c0_216, %c0_217], %650 {strides = array<i32>} : memref<2x32xf32, #tpu.memory_space<vmem>>, vector<2x32xf32>,
    return
  }
  func.func @transform_0(%arg0: i32) -> (i32, i32, i32) {
    %c0_i32 = arith.constant 0 : i32
    %c0_i32_0 = arith.constant 0 : i32
    %c0_i32_1 = arith.constant 0 : i32
    return %arg0, %c0_i32, %c0_i32_0 : i32, i32, i32
  }
  func.func @transform_1(%arg0: i32) -> (i32, i32) {
    %c0_i32 = arith.constant 0 : i32
    %c0_i32_0 = arith.constant 0 : i32
    return %arg0, %c0_i32 : i32, i32
  }
  func.func @transform_2(%arg0: i32) -> (i32, i32) {
    %c0_i32 = arith.constant 0 : i32
    %c0_i32_0 = arith.constant 0 : i32
    return %arg0, %c0_i32 : i32, i32
  }
  func.func @transform_3(%arg0: i32) -> (i32, i32) {
    %c0_i32 = arith.constant 0 : i32
    %c0_i32_0 = arith.constant 0 : i32
    return %arg0, %c0_i32 : i32, i32
  }
  func.func @transform_4(%arg0: i32) -> (i32, i32, i32) {
    %c0_i32 = arith.constant 0 : i32
    %c0_i32_0 = arith.constant 0 : i32
    %c0_i32_1 = arith.constant 0 : i32
    return %arg0, %c0_i32, %c0_i32_0 : i32, i32, i32
  }
  func.func @transform_5(%arg0: i32) -> (i32, i32) {
    %c0_i32 = arith.constant 0 : i32
    %c0_i32_0 = arith.constant 0 : i32
    %c0_i32_1 = arith.constant 0 : i32
    return %c0_i32, %c0_i32_0 : i32, i32
  }
  func.func @transform_6(%arg0: i32) -> (i32, i32) {
    %c0_i32 = arith.constant 0 : i32
    %c0_i32_0 = arith.constant 0 : i32
    %c0_i32_1 = arith.constant 0 : i32
    return %c0_i32, %c0_i32_0 : i32, i32
  }
  func.func @transform_7(%arg0: i32) -> (i32, i32) {
    %c0_i32 = arith.constant 0 : i32
    %c0_i32_0 = arith.constant 0 : i32
    %c0_i32_1 = arith.constant 0 : i32
    return %c0_i32, %c0_i32_0 : i32, i32
  }
  func.func @transform_8(%arg0: i32) -> (i32, i32) {
    %c0_i32 = arith.constant 0 : i32
    %c0_i32_0 = arith.constant 0 : i32
    %c0_i32_1 = arith.constant 0 : i32
    return %c0_i32, %c0_i32_0 : i32, i32
  }
  func.func @transform_9(%arg0: i32) -> (i32, i32) {
    %c0_i32 = arith.constant 0 : i32
    %c0_i32_0 = arith.constant 0 : i32
    %c0_i32_1 = arith.constant 0 : i32
    return %c0_i32, %c0_i32_0 : i32, i32
  }
  func.func @transform_10(%arg0: i32) -> (i32, i32) {
    %c0_i32 = arith.constant 0 : i32
    %c0_i32_0 = arith.constant 0 : i32
    %c0_i32_1 = arith.constant 0 : i32
    return %c0_i32, %c0_i32_0 : i32, i32
  }
  func.func @transform_11(%arg0: i32) -> (i32, i32) {
    %c0_i32 = arith.constant 0 : i32
    %c0_i32_0 = arith.constant 0 : i32
    %c0_i32_1 = arith.constant 0 : i32
    return %c0_i32, %c0_i32_0 : i32, i32
  }
  func.func @transform_12(%arg0: i32) -> (i32, i32) {
    %c0_i32 = arith.constant 0 : i32
    %c0_i32_0 = arith.constant 0 : i32
    %c0_i32_1 = arith.constant 0 : i32
    return %c0_i32, %c0_i32_0 : i32, i32
  }
  func.func @transform_13(%arg0: i32) -> (i32, i32) {
    %c0_i32 = arith.constant 0 : i32
    %c0_i32_0 = arith.constant 0 : i32
    %c0_i32_1 = arith.constant 0 : i32
    return %c0_i32, %c0_i32_0 : i32, i32
  }
  func.func @transform_14(%arg0: i32) -> (i32, i32) {
    %c0_i32 = arith.constant 0 : i32
    %c0_i32_0 = arith.constant 0 : i32
    %c0_i32_1 = arith.constant 0 : i32
    return %c0_i32, %c0_i32_0 : i32, i32
  }
  func.func @transform_15(%arg0: i32) -> (i32, i32, i32) {
    %c0_i32 = arith.constant 0 : i32
    %c0_i32_0 = arith.constant 0 : i32
    %c0_i32_1 = arith.constant 0 : i32
    return %arg0, %c0_i32, %c0_i32_0 : i32, i32, i32
  }
  func.func @transform_16(%arg0: i32) -> (i32, i32) {
    %c0_i32 = arith.constant 0 : i32
    %c0_i32_0 = arith.constant 0 : i32
    return %arg0, %c0_i32 : i32, i32
  }
  func.func @transform_17(%arg0: i32) -> (i32, i32) {
    %c0_i32 = arith.constant 0 : i32
    %c0_i32_0 = arith.constant 0 : i32
    return %arg0, %c0_i32 : i32, i32
  }
  func.func @transform_18(%arg0: i32) -> (i32, i32) {
    %c0_i32 = arith.constant 0 : i32
    %c0_i32_0 = arith.constant 0 : i32
    return %arg0, %c0_i32 : i32, i32
  }
}

</mosaic_0001>

<llo_original>
// kernel: tpu_custom_call.1
$region0: #{tpu_custom_call.1}
  #allocation0 [shape = 'u32[]', space=smem, size = 0x4, offset = 0x4, fixed_abs, tag = 'smem constant byte address 0x4 - core index']
  #allocation1 [shape = 'u32[144,128]{1,0:T(1,128)}', space=vmem, size = 0x12000, scoped, tag = 'internal scratch']
  %s0 = inlined_call_operand.vmem [shape: f32[2,8,16], index: 0, kind: input, shape index: {}]
  %s1 = inlined_call_operand.vmem [shape: f32[2,16], index: 1, kind: input, shape index: {}]
  %s2 = inlined_call_operand.hbm [shape: f32[2,32], index: 2, kind: input, shape index: {}, may-alias: {2,17}]
  %s3 = inlined_call_operand.hbm [shape: f32[2,32], index: 3, kind: input, shape index: {}, may-alias: {3,18}]
  %s4 = inlined_call_operand.hbm [shape: f32[2,8,32], index: 4, kind: input, shape index: {}]
  %s5 = inlined_call_operand.hbm [shape: f32[16,128], index: 5, kind: input, shape index: {}]
  %s6 = inlined_call_operand.hbm [shape: f32[32,128], index: 6, kind: input, shape index: {}]
  %s7 = inlined_call_operand.vmem [shape: f32[1,128], index: 7, kind: input, shape index: {}]
  %s8 = inlined_call_operand.hbm [shape: f32[32,64], index: 8, kind: input, shape index: {}]
  %s9 = inlined_call_operand.hbm [shape: f32[32,32], index: 9, kind: input, shape index: {}]
  %s10 = inlined_call_operand.vmem [shape: f32[1,32], index: 10, kind: input, shape index: {}]
  %s11 = inlined_call_operand.vmem [shape: f32[1,32], index: 11, kind: input, shape index: {}]
  %s12 = inlined_call_operand.hbm [shape: f32[32,32], index: 12, kind: input, shape index: {}]
  %s13 = inlined_call_operand.vmem [shape: f32[1,32], index: 13, kind: input, shape index: {}]
  %s14 = inlined_call_operand.hbm [shape: f32[1,32], index: 14, kind: input, shape index: {}]
  %s15 = inlined_call_operand.hbm [shape: f32[2,8,8], index: 15, kind: output, shape index: {0}]
  %s16 = inlined_call_operand.hbm [shape: s32[2,8], index: 16, kind: output, shape index: {1}]
  %s17 = inlined_call_operand.hbm [shape: f32[2,32], index: 17, kind: output, shape index: {2}, may-alias: {2,17}]
  %s18 = inlined_call_operand.hbm [shape: f32[2,32], index: 18, kind: output, shape index: {3}, may-alias: {3,18}]
  %19 = xla_tuple %s15, %s16, %s17, %s18
  %s20 = sld [smem:[#allocation0]]
  $region130: #{tpu_custom_call.1} parent=0
    _
  %s22 = ssub.s32 1, %s20
  %s23 = scalar_select 0, %s22, %s20
  $region1: #{tpu_custom_call.1} parent=0
    #allocation2 [shape = 'u8[1024]{0}', space=vmem, size = 0x400, scoped, tag = 'input window, operand 2, single buffered']
    #allocation3 [shape = 's32[1]{0}', space=sflag, size = 0x4, scoped, tag = 'scoped memory for tpu_custom_call.1']
    #allocation4 [shape = 's32[1]{0}', space=sflag, size = 0x4, scoped, tag = 'scoped memory for tpu_custom_call.1']
    #allocation5 [shape = 'u8[1024]{0}', space=vmem, size = 0x400, scoped, tag = 'input window, operand 3, single buffered']
    #allocation6 [shape = 's32[1]{0}', space=sflag, size = 0x4, scoped, tag = 'scoped memory for tpu_custom_call.1']
    #allocation7 [shape = 'u8[8192]{0}', space=vmem, size = 0x2000, scoped, tag = 'input window, operand 4, single buffered']
    #allocation8 [shape = 'u8[8192]{0}', space=vmem, size = 0x2000, scoped, tag = 'input window, operand 5, single buffered']
    #allocation9 [shape = 's32[1]{0}', space=sflag, size = 0x4, scoped, tag = 'scoped memory for tpu_custom_call.1']
    #allocation10 [shape = 'u8[16384]{0}', space=vmem, size = 0x4000, scoped, tag = 'input window, operand 6, single buffered']
    #allocation11 [shape = 'u8[16384]{0}', space=vmem, size = 0x4000, scoped, tag = 'input window, operand 8, single buffered']
    #allocation12 [shape = 's32[1]{0}', space=sflag, size = 0x4, scoped, tag = 'scoped memory for tpu_custom_call.1']
    #allocation13 [shape = 'u8[16384]{0}', space=vmem, size = 0x4000, scoped, tag = 'input window, operand 9, single buffered']
    #allocation14 [shape = 'u8[16384]{0}', space=vmem, size = 0x4000, scoped, tag = 'input window, operand 12, single buffered']
    #allocation15 [shape = 's32[1]{0}', space=sflag, size = 0x4, scoped, tag = 'scoped memory for tpu_custom_call.1']
    #allocation16 [shape = 'u8[512]{0}', space=vmem, size = 0x400, scoped, tag = 'input window, operand 14, single buffered']
    #allocation17 [shape = 'u8[8192]{0}', space=vmem, size = 0x2000, scoped, tag = 'output window, operand 0, single buffered']
    #allocation18 [shape = 'u8[1024]{0}', space=vmem, size = 0x400, scoped, tag = 'output window, operand 1, single buffered']
    #allocation19 [shape = 's32[1]{0}', space=sflag, size = 0x4, scoped, tag = 'scoped memory for tpu_custom_call.1']
    #allocation20 [shape = 'u8[1024]{0}', space=vmem, size = 0x400, scoped, tag = 'output window, operand 2, single buffered']
    #allocation21 [shape = 'u8[1024]{0}', space=vmem, size = 0x400, scoped, tag = 'output window, operand 3, single buffered']
    #allocation22 [shape = 's32[1]{0}', space=sflag, size = 0x4, scoped, tag = 'scoped memory for tpu_custom_call.1']
    %24 = vsyncpa [#allocation3], 0
    %25 = vsyncpa [#allocation6], 0
    %26 = vsyncpa [#allocation9], 0
    %27 = vsyncpa [#allocation12], 0
    %28 = vsyncpa [#allocation15], 0
    %29 = vsyncpa [#allocation4], 0
    %30 = vsyncpa [#allocation19], 0
    %31 = vsyncpa [#allocation22], 0
    // Predicated region
    $region2: #{tpu_custom_call.1} parent=1 // pred_check
      _
    $region3: #{tpu_custom_call.1} parent=1 // pred_check_branch
      %33 = sbr.rel (0) target = $region5
    $region4: #{tpu_custom_call.1} parent=1 // pred_region
      _
    $region5: #{tpu_custom_call.1} parent=1 // pred_fallthru
      _
    // Predicated region
    $region6: #{tpu_custom_call.1} parent=1 // pred_check
      _
    $region7: #{tpu_custom_call.1} parent=1 // pred_check_branch
      %35 = sbr.rel (0) target = $region9
    $region8: #{tpu_custom_call.1} parent=1 // pred_region
      _
    $region9: #{tpu_custom_call.1} parent=1 // pred_fallthru
      _
    // Predicated region
    $region10: #{tpu_custom_call.1} parent=1 // pred_check
      _
    $region11: #{tpu_custom_call.1} parent=1 // pred_check_branch
      %37 = sbr.rel (0) target = $region13
    $region12: #{tpu_custom_call.1} parent=1 // pred_region
      %s39 = ssub.s32 32, 32
      %40 = vsyncadd [#allocation3], %s39
      %s42 = sshll.u32 [#allocation2], 4
      %s43 = int_to_ptr.vmem [resolvable:$true] %s42
      %45 = dma.hbm_to_vmem [thread:$0]  %s2, 32, %s43, [#allocation3]
    $region13: #{tpu_custom_call.1} parent=1 // pred_fallthru
      _
    // Predicated region
    $region14: #{tpu_custom_call.1} parent=1 // pred_check
      _
    $region15: #{tpu_custom_call.1} parent=1 // pred_check_branch
      %47 = sbr.rel (0) target = $region17
    $region16: #{tpu_custom_call.1} parent=1 // pred_region
      %s49 = ssub.s32 32, 32
      %50 = vsyncadd [#allocation6], %s49
      %s52 = sshll.u32 [#allocation5], 4
      %s53 = int_to_ptr.vmem [resolvable:$true] %s52
      %55 = dma.hbm_to_vmem [thread:$0]  %s3, 32, %s53, [#allocation6]
    $region17: #{tpu_custom_call.1} parent=1 // pred_fallthru
      _
    // Predicated region
    $region18: #{tpu_custom_call.1} parent=1 // pred_check
      _
    $region19: #{tpu_custom_call.1} parent=1 // pred_check_branch
      %57 = sbr.rel (0) target = $region21
    $region20: #{tpu_custom_call.1} parent=1 // pred_region
      %s59 = ssub.s32 256, 256
      %60 = vsyncadd [#allocation6], %s59
      %s61 = sshll.u32 [#allocation7], 4
      %s62 = int_to_ptr.vmem [resolvable:$true] %s61
      %67 = dma.hbm_to_vmem [thread:$0]  %s4, 256, %s62, [#allocation6], 128, 128, 8
    $region21: #{tpu_custom_call.1} parent=1 // pred_fallthru
      _
    // Predicated region
    $region22: #{tpu_custom_call.1} parent=1 // pred_check
      _
    $region23: #{tpu_custom_call.1} parent=1 // pred_check_branch
      %69 = sbr.rel (0) target = $region25
    $region24: #{tpu_custom_call.1} parent=1 // pred_region
      %s71 = ssub.s32 256, 256
      %72 = vsyncadd [#allocation9], %s71
      %s73 = sshll.u32 [#allocation8], 4
      %s74 = int_to_ptr.vmem [resolvable:$true] %s73
      %79 = dma.hbm_to_vmem [thread:$0]  %s5, 256, %s74, [#allocation9], 128, 128, 8
    $region25: #{tpu_custom_call.1} parent=1 // pred_fallthru
      _
    // Predicated region
    $region26: #{tpu_custom_call.1} parent=1 // pred_check
      _
    $region27: #{tpu_custom_call.1} parent=1 // pred_check_branch
      %81 = sbr.rel (0) target = $region29
    $region28: #{tpu_custom_call.1} parent=1 // pred_region
      %s83 = ssub.s32 512, 512
      %84 = vsyncadd [#allocation9], %s83
      %s85 = sshll.u32 [#allocation10], 4
      %s86 = int_to_ptr.vmem [resolvable:$true] %s85
      %91 = dma.hbm_to_vmem [thread:$0]  %s6, 512, %s86, [#allocation9], 128, 128, 8
    $region29: #{tpu_custom_call.1} parent=1 // pred_fallthru
      _
    // Predicated region
    $region30: #{tpu_custom_call.1} parent=1 // pred_check
      _
    $region31: #{tpu_custom_call.1} parent=1 // pred_check_branch
      %93 = sbr.rel (0) target = $region33
    $region32: #{tpu_custom_call.1} parent=1 // pred_region
      _
    $region33: #{tpu_custom_call.1} parent=1 // pred_fallthru
      _
    // Predicated region
    $region34: #{tpu_custom_call.1} parent=1 // pred_check
      _
    $region35: #{tpu_custom_call.1} parent=1 // pred_check_branch
      %95 = sbr.rel (0) target = $region37
    $region36: #{tpu_custom_call.1} parent=1 // pred_region
      %s97 = ssub.s32 512, 512
      %98 = vsyncadd [#allocation12], %s97
      %s99 = sshll.u32 [#allocation11], 4
      %s100 = int_to_ptr.vmem [resolvable:$true] %s99
      %105 = dma.hbm_to_vmem [thread:$0]  %s8, 512, %s100, [#allocation12], 128, 128, 8
    $region37: #{tpu_custom_call.1} parent=1 // pred_fallthru
      _
    // Predicated region
    $region38: #{tpu_custom_call.1} parent=1 // pred_check
      _
    $region39: #{tpu_custom_call.1} parent=1 // pred_check_branch
      %107 = sbr.rel (0) target = $region41
    $region40: #{tpu_custom_call.1} parent=1 // pred_region
      %s109 = ssub.s32 512, 512
      %110 = vsyncadd [#allocation12], %s109
      %s111 = sshll.u32 [#allocation13], 4
      %s112 = int_to_ptr.vmem [resolvable:$true] %s111
      %117 = dma.hbm_to_vmem [thread:$0]  %s9, 512, %s112, [#allocation12], 128, 128, 8
    $region41: #{tpu_custom_call.1} parent=1 // pred_fallthru
      _
    // Predicated region
    $region42: #{tpu_custom_call.1} parent=1 // pred_check
      _
    $region43: #{tpu_custom_call.1} parent=1 // pred_check_branch
      %119 = sbr.rel (0) target = $region45
    $region44: #{tpu_custom_call.1} parent=1 // pred_region
      _
    $region45: #{tpu_custom_call.1} parent=1 // pred_fallthru
      _
    // Predicated region
    $region46: #{tpu_custom_call.1} parent=1 // pred_check
      _
    $region47: #{tpu_custom_call.1} parent=1 // pred_check_branch
      %121 = sbr.rel (0) target = $region49
    $region48: #{tpu_custom_call.1} parent=1 // pred_region
      _
    $region49: #{tpu_custom_call.1} parent=1 // pred_fallthru
      _
    // Predicated region
    $region50: #{tpu_custom_call.1} parent=1 // pred_check
      _
    $region51: #{tpu_custom_call.1} parent=1 // pred_check_branch
      %123 = sbr.rel (0) target = $region53
    $region52: #{tpu_custom_call.1} parent=1 // pred_region
      %s125 = ssub.s32 512, 512
      %126 = vsyncadd [#allocation15], %s125
      %s127 = sshll.u32 [#allocation14], 4
      %s128 = int_to_ptr.vmem [resolvable:$true] %s127
      %133 = dma.hbm_to_vmem [thread:$0]  %s12, 512, %s128, [#allocation15], 128, 128, 8
    $region53: #{tpu_custom_call.1} parent=1 // pred_fallthru
      _
    // Predicated region
    $region54: #{tpu_custom_call.1} parent=1 // pred_check
      _
    $region55: #{tpu_custom_call.1} parent=1 // pred_check_branch
      %135 = sbr.rel (0) target = $region57
    $region56: #{tpu_custom_call.1} parent=1 // pred_region
      _
    $region57: #{tpu_custom_call.1} parent=1 // pred_fallthru
      _
    // Predicated region
    $region58: #{tpu_custom_call.1} parent=1 // pred_check
      _
    $region59: #{tpu_custom_call.1} parent=1 // pred_check_branch
      %137 = sbr.rel (0) target = $region61
    $region60: #{tpu_custom_call.1} parent=1 // pred_region
      %s139 = ssub.s32 16, 16
      %140 = vsyncadd [#allocation15], %s139
      %s142 = sshll.u32 [#allocation16], 4
      %s143 = int_to_ptr.vmem [resolvable:$true] %s142
      %145 = dma.hbm_to_vmem [thread:$0]  %s14, 16, %s143, [#allocation15]
    $region61: #{tpu_custom_call.1} parent=1 // pred_fallthru
      _
    // Predicated region
    $region62: #{tpu_custom_call.1} parent=1 // pred_check
      _
    $region63: #{tpu_custom_call.1} parent=1 // pred_check_branch
      %147 = sbr.rel (0) target = $region65
    $region64: #{tpu_custom_call.1} parent=1 // pred_region
      %148 = dma.done [#allocation3], 32
    $region65: #{tpu_custom_call.1} parent=1 // pred_fallthru
      _
    // Predicated region
    $region66: #{tpu_custom_call.1} parent=1 // pred_check
      _
    $region67: #{tpu_custom_call.1} parent=1 // pred_check_branch
      %150 = sbr.rel (0) target = $region69
    $region68: #{tpu_custom_call.1} parent=1 // pred_region
      %151 = dma.done [#allocation6], 32
    $region69: #{tpu_custom_call.1} parent=1 // pred_fallthru
      _
    // Predicated region
    $region70: #{tpu_custom_call.1} parent=1 // pred_check
      _
    $region71: #{tpu_custom_call.1} parent=1 // pred_check_branch
      %153 = sbr.rel (0) target = $region73
    $region72: #{tpu_custom_call.1} parent=1 // pred_region
      %154 = dma.done [#allocation6], 256
    $region73: #{tpu_custom_call.1} parent=1 // pred_fallthru
      _
    // Predicated region
    $region74: #{tpu_custom_call.1} parent=1 // pred_check
      _
    $region75: #{tpu_custom_call.1} parent=1 // pred_check_branch
      %156 = sbr.rel (0) target = $region77
    $region76: #{tpu_custom_call.1} parent=1 // pred_region
      %157 = dma.done [#allocation9], 256
    $region77: #{tpu_custom_call.1} parent=1 // pred_fallthru
      _
    // Predicated region
    $region78: #{tpu_custom_call.1} parent=1 // pred_check
      _
    $region79: #{tpu_custom_call.1} parent=1 // pred_check_branch
      %159 = sbr.rel (0) target = $region81
    $region80: #{tpu_custom_call.1} parent=1 // pred_region
      %160 = dma.done [#allocation9], 512
    $region81: #{tpu_custom_call.1} parent=1 // pred_fallthru
      _
    // Predicated region
    $region82: #{tpu_custom_call.1} parent=1 // pred_check
      _
    $region83: #{tpu_custom_call.1} parent=1 // pred_check_branch
      %162 = sbr.rel (0) target = $region85
    $region84: #{tpu_custom_call.1} parent=1 // pred_region
      %163 = dma.done [#allocation12], 512
    $region85: #{tpu_custom_call.1} parent=1 // pred_fallthru
      _
    // Predicated region
    $region86: #{tpu_custom_call.1} parent=1 // pred_check
      _
    $region87: #{tpu_custom_call.1} parent=1 // pred_check_branch
      %165 = sbr.rel (0) target = $region89
    $region88: #{tpu_custom_call.1} parent=1 // pred_region
      %166 = dma.done [#allocation12], 512
    $region89: #{tpu_custom_call.1} parent=1 // pred_fallthru
      _
    // Predicated region
    $region90: #{tpu_custom_call.1} parent=1 // pred_check
      _
    $region91: #{tpu_custom_call.1} parent=1 // pred_check_branch
      %168 = sbr.rel (0) target = $region93
    $region92: #{tpu_custom_call.1} parent=1 // pred_region
      %169 = dma.done [#allocation15], 512
    $region93: #{tpu_custom_call.1} parent=1 // pred_fallthru
      _
    // Predicated region
    $region94: #{tpu_custom_call.1} parent=1 // pred_check
      _
    $region95: #{tpu_custom_call.1} parent=1 // pred_check_branch
      %171 = sbr.rel (0) target = $region97
    $region96: #{tpu_custom_call.1} parent=1 // pred_region
      %172 = dma.done [#allocation15], 16
    $region97: #{tpu_custom_call.1} parent=1 // pred_fallthru
      _
    %v173 = vld [vmem:[%s0] sm:$0xff]
    %v174 = vld [vmem:[%s0 + $0x8] sm:$0xff]
    %v175 = vld [vmem:[#allocation8] sm:$0xff]
    %v176 = vld [vmem:[#allocation8 + $0x8] sm:$0xff]
    %v177 = vld [vmem:[#allocation10] sm:$0xff]
    %v178 = vld [vmem:[#allocation10 + $0x8] sm:$0xff]
    %v179 = vld [vmem:[#allocation10 + $0x10] sm:$0xff]
    %v180 = vld [vmem:[#allocation10 + $0x18] sm:$0xff]
    %v181 = vld [vmem:[#allocation11] sm:$0xff]
    %v182 = vld [vmem:[#allocation11 + $0x8] sm:$0xff]
    %v183 = vld [vmem:[#allocation11 + $0x10] sm:$0xff]
    %v184 = vld [vmem:[#allocation11 + $0x18] sm:$0xff]
    %v185 = vld [vmem:[#allocation13] sm:$0xff]
    %v186 = vld [vmem:[#allocation13 + $0x8] sm:$0xff]
    %v187 = vld [vmem:[#allocation13 + $0x10] sm:$0xff]
    %v188 = vld [vmem:[#allocation13 + $0x18] sm:$0xff]
    %v189 = vld [vmem:[#allocation14] sm:$0xff]
    %v190 = vld [vmem:[#allocation14 + $0x8] sm:$0xff]
    %v191 = vld [vmem:[#allocation14 + $0x10] sm:$0xff]
    %v192 = vld [vmem:[#allocation14 + $0x18] sm:$0xff]
    %v193 = vld [vmem:[%s7] sm:$0x1]
    %v195 = vlaneseq
    %v196 = vshrl.u32 %v195, 7
    %v197 = vsub.s32 0, %v196
    %v198 = vrot.slane %v193, %v197
    %v200 = vld [vmem:[%s10] sm:$0x1]
    %v202 = vlaneseq
    %v203 = vshrl.u32 %v202, 7
    %v204 = vsub.s32 0, %v203
    %v205 = vrot.slane %v200, %v204
    %v207 = vld [vmem:[%s11] sm:$0x1]
    %v209 = vlaneseq
    %v210 = vshrl.u32 %v209, 7
    %v211 = vsub.s32 0, %v210
    %v212 = vrot.slane %v207, %v211
    %v214 = vld [vmem:[#allocation16] sm:$0x1]
    %v215 = vld [vmem:[#allocation7] sm:$0xff]
    %v216 = vld [vmem:[#allocation7 + $0x8] sm:$0xff]
    %v217 = vld [vmem:[%s13] sm:$0x1]
    %v219 = vlaneseq
    %v220 = vshrl.u32 %v219, 7
    %v221 = vsub.s32 0, %v220
    %v222 = vrot.slane %v217, %v221
    %vm224 = vcmask 261120
    %v226 = vsel %vm224, %v215, 0
    %v229 = vsel %vm224, %v216, 0
    %231 = vmatprep.subr.mxu0 0.0
    %232 = vmatpush1.msra.mxu0 0.0
    %233 = vmatprep.subr.mxu0 0.0
    %234 = vmatpush1.msra.mxu0 0.0
    %235 = vmatprep.subr.mxu0 0.0
    %236 = vmatpush1.msra.mxu0 0.0
    %237 = vmatprep.subr.mxu0 0.0
    %238 = vmatpush1.msra.mxu0 0.0
    %239 = vmatprep.subr.mxu0 0.0
    %240 = vmatpush1.msra.mxu0 0.0
    %241 = vmatprep.subr.mxu0 0.0
    %242 = vmatpush1.msra.mxu0 0.0
    %243 = vmatprep.subr.mxu0 0.0
    %244 = vmatpush1.msra.mxu0 0.0
    %245 = vmatprep.subr.mxu0 0.0
    %246 = vmatpush1.msra.mxu0 0.0
    %247 = vmatprep.subr.mxu0 0.0
    %248 = vmatpush1.msra.mxu0 0.0
    %249 = vmatprep.subr.mxu0 0.0
    %250 = vmatpush1.msra.mxu0 0.0
    %251 = vmatprep.subr.mxu0 0.0
    %252 = vmatpush1.msra.mxu0 0.0
    %253 = vmatprep.subr.mxu0 0.0
    %254 = vmatpush1.msra.mxu0 0.0
    %255 = vmatprep.subr.mxu0 0.0
    %256 = vmatpush1.msra.mxu0 %v192
    %257 = vmatprep.subr.mxu0 0.0
    %258 = vmatpush1.msra.mxu0 %v191
    %259 = vmatprep.subr.mxu0 0.0
    %260 = vmatpush1.msra.mxu0 %v190
    %261 = vmatprep.subr.mxu0 0.0
    %262 = vmatpush1.msra.mxu0 %v189
    %263 = vmatprep.subr.mxu0 0.0
    %264 = vmatpush2.msra.mxu0 0.0
    %265 = vmatprep.subr.mxu0 0.0
    %266 = vmatpush2.msra.mxu0 0.0
    %267 = vmatprep.subr.mxu0 0.0
    %268 = vmatpush2.msra.mxu0 0.0
    %269 = vmatprep.subr.mxu0 0.0
    %270 = vmatpush2.msra.mxu0 0.0
    %271 = vmatprep.subr.mxu0 0.0
    %272 = vmatpush2.msra.mxu0 0.0
    %273 = vmatprep.subr.mxu0 0.0
    %274 = vmatpush2.msra.mxu0 0.0
    %275 = vmatprep.subr.mxu0 0.0
    %276 = vmatpush2.msra.mxu0 0.0
    %277 = vmatprep.subr.mxu0 0.0
    %278 = vmatpush2.msra.mxu0 0.0
    %279 = vmatprep.subr.mxu0 0.0
    %280 = vmatpush2.msra.mxu0 0.0
    %281 = vmatprep.subr.mxu0 0.0
    %282 = vmatpush2.msra.mxu0 0.0
    %283 = vmatprep.subr.mxu0 0.0
    %284 = vmatpush2.msra.mxu0 0.0
    %285 = vmatprep.subr.mxu0 0.0
    %286 = vmatpush2.msra.mxu0 0.0
    %287 = vmatprep.subr.mxu0 0.0
    %288 = vmatpush2.msra.mxu0 0.0
    %289 = vmatprep.subr.mxu0 0.0
    %290 = vmatpush2.msra.mxu0 0.0
    %291 = vmatprep.subr.mxu0 0.0
    %292 = vmatpush2.msra.mxu0 0.0
    %293 = vmatprep.subr.mxu0 0.0
    %294 = vmatpush2.msra.mxu0 0.0
    %295 = vmatprep.mubr.f32.mxu0 0.0
    %296 = vmatmul.mubr.f32.gmra.mxu0 %v226
    %v297 = vpop.f32.mrf.mxu0
    %v298 = vadd.f32 %v222, %v297
    %v299 = vpop.f32.mrf.mxu0
    %300 = vmatprep.mubr.f32.mxu0 0.0
    %301 = vmatmul.mubr.f32.gmra.mxu0 %v229
    %v302 = vpop.f32.mrf.mxu0
    %v303 = vadd.f32 %v222, %v302
    %v304 = vpop.f32.mrf.mxu0
    %305 = vdwg.mxu0
    %v306 = vlaneseq
    %v307 = vand.u32 %v306, 127
    %v308 = vld [vmem:[#allocation2] sm:$0x3]
    %v309 = vld [vmem:[#allocation5] sm:$0x3]
    %v310 = vld [vmem:[%s1] sm:$0x3]
    %v312 = vsel %vm224, %v308, 0
    %314 = vmatprep.subr.mxu0 0.0
    %315 = vmatpush1.msra.mxu0 0.0
    %316 = vmatprep.subr.mxu0 0.0
    %317 = vmatpush1.msra.mxu0 0.0
    %318 = vmatprep.subr.mxu0 0.0
    %319 = vmatpush1.msra.mxu0 0.0
    %320 = vmatprep.subr.mxu0 0.0
    %321 = vmatpush1.msra.mxu0 0.0
    %322 = vmatprep.subr.mxu0 0.0
    %323 = vmatpush1.msra.mxu0 0.0
    %324 = vmatprep.subr.mxu0 0.0
    %325 = vmatpush1.msra.mxu0 0.0
    %326 = vmatprep.subr.mxu0 0.0
    %327 = vmatpush1.msra.mxu0 0.0
    %328 = vmatprep.subr.mxu0 0.0
    %329 = vmatpush1.msra.mxu0 0.0
    %330 = vmatprep.subr.mxu0 0.0
    %331 = vmatpush1.msra.mxu0 0.0
    %332 = vmatprep.subr.mxu0 0.0
    %333 = vmatpush1.msra.mxu0 0.0
    %334 = vmatprep.subr.mxu0 0.0
    %335 = vmatpush1.msra.mxu0 0.0
    %336 = vmatprep.subr.mxu0 0.0
    %337 = vmatpush1.msra.mxu0 0.0
    %338 = vmatprep.subr.mxu0 0.0
    %339 = vmatpush1.msra.mxu0 %v180
    %340 = vmatprep.subr.mxu0 0.0
    %341 = vmatpush1.msra.mxu0 %v179
    %342 = vmatprep.subr.mxu0 0.0
    %343 = vmatpush1.msra.mxu0 %v178
    %344 = vmatprep.subr.mxu0 0.0
    %345 = vmatpush1.msra.mxu0 %v177
    %346 = vmatprep.subr.mxu0 0.0
    %347 = vmatpush2.msra.mxu0 0.0
    %348 = vmatprep.subr.mxu0 0.0
    %349 = vmatpush2.msra.mxu0 0.0
    %350 = vmatprep.subr.mxu0 0.0
    %351 = vmatpush2.msra.mxu0 0.0
    %352 = vmatprep.subr.mxu0 0.0
    %353 = vmatpush2.msra.mxu0 0.0
    %354 = vmatprep.subr.mxu0 0.0
    %355 = vmatpush2.msra.mxu0 0.0
    %356 = vmatprep.subr.mxu0 0.0
    %357 = vmatpush2.msra.mxu0 0.0
    %358 = vmatprep.subr.mxu0 0.0
    %359 = vmatpush2.msra.mxu0 0.0
    %360 = vmatprep.subr.mxu0 0.0
    %361 = vmatpush2.msra.mxu0 0.0
    %362 = vmatprep.subr.mxu0 0.0
    %363 = vmatpush2.msra.mxu0 0.0
    %364 = vmatprep.subr.mxu0 0.0
    %365 = vmatpush2.msra.mxu0 0.0
    %366 = vmatprep.subr.mxu0 0.0
    %367 = vmatpush2.msra.mxu0 0.0
    %368 = vmatprep.subr.mxu0 0.0
    %369 = vmatpush2.msra.mxu0 0.0
    %370 = vmatprep.subr.mxu0 0.0
    %371 = vmatpush2.msra.mxu0 0.0
    %372 = vmatprep.subr.mxu0 0.0
    %373 = vmatpush2.msra.mxu0 0.0
    %374 = vmatprep.subr.mxu0 0.0
    %375 = vmatpush2.msra.mxu0 0.0
    %376 = vmatprep.subr.mxu0 0.0
    %377 = vmatpush2.msra.mxu0 0.0
    %378 = vmatprep.mubr.f32.mxu0 0.0
    %379 = vmatmul.mubr.f32.gmra.mxu0 %v312
    %v380 = vpop.f32.mrf.mxu0
    %v381 = vadd.f32 0.0, %v380
    %v382 = vpop.f32.mrf.mxu0
    %383 = vdwg.mxu0
    %vm384 = vcmask 130048
    %v386 = vsel %vm384, %v310, 0
    %388 = vmatprep.subr.mxu0 0.0
    %389 = vmatpush1.msra.mxu0 0.0
    %390 = vmatprep.subr.mxu0 0.0
    %391 = vmatpush1.msra.mxu0 0.0
    %392 = vmatprep.subr.mxu0 0.0
    %393 = vmatpush1.msra.mxu0 0.0
    %394 = vmatprep.subr.mxu0 0.0
    %395 = vmatpush1.msra.mxu0 0.0
    %396 = vmatprep.subr.mxu0 0.0
    %397 = vmatpush1.msra.mxu0 0.0
    %398 = vmatprep.subr.mxu0 0.0
    %399 = vmatpush1.msra.mxu0 0.0
    %400 = vmatprep.subr.mxu0 0.0
    %401 = vmatpush1.msra.mxu0 0.0
    %402 = vmatprep.subr.mxu0 0.0
    %403 = vmatpush1.msra.mxu0 0.0
    %404 = vmatprep.subr.mxu0 0.0
    %405 = vmatpush1.msra.mxu0 0.0
    %406 = vmatprep.subr.mxu0 0.0
    %407 = vmatpush1.msra.mxu0 0.0
    %408 = vmatprep.subr.mxu0 0.0
    %409 = vmatpush1.msra.mxu0 0.0
    %410 = vmatprep.subr.mxu0 0.0
    %411 = vmatpush1.msra.mxu0 0.0
    %412 = vmatprep.subr.mxu0 0.0
    %413 = vmatpush1.msra.mxu0 0.0
    %414 = vmatprep.subr.mxu0 0.0
    %415 = vmatpush1.msra.mxu0 0.0
    %416 = vmatprep.subr.mxu0 0.0
    %417 = vmatpush1.msra.mxu0 %v176
    %418 = vmatprep.subr.mxu0 0.0
    %419 = vmatpush1.msra.mxu0 %v175
    %420 = vmatprep.subr.mxu0 0.0
    %421 = vmatpush2.msra.mxu0 0.0
    %422 = vmatprep.subr.mxu0 0.0
    %423 = vmatpush2.msra.mxu0 0.0
    %424 = vmatprep.subr.mxu0 0.0
    %425 = vmatpush2.msra.mxu0 0.0
    %426 = vmatprep.subr.mxu0 0.0
    %427 = vmatpush2.msra.mxu0 0.0
    %428 = vmatprep.subr.mxu0 0.0
    %429 = vmatpush2.msra.mxu0 0.0
    %430 = vmatprep.subr.mxu0 0.0
    %431 = vmatpush2.msra.mxu0 0.0
    %432 = vmatprep.subr.mxu0 0.0
    %433 = vmatpush2.msra.mxu0 0.0
    %434 = vmatprep.subr.mxu0 0.0
    %435 = vmatpush2.msra.mxu0 0.0
    %436 = vmatprep.subr.mxu0 0.0
    %437 = vmatpush2.msra.mxu0 0.0
    %438 = vmatprep.subr.mxu0 0.0
    %439 = vmatpush2.msra.mxu0 0.0
    %440 = vmatprep.subr.mxu0 0.0
    %441 = vmatpush2.msra.mxu0 0.0
    %442 = vmatprep.subr.mxu0 0.0
    %443 = vmatpush2.msra.mxu0 0.0
    %444 = vmatprep.subr.mxu0 0.0
    %445 = vmatpush2.msra.mxu0 0.0
    %446 = vmatprep.subr.mxu0 0.0
    %447 = vmatpush2.msra.mxu0 0.0
    %448 = vmatprep.subr.mxu0 0.0
    %449 = vmatpush2.msra.mxu0 0.0
    %450 = vmatprep.subr.mxu0 0.0
    %451 = vmatpush2.msra.mxu0 0.0
    %452 = vmatprep.mubr.f32.mxu0 0.0
    %453 = vmatmul.mubr.f32.gmra.mxu0 %v386
    %v454 = vpop.f32.mrf.mxu0
    %v455 = vadd.f32 %v381, %v454
    %v456 = vpop.f32.mrf.mxu0
    %457 = vdwg.mxu0
    %v458 = vadd.f32 %v455, %v198
    %v459 = vxor.u32 %v458, 2147483648
    %v460 = vmul.f32 %v459, 1.442695
    %v461 = vpow.pop %v460
    %v462 = vadd.f32 %v461, 1.0
    %v463 = vrcp.pop %v462
    %v464 = vmul.f32 1.0, %v463
    %v465 = vtanh.pop %v458
    %467 = vrot.lane.b32.xlu0 %v309, 32
    %v468 = vpop.permute.xlu0 %467
    %v470 = vmul.f32 %v464, %v468
    %472 = vrot.lane.b32.xlu0 %v465, 64
    %v473 = vpop.permute.xlu0 %472
    %v475 = vmul.f32 %v464, %v473
    %477 = vrot.lane.b32.xlu0 %v475, 32
    %v478 = vpop.permute.xlu0 %477
    %v480 = vadd.f32 %v470, %v478
    %v481 = vtanh.pop %v480
    %483 = vrot.lane.b32.xlu0 %v481, 64
    %v484 = vpop.permute.xlu0 %483
    %v486 = vmul.f32 %v464, %v484
    %488 = vrot.lane.b32.xlu0 %v486, 32
    %v489 = vpop.permute.xlu0 %488
    %v490 = vsel %vm224, %v489, 0
    %492 = vmatprep.subr.mxu0 0.0
    %493 = vmatpush1.msra.mxu0 0.0
    %494 = vmatprep.subr.mxu0 0.0
    %495 = vmatpush1.msra.mxu0 0.0
    %496 = vmatprep.subr.mxu0 0.0
    %497 = vmatpush1.msra.mxu0 0.0
    %498 = vmatprep.subr.mxu0 0.0
    %499 = vmatpush1.msra.mxu0 0.0
    %500 = vmatprep.subr.mxu0 0.0
    %501 = vmatpush1.msra.mxu0 0.0
    %502 = vmatprep.subr.mxu0 0.0
    %503 = vmatpush1.msra.mxu0 0.0
    %504 = vmatprep.subr.mxu0 0.0
    %505 = vmatpush1.msra.mxu0 0.0
    %506 = vmatprep.subr.mxu0 0.0
    %507 = vmatpush1.msra.mxu0 0.0
    %508 = vmatprep.subr.mxu0 0.0
    %509 = vmatpush1.msra.mxu0 0.0
    %510 = vmatprep.subr.mxu0 0.0
    %511 = vmatpush1.msra.mxu0 0.0
    %512 = vmatprep.subr.mxu0 0.0
    %513 = vmatpush1.msra.mxu0 0.0
    %514 = vmatprep.subr.mxu0 0.0
    %515 = vmatpush1.msra.mxu0 0.0
    %516 = vmatprep.subr.mxu0 0.0
    %517 = vmatpush1.msra.mxu0 %v184
    %518 = vmatprep.subr.mxu0 0.0
    %519 = vmatpush1.msra.mxu0 %v183
    %520 = vmatprep.subr.mxu0 0.0
    %521 = vmatpush1.msra.mxu0 %v182
    %522 = vmatprep.subr.mxu0 0.0
    %523 = vmatpush1.msra.mxu0 %v181
    %524 = vmatprep.subr.mxu0 0.0
    %525 = vmatpush2.msra.mxu0 0.0
    %526 = vmatprep.subr.mxu0 0.0
    %527 = vmatpush2.msra.mxu0 0.0
    %528 = vmatprep.subr.mxu0 0.0
    %529 = vmatpush2.msra.mxu0 0.0
    %530 = vmatprep.subr.mxu0 0.0
    %531 = vmatpush2.msra.mxu0 0.0
    %532 = vmatprep.subr.mxu0 0.0
    %533 = vmatpush2.msra.mxu0 0.0
    %534 = vmatprep.subr.mxu0 0.0
    %535 = vmatpush2.msra.mxu0 0.0
    %536 = vmatprep.subr.mxu0 0.0
    %537 = vmatpush2.msra.mxu0 0.0
    %538 = vmatprep.subr.mxu0 0.0
    %539 = vmatpush2.msra.mxu0 0.0
    %540 = vmatprep.subr.mxu0 0.0
    %541 = vmatpush2.msra.mxu0 0.0
    %542 = vmatprep.subr.mxu0 0.0
    %543 = vmatpush2.msra.mxu0 0.0
    %544 = vmatprep.subr.mxu0 0.0
    %545 = vmatpush2.msra.mxu0 0.0
    %546 = vmatprep.subr.mxu0 0.0
    %547 = vmatpush2.msra.mxu0 0.0
    %548 = vmatprep.subr.mxu0 0.0
    %549 = vmatpush2.msra.mxu0 0.0
    %550 = vmatprep.subr.mxu0 0.0
    %551 = vmatpush2.msra.mxu0 0.0
    %552 = vmatprep.subr.mxu0 0.0
    %553 = vmatpush2.msra.mxu0 0.0
    %554 = vmatprep.subr.mxu0 0.0
    %555 = vmatpush2.msra.mxu0 0.0
    %556 = vmatprep.mubr.f32.mxu0 0.0
    %557 = vmatmul.mubr.f32.gmra.mxu0 %v490
    %v558 = vpop.f32.mrf.mxu0
    %v559 = vadd.f32 0.0, %v558
    %v560 = vpop.f32.mrf.mxu0
    %561 = vdwg.mxu0
    %v562 = vadd.f32 %v559, %v205
    %v565 = vunpack.c.l.s4 1966171168
    %v566 = vunpack.c.0.s8 %v565
    %v567 = vlaneseq
    %v568 = vshrl.u32 %v567, 7
    %v569 = vsub.s32 %v566, %v568
    %v570 = vrot.slane %v562, %v569
    %v571 = vcombine.high %v570, %v570
    %v573 = vunpack.c.l.s4 1966171168
    %v574 = vunpack.c.0.s8 %v573
    %v575 = vlaneseq
    %v576 = vshrl.u32 %v575, 7
    %v577 = vsub.s32 %v574, %v576
    %v578 = vrot.slane %v570, %v577
    %v580 = vunpack.c.l.s4 1966171168
    %v581 = vunpack.c.0.s8 %v580
    %v582 = vlaneseq
    %v583 = vshrl.u32 %v582, 7
    %v584 = vsub.s32 %v581, %v583
    %v585 = vrot.slane %v571, %v584
    %v586 = vlaneseq
    %v587 = vshrl.u32 %v586, 7
    %v588 = vsub.s32 0, %v587
    %v589 = vrot.slane %v578, %v588
    %v590 = vlaneseq
    %v591 = vshrl.u32 %v590, 7
    %v592 = vsub.s32 0, %v591
    %v593 = vrot.slane %v585, %v592
    %v596 = vadd.f32 %v589, %v298
    %v597 = vadd.f32 %v593, %v303
    %v598 = vtanh.pop %v596
    %v599 = vtanh.pop %v597
    %v601 = vlaneseq
    %v602 = vshrl.u32 %v601, 7
    %v603 = vsub.s32 0, %v602
    %v604 = vrot.slane %v214, %v603
    %v606 = vmul.f32 %v598, %v604
    %v607 = vmul.f32 %v599, %v604
    %v608 = vsel %vm224, %v606, 0.0
    %609 = vadd.xlane.f32.xlu0 %v608
    %v610 = vpop.xlane.xlu0 %609
    %v611 = vsel %vm224, %v607, 0.0
    %612 = vadd.xlane.f32.xlu0 %v611
    %v613 = vpop.xlane.xlu0 %612
    %vm614 = vcmp.eq.f32.partialorder 1.0, 0.0
    %v615 = vsel %vm614, -inf, %v610
    %v616 = vsel %vm614, -inf, %v613
    %v619 = vlaneseq
    %v620 = vshrl.u32 %v619, 7
    %v621 = vsub.s32 %v307, %v620
    %v622 = vrot.slane %v615, %v621
    %v623 = vlaneseq
    %v624 = vshrl.u32 %v623, 7
    %v625 = vsub.s32 %v307, %v624
    %v626 = vrot.slane %v616, %v625
    %vm627 = vcmask 1041409
    %v628 = vsel %vm627, %v626, %v622
    %vm630 = vcmask 58368
    %v631 = vsel %vm630, %v628, -inf
    %632 = vmax.xlane.f32.xlu0 %v631
    %v633 = vpop.xlane.xlu0 %632
    %v635 = vlaneseq
    %v636 = vshrl.u32 %v635, 7
    %v637 = vsub.s32 0, %v636
    %v638 = vrot.slane %v633, %v637
    %v639 = vlaneseq
    %v640 = vshrl.u32 %v639, 7
    %v641 = vsub.s32 1, %v640
    %v642 = vrot.slane %v633, %v641
    %v645 = vsub.f32 %v615, %v638
    %v646 = vsub.f32 %v616, %v642
    %v647 = vmul.f32 %v645, 1.442695
    %v648 = vpow.pop %v647
    %v649 = vmul.f32 %v646, 1.442695
    %v650 = vpow.pop %v649
    %653 = vset.pattern.permute.xlu0 0
    %654 = vperm.xlu0 %653, %v648
    %v655 = vpop.permute.xlu0 %654
    %656 = vset.pattern.permute.xlu0 0
    %657 = vperm.xlu0 %656, %v650
    %v658 = vpop.permute.xlu0 %657
    %v659 = vlaneseq
    %v660 = vshrl.u32 %v659, 7
    %v661 = vsub.s32 %v307, %v660
    %v662 = vrot.slane %v655, %v661
    %v663 = vlaneseq
    %v664 = vshrl.u32 %v663, 7
    %v665 = vsub.s32 %v307, %v664
    %v666 = vrot.slane %v658, %v665
    %v667 = vsel %vm627, %v666, %v662
    %v669 = vsel %vm630, %v667, 0.0
    %670 = vadd.xlane.f32.xlu0 %v669
    %v671 = vpop.xlane.xlu0 %670
    %v672 = vrcp.pop %v671
    %v673 = vmul.f32 1.0, %v672
    %v675 = vlaneseq
    %v676 = vshrl.u32 %v675, 7
    %v677 = vsub.s32 0, %v676
    %v678 = vrot.slane %v673, %v677
    %v679 = vlaneseq
    %v680 = vshrl.u32 %v679, 7
    %v681 = vsub.s32 1, %v680
    %v682 = vrot.slane %v673, %v681
    %v685 = vmul.f32 %v648, %v678
    %v686 = vmul.f32 %v650, %v682
    %688 = vset.pattern.permute.xlu0 0
    %689 = vperm.xlu0 %688, %v685
    %v690 = vpop.permute.xlu0 %689
    %693 = vset.pattern.permute.xlu0 0
    %694 = vperm.xlu0 %693, %v686
    %v695 = vpop.permute.xlu0 %694
    %v697 = vmul.f32 %v690, %v298
    %v698 = vmul.f32 %v695, %v303
    %v699 = vsel %vm224, %v697, 0.0
    %v700 = vrot.slane %v699, 4
    %v701 = vadd.f32 %v699, %v700
    %v702 = vrot.slane %v701, 2
    %v703 = vadd.f32 %v701, %v702
    %v704 = vrot.slane %v703, 1
    %v705 = vadd.f32 %v703, %v704
    %v706 = vsel %vm224, %v698, 0.0
    %v707 = vrot.slane %v706, 4
    %v708 = vadd.f32 %v706, %v707
    %v709 = vrot.slane %v708, 2
    %v710 = vadd.f32 %v708, %v709
    %v711 = vrot.slane %v710, 1
    %v712 = vadd.f32 %v710, %v711
    %v715 = vsel %vm627, %v712, %v705
    %717 = vrot.lane.b32.xlu0 %v559, 96
    %v718 = vpop.permute.xlu0 %717
    %v720 = vsel %vm224, %v715, 0
    %722 = vmatprep.subr.mxu0 0.0
    %723 = vmatpush1.msra.mxu0 0.0
    %724 = vmatprep.subr.mxu0 0.0
    %725 = vmatpush1.msra.mxu0 0.0
    %726 = vmatprep.subr.mxu0 0.0
    %727 = vmatpush1.msra.mxu0 0.0
    %728 = vmatprep.subr.mxu0 0.0
    %729 = vmatpush1.msra.mxu0 0.0
    %730 = vmatprep.subr.mxu0 0.0
    %731 = vmatpush1.msra.mxu0 0.0
    %732 = vmatprep.subr.mxu0 0.0
    %733 = vmatpush1.msra.mxu0 0.0
    %734 = vmatprep.subr.mxu0 0.0
    %735 = vmatpush1.msra.mxu0 0.0
    %736 = vmatprep.subr.mxu0 0.0
    %737 = vmatpush1.msra.mxu0 0.0
    %738 = vmatprep.subr.mxu0 0.0
    %739 = vmatpush1.msra.mxu0 0.0
    %740 = vmatprep.subr.mxu0 0.0
    %741 = vmatpush1.msra.mxu0 0.0
    %742 = vmatprep.subr.mxu0 0.0
    %743 = vmatpush1.msra.mxu0 0.0
    %744 = vmatprep.subr.mxu0 0.0
    %745 = vmatpush1.msra.mxu0 0.0
    %746 = vmatprep.subr.mxu0 0.0
    %747 = vmatpush1.msra.mxu0 %v188
    %748 = vmatprep.subr.mxu0 0.0
    %749 = vmatpush1.msra.mxu0 %v187
    %750 = vmatprep.subr.mxu0 0.0
    %751 = vmatpush1.msra.mxu0 %v186
    %752 = vmatprep.subr.mxu0 0.0
    %753 = vmatpush1.msra.mxu0 %v185
    %754 = vmatprep.subr.mxu0 0.0
    %755 = vmatpush2.msra.mxu0 0.0
    %756 = vmatprep.subr.mxu0 0.0
    %757 = vmatpush2.msra.mxu0 0.0
    %758 = vmatprep.subr.mxu0 0.0
    %759 = vmatpush2.msra.mxu0 0.0
    %760 = vmatprep.subr.mxu0 0.0
    %761 = vmatpush2.msra.mxu0 0.0
    %762 = vmatprep.subr.mxu0 0.0
    %763 = vmatpush2.msra.mxu0 0.0
    %764 = vmatprep.subr.mxu0 0.0
    %765 = vmatpush2.msra.mxu0 0.0
    %766 = vmatprep.subr.mxu0 0.0
    %767 = vmatpush2.msra.mxu0 0.0
    %768 = vmatprep.subr.mxu0 0.0
    %769 = vmatpush2.msra.mxu0 0.0
    %770 = vmatprep.subr.mxu0 0.0
    %771 = vmatpush2.msra.mxu0 0.0
    %772 = vmatprep.subr.mxu0 0.0
    %773 = vmatpush2.msra.mxu0 0.0
    %774 = vmatprep.subr.mxu0 0.0
    %775 = vmatpush2.msra.mxu0 0.0
    %776 = vmatprep.subr.mxu0 0.0
    %777 = vmatpush2.msra.mxu0 0.0
    %778 = vmatprep.subr.mxu0 0.0
    %779 = vmatpush2.msra.mxu0 0.0
    %780 = vmatprep.subr.mxu0 0.0
    %781 = vmatpush2.msra.mxu0 0.0
    %782 = vmatprep.subr.mxu0 0.0
    %783 = vmatpush2.msra.mxu0 0.0
    %784 = vmatprep.subr.mxu0 0.0
    %785 = vmatpush2.msra.mxu0 0.0
    %786 = vmatprep.mubr.f32.mxu0 0.0
    %787 = vmatmul.mubr.f32.gmra.mxu0 %v720
    %v788 = vpop.f32.mrf.mxu0
    %v789 = vadd.f32 %v718, %v788
    %v790 = vpop.f32.mrf.mxu0
    %791 = vdwg.mxu0
    %v792 = vadd.f32 %v789, %v212
    %v793 = vtanh.pop %v792
    %v794 = vlaneseq
    %v795 = vshrl.u32 %v794, 7
    %v796 = vsub.s32 %v307, %v795
    %v797 = vrot.slane %v690, %v796
    %v798 = vlaneseq
    %v799 = vshrl.u32 %v798, 7
    %v800 = vsub.s32 %v307, %v799
    %v801 = vrot.slane %v695, %v800
    %v802 = vsel %vm627, %v801, %v797
    %v804 = vsel %vm630, %v802, -inf
    %805 = vmax.xlane.f32.xlu0 %v804
    %v806 = vpop.xlane.xlu0 %805
    %v808 = vlaneseq
    %v809 = vshrl.u32 %v808, 7
    %v810 = vsub.s32 0, %v809
    %v811 = vrot.slane %v806, %v810
    %v812 = vlaneseq
    %v813 = vshrl.u32 %v812, 7
    %v814 = vsub.s32 1, %v813
    %v815 = vrot.slane %v806, %v814
    %vm818 = vcmp.eq.f32.partialorder %v685, %v811
    %vm819 = vcmp.eq.f32.partialorder %v686, %v815
    %821 = vbcast.lane.b32.xlu0 %v307, 256
    %v822 = vpop.permute.xlu0 %821
    %v823 = vsel %vm818, %v822, 8
    %v824 = vsel %vm819, %v822, 8
    %825 = vset.pattern.permute.xlu0 0
    %826 = vperm.xlu0 %825, %v823
    %v827 = vpop.permute.xlu0 %826
    %828 = vset.pattern.permute.xlu0 0
    %829 = vperm.xlu0 %828, %v824
    %v830 = vpop.permute.xlu0 %829
    %v831 = vlaneseq
    %v832 = vshrl.u32 %v831, 7
    %v833 = vsub.s32 %v307, %v832
    %v834 = vrot.slane %v827, %v833
    %v835 = vlaneseq
    %v836 = vshrl.u32 %v835, 7
    %v837 = vsub.s32 %v307, %v836
    %v838 = vrot.slane %v830, %v837
    %v839 = vsel %vm627, %v838, %v834
    %v840 = vsel %vm630, %v839, 2147483647
    %v841 = vand.u32 %v840, 65535
    %v842 = vshra.s32 %v840, 16
    %v843 = vcvt.s32.f32 %v841
    %v844 = vcvt.s32.f32 %v842
    %845 = vmin.xlane.f32.xlu0 %v844
    %v846 = vpop.xlane.xlu0 %845
    %vm847 = vcmp.eq.f32.partialorder %v844, %v846
    %v848 = vsel %vm847, %v843, inf
    %849 = vmin.xlane.f32.xlu0 %v848
    %v850 = vpop.xlane.xlu0 %849
    %v851 = vcvt.f32.s32 %v850
    %v852 = vcvt.f32.s32 %v846
    %v853 = vshll.u32 %v852, 16
    %v854 = vadd.s32 %v853, %v851
    %vm855 = vcmp.eq.s32.totalorder %v307, %v854
    %v856 = vsel %vm855, 0.0, 1.0
    %v857 = vsel %vm855, 1, 0
    %v858 = vcvt.s32.f32 %v857
    %v859 = vlaneseq
    %v860 = vshrl.u32 %v859, 7
    %v861 = vsub.s32 0, %v860
    %v862 = vrot.slane %v858, %v861
    %864 = vbcast.lane.b32.xlu0 %v862, 256
    %v865 = vpop.permute.xlu0 %864
    %v866 = vlaneseq
    %v867 = vshrl.u32 %v866, 7
    %v868 = vsub.s32 1, %v867
    %v869 = vrot.slane %v858, %v868
    %871 = vbcast.lane.b32.xlu0 %v869, 256
    %v872 = vpop.permute.xlu0 %871
    %v873 = vmul.f32 %v865, %v173
    %v874 = vmul.f32 %v872, %v174
    %v875 = vsel %vm384, %v873, 0.0
    %v876 = vrot.slane %v875, 4
    %v877 = vadd.f32 %v875, %v876
    %v878 = vrot.slane %v877, 2
    %v879 = vadd.f32 %v877, %v878
    %v880 = vrot.slane %v879, 1
    %v881 = vadd.f32 %v879, %v880
    %v882 = vsel %vm384, %v874, 0.0
    %v883 = vrot.slane %v882, 4
    %v884 = vadd.f32 %v882, %v883
    %v885 = vrot.slane %v884, 2
    %v886 = vadd.f32 %v884, %v885
    %v887 = vrot.slane %v886, 1
    %v888 = vadd.f32 %v886, %v887
    %vm891 = vcmask 57344
    %892 = vst.msk [vmem:[#allocation17] sm:$0x1] %vm891, %v797
    %893 = vst.msk [vmem:[#allocation17 + $0x8] sm:$0x1] %vm891, %v801
    %vm894 = vcmask 1024
    %895 = vst.msk [vmem:[#allocation18] sm:$0x3] %vm894, %v854
    %v897 = vsel %vm224, %v793, 0
    %899 = vmatprep.subr.mxu0 0.0
    %900 = vmatpush1.msra.mxu0 0.0
    %901 = vmatprep.subr.mxu0 0.0
    %902 = vmatpush1.msra.mxu0 0.0
    %903 = vmatprep.subr.mxu0 0.0
    %904 = vmatpush1.msra.mxu0 0.0
    %905 = vmatprep.subr.mxu0 0.0
    %906 = vmatpush1.msra.mxu0 0.0
    %907 = vmatprep.subr.mxu0 0.0
    %908 = vmatpush1.msra.mxu0 0.0
    %909 = vmatprep.subr.mxu0 0.0
    %910 = vmatpush1.msra.mxu0 0.0
    %911 = vmatprep.subr.mxu0 0.0
    %912 = vmatpush1.msra.mxu0 0.0
    %913 = vmatprep.subr.mxu0 0.0
    %914 = vmatpush1.msra.mxu0 0.0
    %915 = vmatprep.subr.mxu0 0.0
    %916 = vmatpush1.msra.mxu0 0.0
    %917 = vmatprep.subr.mxu0 0.0
    %918 = vmatpush1.msra.mxu0 0.0
    %919 = vmatprep.subr.mxu0 0.0
    %920 = vmatpush1.msra.mxu0 0.0
    %921 = vmatprep.subr.mxu0 0.0
    %922 = vmatpush1.msra.mxu0 0.0
    %923 = vmatprep.subr.mxu0 0.0
    %924 = vmatpush1.msra.mxu0 %v180
    %925 = vmatprep.subr.mxu0 0.0
    %926 = vmatpush1.msra.mxu0 %v179
    %927 = vmatprep.subr.mxu0 0.0
    %928 = vmatpush1.msra.mxu0 %v178
    %929 = vmatprep.subr.mxu0 0.0
    %930 = vmatpush1.msra.mxu0 %v177
    %931 = vmatprep.subr.mxu0 0.0
    %932 = vmatpush2.msra.mxu0 0.0
    %933 = vmatprep.subr.mxu0 0.0
    %934 = vmatpush2.msra.mxu0 0.0
    %935 = vmatprep.subr.mxu0 0.0
    %936 = vmatpush2.msra.mxu0 0.0
    %937 = vmatprep.subr.mxu0 0.0
    %938 = vmatpush2.msra.mxu0 0.0
    %939 = vmatprep.subr.mxu0 0.0
    %940 = vmatpush2.msra.mxu0 0.0
    %941 = vmatprep.subr.mxu0 0.0
    %942 = vmatpush2.msra.mxu0 0.0
    %943 = vmatprep.subr.mxu0 0.0
    %944 = vmatpush2.msra.mxu0 0.0
    %945 = vmatprep.subr.mxu0 0.0
    %946 = vmatpush2.msra.mxu0 0.0
    %947 = vmatprep.subr.mxu0 0.0
    %948 = vmatpush2.msra.mxu0 0.0
    %949 = vmatprep.subr.mxu0 0.0
    %950 = vmatpush2.msra.mxu0 0.0
    %951 = vmatprep.subr.mxu0 0.0
    %952 = vmatpush2.msra.mxu0 0.0
    %953 = vmatprep.subr.mxu0 0.0
    %954 = vmatpush2.msra.mxu0 0.0
    %955 = vmatprep.subr.mxu0 0.0
    %956 = vmatpush2.msra.mxu0 0.0
    %957 = vmatprep.subr.mxu0 0.0
    %958 = vmatpush2.msra.mxu0 0.0
    %959 = vmatprep.subr.mxu0 0.0
    %960 = vmatpush2.msra.mxu0 0.0
    %961 = vmatprep.subr.mxu0 0.0
    %962 = vmatpush2.msra.mxu0 0.0
    %963 = vmatprep.mubr.f32.mxu0 0.0
    %964 = vmatmul.mubr.f32.gmra.mxu0 %v897
    %v965 = vpop.f32.mrf.mxu0
    %v966 = vadd.f32 0.0, %v965
    %v967 = vpop.f32.mrf.mxu0
    %968 = vdwg.mxu0
    %v971 = vsel %vm627, %v888, %v881
    %v972 = vsel %vm384, %v971, 0
    %974 = vmatprep.subr.mxu0 0.0
    %975 = vmatpush1.msra.mxu0 0.0
    %976 = vmatprep.subr.mxu0 0.0
    %977 = vmatpush1.msra.mxu0 0.0
    %978 = vmatprep.subr.mxu0 0.0
    %979 = vmatpush1.msra.mxu0 0.0
    %980 = vmatprep.subr.mxu0 0.0
    %981 = vmatpush1.msra.mxu0 0.0
    %982 = vmatprep.subr.mxu0 0.0
    %983 = vmatpush1.msra.mxu0 0.0
    %984 = vmatprep.subr.mxu0 0.0
    %985 = vmatpush1.msra.mxu0 0.0
    %986 = vmatprep.subr.mxu0 0.0
    %987 = vmatpush1.msra.mxu0 0.0
    %988 = vmatprep.subr.mxu0 0.0
    %989 = vmatpush1.msra.mxu0 0.0
    %990 = vmatprep.subr.mxu0 0.0
    %991 = vmatpush1.msra.mxu0 0.0
    %992 = vmatprep.subr.mxu0 0.0
    %993 = vmatpush1.msra.mxu0 0.0
    %994 = vmatprep.subr.mxu0 0.0
    %995 = vmatpush1.msra.mxu0 0.0
    %996 = vmatprep.subr.mxu0 0.0
    %997 = vmatpush1.msra.mxu0 0.0
    %998 = vmatprep.subr.mxu0 0.0
    %999 = vmatpush1.msra.mxu0 0.0
    %1000 = vmatprep.subr.mxu0 0.0
    %1001 = vmatpush1.msra.mxu0 0.0
    %1002 = vmatprep.subr.mxu0 0.0
    %1003 = vmatpush1.msra.mxu0 %v176
    %1004 = vmatprep.subr.mxu0 0.0
    %1005 = vmatpush1.msra.mxu0 %v175
    %1006 = vmatprep.subr.mxu0 0.0
    %1007 = vmatpush2.msra.mxu0 0.0
    %1008 = vmatprep.subr.mxu0 0.0
    %1009 = vmatpush2.msra.mxu0 0.0
    %1010 = vmatprep.subr.mxu0 0.0
    %1011 = vmatpush2.msra.mxu0 0.0
    %1012 = vmatprep.subr.mxu0 0.0
    %1013 = vmatpush2.msra.mxu0 0.0
    %1014 = vmatprep.subr.mxu0 0.0
    %1015 = vmatpush2.msra.mxu0 0.0
    %1016 = vmatprep.subr.mxu0 0.0
    %1017 = vmatpush2.msra.mxu0 0.0
    %1018 = vmatprep.subr.mxu0 0.0
    %1019 = vmatpush2.msra.mxu0 0.0
    %1020 = vmatprep.subr.mxu0 0.0
    %1021 = vmatpush2.msra.mxu0 0.0
    %1022 = vmatprep.subr.mxu0 0.0
    %1023 = vmatpush2.msra.mxu0 0.0
    %1024 = vmatprep.subr.mxu0 0.0
    %1025 = vmatpush2.msra.mxu0 0.0
    %1026 = vmatprep.subr.mxu0 0.0
    %1027 = vmatpush2.msra.mxu0 0.0
    %1028 = vmatprep.subr.mxu0 0.0
    %1029 = vmatpush2.msra.mxu0 0.0
    %1030 = vmatprep.subr.mxu0 0.0
    %1031 = vmatpush2.msra.mxu0 0.0
    %1032 = vmatprep.subr.mxu0 0.0
    %1033 = vmatpush2.msra.mxu0 0.0
    %1034 = vmatprep.subr.mxu0 0.0
    %1035 = vmatpush2.msra.mxu0 0.0
    %1036 = vmatprep.subr.mxu0 0.0
    %1037 = vmatpush2.msra.mxu0 0.0
    %1038 = vmatprep.mubr.f32.mxu0 0.0
    %1039 = vmatmul.mubr.f32.gmra.mxu0 %v972
    %v1040 = vpop.f32.mrf.mxu0
    %v1041 = vadd.f32 %v966, %v1040
    %v1042 = vpop.f32.mrf.mxu0
    %1043 = vdwg.mxu0
    %v1044 = vadd.f32 %v1041, %v198
    %v1045 = vxor.u32 %v1044, 2147483648
    %v1046 = vmul.f32 %v1045, 1.442695
    %v1047 = vpow.pop %v1046
    %v1048 = vadd.f32 %v1047, 1.0
    %v1049 = vrcp.pop %v1048
    %v1050 = vmul.f32 1.0, %v1049
    %v1051 = vtanh.pop %v1044
    %v1052 = vmul.f32 %v1050, %v480
    %1054 = vrot.lane.b32.xlu0 %v1051, 64
    %v1055 = vpop.permute.xlu0 %1054
    %v1057 = vmul.f32 %v1050, %v1055
    %1059 = vrot.lane.b32.xlu0 %v1057, 32
    %v1060 = vpop.permute.xlu0 %1059
    %v1062 = vadd.f32 %v1052, %v1060
    %v1063 = vtanh.pop %v1062
    %1065 = vrot.lane.b32.xlu0 %v1063, 64
    %v1066 = vpop.permute.xlu0 %1065
    %v1068 = vmul.f32 %v1050, %v1066
    %1070 = vrot.lane.b32.xlu0 %v1068, 32
    %v1071 = vpop.permute.xlu0 %1070
    %v1072 = vsel %vm224, %v1071, 0
    %1074 = vmatprep.subr.mxu0 0.0
    %1075 = vmatpush1.msra.mxu0 0.0
    %1076 = vmatprep.subr.mxu0 0.0
    %1077 = vmatpush1.msra.mxu0 0.0
    %1078 = vmatprep.subr.mxu0 0.0
    %1079 = vmatpush1.msra.mxu0 0.0
    %1080 = vmatprep.subr.mxu0 0.0
    %1081 = vmatpush1.msra.mxu0 0.0
    %1082 = vmatprep.subr.mxu0 0.0
    %1083 = vmatpush1.msra.mxu0 0.0
    %1084 = vmatprep.subr.mxu0 0.0
    %1085 = vmatpush1.msra.mxu0 0.0
    %1086 = vmatprep.subr.mxu0 0.0
    %1087 = vmatpush1.msra.mxu0 0.0
    %1088 = vmatprep.subr.mxu0 0.0
    %1089 = vmatpush1.msra.mxu0 0.0
    %1090 = vmatprep.subr.mxu0 0.0
    %1091 = vmatpush1.msra.mxu0 0.0
    %1092 = vmatprep.subr.mxu0 0.0
    %1093 = vmatpush1.msra.mxu0 0.0
    %1094 = vmatprep.subr.mxu0 0.0
    %1095 = vmatpush1.msra.mxu0 0.0
    %1096 = vmatprep.subr.mxu0 0.0
    %1097 = vmatpush1.msra.mxu0 0.0
    %1098 = vmatprep.subr.mxu0 0.0
    %1099 = vmatpush1.msra.mxu0 %v184
    %1100 = vmatprep.subr.mxu0 0.0
    %1101 = vmatpush1.msra.mxu0 %v183
    %1102 = vmatprep.subr.mxu0 0.0
    %1103 = vmatpush1.msra.mxu0 %v182
    %1104 = vmatprep.subr.mxu0 0.0
    %1105 = vmatpush1.msra.mxu0 %v181
    %1106 = vmatprep.subr.mxu0 0.0
    %1107 = vmatpush2.msra.mxu0 0.0
    %1108 = vmatprep.subr.mxu0 0.0
    %1109 = vmatpush2.msra.mxu0 0.0
    %1110 = vmatprep.subr.mxu0 0.0
    %1111 = vmatpush2.msra.mxu0 0.0
    %1112 = vmatprep.subr.mxu0 0.0
    %1113 = vmatpush2.msra.mxu0 0.0
    %1114 = vmatprep.subr.mxu0 0.0
    %1115 = vmatpush2.msra.mxu0 0.0
    %1116 = vmatprep.subr.mxu0 0.0
    %1117 = vmatpush2.msra.mxu0 0.0
    %1118 = vmatprep.subr.mxu0 0.0
    %1119 = vmatpush2.msra.mxu0 0.0
    %1120 = vmatprep.subr.mxu0 0.0
    %1121 = vmatpush2.msra.mxu0 0.0
    %1122 = vmatprep.subr.mxu0 0.0
    %1123 = vmatpush2.msra.mxu0 0.0
    %1124 = vmatprep.subr.mxu0 0.0
    %1125 = vmatpush2.msra.mxu0 0.0
    %1126 = vmatprep.subr.mxu0 0.0
    %1127 = vmatpush2.msra.mxu0 0.0
    %1128 = vmatprep.subr.mxu0 0.0
    %1129 = vmatpush2.msra.mxu0 0.0
    %1130 = vmatprep.subr.mxu0 0.0
    %1131 = vmatpush2.msra.mxu0 0.0
    %1132 = vmatprep.subr.mxu0 0.0
    %1133 = vmatpush2.msra.mxu0 0.0
    %1134 = vmatprep.subr.mxu0 0.0
    %1135 = vmatpush2.msra.mxu0 0.0
    %1136 = vmatprep.subr.mxu0 0.0
    %1137 = vmatpush2.msra.mxu0 0.0
    %1138 = vmatprep.mubr.f32.mxu0 0.0
    %1139 = vmatmul.mubr.f32.gmra.mxu0 %v1072
    %v1140 = vpop.f32.mrf.mxu0
    %v1141 = vadd.f32 0.0, %v1140
    %v1142 = vpop.f32.mrf.mxu0
    %1143 = vdwg.mxu0
    %v1144 = vadd.f32 %v1141, %v205
    %v1147 = vunpack.c.l.s4 1966171168
    %v1148 = vunpack.c.0.s8 %v1147
    %v1149 = vlaneseq
    %v1150 = vshrl.u32 %v1149, 7
    %v1151 = vsub.s32 %v1148, %v1150
    %v1152 = vrot.slane %v1144, %v1151
    %v1153 = vcombine.high %v1152, %v1152
    %v1155 = vunpack.c.l.s4 1966171168
    %v1156 = vunpack.c.0.s8 %v1155
    %v1157 = vlaneseq
    %v1158 = vshrl.u32 %v1157, 7
    %v1159 = vsub.s32 %v1156, %v1158
    %v1160 = vrot.slane %v1152, %v1159
    %v1162 = vunpack.c.l.s4 1966171168
    %v1163 = vunpack.c.0.s8 %v1162
    %v1164 = vlaneseq
    %v1165 = vshrl.u32 %v1164, 7
    %v1166 = vsub.s32 %v1163, %v1165
    %v1167 = vrot.slane %v1153, %v1166
    %v1168 = vlaneseq
    %v1169 = vshrl.u32 %v1168, 7
    %v1170 = vsub.s32 0, %v1169
    %v1171 = vrot.slane %v1160, %v1170
    %v1172 = vlaneseq
    %v1173 = vshrl.u32 %v1172, 7
    %v1174 = vsub.s32 0, %v1173
    %v1175 = vrot.slane %v1167, %v1174
    %v1178 = vadd.f32 %v1171, %v298
    %v1179 = vadd.f32 %v1175, %v303
    %v1180 = vtanh.pop %v1178
    %v1181 = vtanh.pop %v1179
    %v1182 = vmul.f32 %v1180, %v604
    %v1183 = vmul.f32 %v1181, %v604
    %v1184 = vsel %vm224, %v1182, 0.0
    %1185 = vadd.xlane.f32.xlu0 %v1184
    %v1186 = vpop.xlane.xlu0 %1185
    %v1187 = vsel %vm224, %v1183, 0.0
    %1188 = vadd.xlane.f32.xlu0 %v1187
    %v1189 = vpop.xlane.xlu0 %1188
    %vm1190 = vcmp.eq.f32.partialorder %v856, 0.0
    %v1193 = vlaneseq
    %v1194 = vshrl.u32 %v1193, 7
    %v1195 = vsub.s32 %v307, %v1194
    %v1196 = vrot.slane %v1186, %v1195
    %v1197 = vlaneseq
    %v1198 = vshrl.u32 %v1197, 7
    %v1199 = vsub.s32 %v307, %v1198
    %v1200 = vrot.slane %v1189, %v1199
    %v1201 = vsel %vm627, %v1200, %v1196
    %v1203 = vsel %vm1190, -inf, %v1201
    %v1204 = vsel %vm630, %v1203, -inf
    %1205 = vmax.xlane.f32.xlu0 %v1204
    %v1206 = vpop.xlane.xlu0 %1205
    %v1207 = vsub.f32 %v1203, %v1206
    %v1208 = vmul.f32 %v1207, 1.442695
    %v1209 = vpow.pop %v1208
    %v1210 = vsel %vm630, %v1209, 0.0
    %1211 = vadd.xlane.f32.xlu0 %v1210
    %v1212 = vpop.xlane.xlu0 %1211
    %v1213 = vrcp.pop %v1212
    %v1214 = vmul.f32 1.0, %v1213
    %v1215 = vmul.f32 %v1209, %v1214
    %v1216 = vlaneseq
    %v1217 = vshrl.u32 %v1216, 7
    %v1218 = vsub.s32 0, %v1217
    %v1219 = vrot.slane %v1215, %v1218
    %1221 = vbcast.lane.b32.xlu0 %v1219, 256
    %v1222 = vpop.permute.xlu0 %1221
    %v1223 = vlaneseq
    %v1224 = vshrl.u32 %v1223, 7
    %v1225 = vsub.s32 1, %v1224
    %v1226 = vrot.slane %v1215, %v1225
    %1228 = vbcast.lane.b32.xlu0 %v1226, 256
    %v1229 = vpop.permute.xlu0 %1228
    %v1230 = vmul.f32 %v1222, %v298
    %v1231 = vmul.f32 %v1229, %v303
    %v1232 = vsel %vm224, %v1230, 0.0
    %v1233 = vrot.slane %v1232, 4
    %v1234 = vadd.f32 %v1232, %v1233
    %v1235 = vrot.slane %v1234, 2
    %v1236 = vadd.f32 %v1234, %v1235
    %v1237 = vrot.slane %v1236, 1
    %v1238 = vadd.f32 %v1236, %v1237
    %v1239 = vsel %vm224, %v1231, 0.0
    %v1240 = vrot.slane %v1239, 4
    %v1241 = vadd.f32 %v1239, %v1240
    %v1242 = vrot.slane %v1241, 2
    %v1243 = vadd.f32 %v1241, %v1242
    %v1244 = vrot.slane %v1243, 1
    %v1245 = vadd.f32 %v1243, %v1244
    %v1248 = vsel %vm627, %v1245, %v1238
    %1250 = vrot.lane.b32.xlu0 %v1141, 96
    %v1251 = vpop.permute.xlu0 %1250
    %v1253 = vsel %vm224, %v1248, 0
    %1255 = vmatprep.subr.mxu0 0.0
    %1256 = vmatpush1.msra.mxu0 0.0
    %1257 = vmatprep.subr.mxu0 0.0
    %1258 = vmatpush1.msra.mxu0 0.0
    %1259 = vmatprep.subr.mxu0 0.0
    %1260 = vmatpush1.msra.mxu0 0.0
    %1261 = vmatprep.subr.mxu0 0.0
    %1262 = vmatpush1.msra.mxu0 0.0
    %1263 = vmatprep.subr.mxu0 0.0
    %1264 = vmatpush1.msra.mxu0 0.0
    %1265 = vmatprep.subr.mxu0 0.0
    %1266 = vmatpush1.msra.mxu0 0.0
    %1267 = vmatprep.subr.mxu0 0.0
    %1268 = vmatpush1.msra.mxu0 0.0
    %1269 = vmatprep.subr.mxu0 0.0
    %1270 = vmatpush1.msra.mxu0 0.0
    %1271 = vmatprep.subr.mxu0 0.0
    %1272 = vmatpush1.msra.mxu0 0.0
    %1273 = vmatprep.subr.mxu0 0.0
    %1274 = vmatpush1.msra.mxu0 0.0
    %1275 = vmatprep.subr.mxu0 0.0
    %1276 = vmatpush1.msra.mxu0 0.0
    %1277 = vmatprep.subr.mxu0 0.0
    %1278 = vmatpush1.msra.mxu0 0.0
    %1279 = vmatprep.subr.mxu0 0.0
    %1280 = vmatpush1.msra.mxu0 %v188
    %1281 = vmatprep.subr.mxu0 0.0
    %1282 = vmatpush1.msra.mxu0 %v187
    %1283 = vmatprep.subr.mxu0 0.0
    %1284 = vmatpush1.msra.mxu0 %v186
    %1285 = vmatprep.subr.mxu0 0.0
    %1286 = vmatpush1.msra.mxu0 %v185
    %1287 = vmatprep.subr.mxu0 0.0
    %1288 = vmatpush2.msra.mxu0 0.0
    %1289 = vmatprep.subr.mxu0 0.0
    %1290 = vmatpush2.msra.mxu0 0.0
    %1291 = vmatprep.subr.mxu0 0.0
    %1292 = vmatpush2.msra.mxu0 0.0
    %1293 = vmatprep.subr.mxu0 0.0
    %1294 = vmatpush2.msra.mxu0 0.0
    %1295 = vmatprep.subr.mxu0 0.0
    %1296 = vmatpush2.msra.mxu0 0.0
    %1297 = vmatprep.subr.mxu0 0.0
    %1298 = vmatpush2.msra.mxu0 0.0
    %1299 = vmatprep.subr.mxu0 0.0
    %1300 = vmatpush2.msra.mxu0 0.0
    %1301 = vmatprep.subr.mxu0 0.0
    %1302 = vmatpush2.msra.mxu0 0.0
    %1303 = vmatprep.subr.mxu0 0.0
    %1304 = vmatpush2.msra.mxu0 0.0
    %1305 = vmatprep.subr.mxu0 0.0
    %1306 = vmatpush2.msra.mxu0 0.0
    %1307 = vmatprep.subr.mxu0 0.0
    %1308 = vmatpush2.msra.mxu0 0.0
    %1309 = vmatprep.subr.mxu0 0.0
    %1310 = vmatpush2.msra.mxu0 0.0
    %1311 = vmatprep.subr.mxu0 0.0
    %1312 = vmatpush2.msra.mxu0 0.0
    %1313 = vmatprep.subr.mxu0 0.0
    %1314 = vmatpush2.msra.mxu0 0.0
    %1315 = vmatprep.subr.mxu0 0.0
    %1316 = vmatpush2.msra.mxu0 0.0
    %1317 = vmatprep.subr.mxu0 0.0
    %1318 = vmatpush2.msra.mxu0 0.0
    %1319 = vmatprep.mubr.f32.mxu0 0.0
    %1320 = vmatmul.mubr.f32.gmra.mxu0 %v1253
    %v1321 = vpop.f32.mrf.mxu0
    %v1322 = vadd.f32 %v1251, %v1321
    %v1323 = vpop.f32.mrf.mxu0
    %1324 = vdwg.mxu0
    %v1325 = vadd.f32 %v1322, %v212
    %v1326 = vtanh.pop %v1325
    %v1327 = vsel %vm630, %v1215, -inf
    %1328 = vmax.xlane.f32.xlu0 %v1327
    %v1329 = vpop.xlane.xlu0 %1328
    %vm1330 = vcmp.eq.f32.partialorder %v1215, %v1329
    %v1331 = vsel %vm1330, %v307, 8
    %v1332 = vsel %vm630, %v1331, 2147483647
    %v1333 = vand.u32 %v1332, 65535
    %v1334 = vshra.s32 %v1332, 16
    %v1335 = vcvt.s32.f32 %v1333
    %v1336 = vcvt.s32.f32 %v1334
    %1337 = vmin.xlane.f32.xlu0 %v1336
    %v1338 = vpop.xlane.xlu0 %1337
    %vm1339 = vcmp.eq.f32.partialorder %v1336, %v1338
    %v1340 = vsel %vm1339, %v1335, inf
    %1341 = vmin.xlane.f32.xlu0 %v1340
    %v1342 = vpop.xlane.xlu0 %1341
    %v1343 = vcvt.f32.s32 %v1342
    %v1344 = vcvt.f32.s32 %v1338
    %v1345 = vshll.u32 %v1344, 16
    %v1346 = vadd.s32 %v1345, %v1343
    %vm1347 = vcmp.eq.s32.totalorder %v307, %v1346
    %v1348 = vsel %vm1347, 0.0, %v856
    %v1349 = vsel %vm1347, 1, 0
    %v1350 = vcvt.s32.f32 %v1349
    %v1351 = vlaneseq
    %v1352 = vshrl.u32 %v1351, 7
    %v1353 = vsub.s32 0, %v1352
    %v1354 = vrot.slane %v1350, %v1353
    %1356 = vbcast.lane.b32.xlu0 %v1354, 256
    %v1357 = vpop.permute.xlu0 %1356
    %v1358 = vlaneseq
    %v1359 = vshrl.u32 %v1358, 7
    %v1360 = vsub.s32 1, %v1359
    %v1361 = vrot.slane %v1350, %v1360
    %1363 = vbcast.lane.b32.xlu0 %v1361, 256
    %v1364 = vpop.permute.xlu0 %1363
    %v1365 = vmul.f32 %v1357, %v173
    %v1366 = vmul.f32 %v1364, %v174
    %v1367 = vsel %vm384, %v1365, 0.0
    %v1368 = vrot.slane %v1367, 4
    %v1369 = vadd.f32 %v1367, %v1368
    %v1370 = vrot.slane %v1369, 2
    %v1371 = vadd.f32 %v1369, %v1370
    %v1372 = vrot.slane %v1371, 1
    %v1373 = vadd.f32 %v1371, %v1372
    %v1374 = vsel %vm384, %v1366, 0.0
    %v1375 = vrot.slane %v1374, 4
    %v1376 = vadd.f32 %v1374, %v1375
    %v1377 = vrot.slane %v1376, 2
    %v1378 = vadd.f32 %v1376, %v1377
    %v1379 = vrot.slane %v1378, 1
    %v1380 = vadd.f32 %v1378, %v1379
    %v1383 = vunpack.c.l.s4 1966171168
    %v1384 = vunpack.c.0.s8 %v1383
    %v1385 = vlaneseq
    %v1386 = vshrl.u32 %v1385, 7
    %v1387 = vsub.s32 %v1384, %v1386
    %v1388 = vrot.slane %v1215, %v1387
    %v1389 = vcombine.high %v1388, %v1388
    %v1391 = vunpack.c.l.s4 1966171168
    %v1392 = vunpack.c.0.s8 %v1391
    %v1393 = vlaneseq
    %v1394 = vshrl.u32 %v1393, 7
    %v1395 = vsub.s32 %v1392, %v1394
    %v1396 = vrot.slane %v1388, %v1395
    %v1398 = vunpack.c.l.s4 1966171168
    %v1399 = vunpack.c.0.s8 %v1398
    %v1400 = vlaneseq
    %v1401 = vshrl.u32 %v1400, 7
    %v1402 = vsub.s32 %v1399, %v1401
    %v1403 = vrot.slane %v1389, %v1402
    %1406 = vst.msk [vmem:[#allocation17 + $0x1] sm:$0x1] %vm891, %v1396
    %1407 = vst.msk [vmem:[#allocation17 + $0x9] sm:$0x1] %vm891, %v1403
    %vm1408 = vcmask 9224
    %1409 = vst.msk [vmem:[#allocation18] sm:$0x3] %vm1408, %v1346
    %v1411 = vsel %vm224, %v1326, 0
    %1413 = vmatprep.subr.mxu0 0.0
    %1414 = vmatpush1.msra.mxu0 0.0
    %1415 = vmatprep.subr.mxu0 0.0
    %1416 = vmatpush1.msra.mxu0 0.0
    %1417 = vmatprep.subr.mxu0 0.0
    %1418 = vmatpush1.msra.mxu0 0.0
    %1419 = vmatprep.subr.mxu0 0.0
    %1420 = vmatpush1.msra.mxu0 0.0
    %1421 = vmatprep.subr.mxu0 0.0
    %1422 = vmatpush1.msra.mxu0 0.0
    %1423 = vmatprep.subr.mxu0 0.0
    %1424 = vmatpush1.msra.mxu0 0.0
    %1425 = vmatprep.subr.mxu0 0.0
    %1426 = vmatpush1.msra.mxu0 0.0
    %1427 = vmatprep.subr.mxu0 0.0
    %1428 = vmatpush1.msra.mxu0 0.0
    %1429 = vmatprep.subr.mxu0 0.0
    %1430 = vmatpush1.msra.mxu0 0.0
    %1431 = vmatprep.subr.mxu0 0.0
    %1432 = vmatpush1.msra.mxu0 0.0
    %1433 = vmatprep.subr.mxu0 0.0
    %1434 = vmatpush1.msra.mxu0 0.0
    %1435 = vmatprep.subr.mxu0 0.0
    %1436 = vmatpush1.msra.mxu0 0.0
    %1437 = vmatprep.subr.mxu0 0.0
    %1438 = vmatpush1.msra.mxu0 %v180
    %1439 = vmatprep.subr.mxu0 0.0
    %1440 = vmatpush1.msra.mxu0 %v179
    %1441 = vmatprep.subr.mxu0 0.0
    %1442 = vmatpush1.msra.mxu0 %v178
    %1443 = vmatprep.subr.mxu0 0.0
    %1444 = vmatpush1.msra.mxu0 %v177
    %1445 = vmatprep.subr.mxu0 0.0
    %1446 = vmatpush2.msra.mxu0 0.0
    %1447 = vmatprep.subr.mxu0 0.0
    %1448 = vmatpush2.msra.mxu0 0.0
    %1449 = vmatprep.subr.mxu0 0.0
    %1450 = vmatpush2.msra.mxu0 0.0
    %1451 = vmatprep.subr.mxu0 0.0
    %1452 = vmatpush2.msra.mxu0 0.0
    %1453 = vmatprep.subr.mxu0 0.0
    %1454 = vmatpush2.msra.mxu0 0.0
    %1455 = vmatprep.subr.mxu0 0.0
    %1456 = vmatpush2.msra.mxu0 0.0
    %1457 = vmatprep.subr.mxu0 0.0
    %1458 = vmatpush2.msra.mxu0 0.0
    %1459 = vmatprep.subr.mxu0 0.0
    %1460 = vmatpush2.msra.mxu0 0.0
    %1461 = vmatprep.subr.mxu0 0.0
    %1462 = vmatpush2.msra.mxu0 0.0
    %1463 = vmatprep.subr.mxu0 0.0
    %1464 = vmatpush2.msra.mxu0 0.0
    %1465 = vmatprep.subr.mxu0 0.0
    %1466 = vmatpush2.msra.mxu0 0.0
    %1467 = vmatprep.subr.mxu0 0.0
    %1468 = vmatpush2.msra.mxu0 0.0
    %1469 = vmatprep.subr.mxu0 0.0
    %1470 = vmatpush2.msra.mxu0 0.0
    %1471 = vmatprep.subr.mxu0 0.0
    %1472 = vmatpush2.msra.mxu0 0.0
    %1473 = vmatprep.subr.mxu0 0.0
    %1474 = vmatpush2.msra.mxu0 0.0
    %1475 = vmatprep.subr.mxu0 0.0
    %1476 = vmatpush2.msra.mxu0 0.0
    %1477 = vmatprep.mubr.f32.mxu0 0.0
    %1478 = vmatmul.mubr.f32.gmra.mxu0 %v1411
    %v1479 = vpop.f32.mrf.mxu0
    %v1480 = vadd.f32 0.0, %v1479
    %v1481 = vpop.f32.mrf.mxu0
    %1482 = vdwg.mxu0
    %v1485 = vsel %vm627, %v1380, %v1373
    %v1486 = vsel %vm384, %v1485, 0
    %1488 = vmatprep.subr.mxu0 0.0
    %1489 = vmatpush1.msra.mxu0 0.0
    %1490 = vmatprep.subr.mxu0 0.0
    %1491 = vmatpush1.msra.mxu0 0.0
    %1492 = vmatprep.subr.mxu0 0.0
    %1493 = vmatpush1.msra.mxu0 0.0
    %1494 = vmatprep.subr.mxu0 0.0
    %1495 = vmatpush1.msra.mxu0 0.0
    %1496 = vmatprep.subr.mxu0 0.0
    %1497 = vmatpush1.msra.mxu0 0.0
    %1498 = vmatprep.subr.mxu0 0.0
    %1499 = vmatpush1.msra.mxu0 0.0
    %1500 = vmatprep.subr.mxu0 0.0
    %1501 = vmatpush1.msra.mxu0 0.0
    %1502 = vmatprep.subr.mxu0 0.0
    %1503 = vmatpush1.msra.mxu0 0.0
    %1504 = vmatprep.subr.mxu0 0.0
    %1505 = vmatpush1.msra.mxu0 0.0
    %1506 = vmatprep.subr.mxu0 0.0
    %1507 = vmatpush1.msra.mxu0 0.0
    %1508 = vmatprep.subr.mxu0 0.0
    %1509 = vmatpush1.msra.mxu0 0.0
    %1510 = vmatprep.subr.mxu0 0.0
    %1511 = vmatpush1.msra.mxu0 0.0
    %1512 = vmatprep.subr.mxu0 0.0
    %1513 = vmatpush1.msra.mxu0 0.0
    %1514 = vmatprep.subr.mxu0 0.0
    %1515 = vmatpush1.msra.mxu0 0.0
    %1516 = vmatprep.subr.mxu0 0.0
    %1517 = vmatpush1.msra.mxu0 %v176
    %1518 = vmatprep.subr.mxu0 0.0
    %1519 = vmatpush1.msra.mxu0 %v175
    %1520 = vmatprep.subr.mxu0 0.0
    %1521 = vmatpush2.msra.mxu0 0.0
    %1522 = vmatprep.subr.mxu0 0.0
    %1523 = vmatpush2.msra.mxu0 0.0
    %1524 = vmatprep.subr.mxu0 0.0
    %1525 = vmatpush2.msra.mxu0 0.0
    %1526 = vmatprep.subr.mxu0 0.0
    %1527 = vmatpush2.msra.mxu0 0.0
    %1528 = vmatprep.subr.mxu0 0.0
    %1529 = vmatpush2.msra.mxu0 0.0
    %1530 = vmatprep.subr.mxu0 0.0
    %1531 = vmatpush2.msra.mxu0 0.0
    %1532 = vmatprep.subr.mxu0 0.0
    %1533 = vmatpush2.msra.mxu0 0.0
    %1534 = vmatprep.subr.mxu0 0.0
    %1535 = vmatpush2.msra.mxu0 0.0
    %1536 = vmatprep.subr.mxu0 0.0
    %1537 = vmatpush2.msra.mxu0 0.0
    %1538 = vmatprep.subr.mxu0 0.0
    %1539 = vmatpush2.msra.mxu0 0.0
    %1540 = vmatprep.subr.mxu0 0.0
    %1541 = vmatpush2.msra.mxu0 0.0
    %1542 = vmatprep.subr.mxu0 0.0
    %1543 = vmatpush2.msra.mxu0 0.0
    %1544 = vmatprep.subr.mxu0 0.0
    %1545 = vmatpush2.msra.mxu0 0.0
    %1546 = vmatprep.subr.mxu0 0.0
    %1547 = vmatpush2.msra.mxu0 0.0
    %1548 = vmatprep.subr.mxu0 0.0
    %1549 = vmatpush2.msra.mxu0 0.0
    %1550 = vmatprep.subr.mxu0 0.0
    %1551 = vmatpush2.msra.mxu0 0.0
    %1552 = vmatprep.mubr.f32.mxu0 0.0
    %1553 = vmatmul.mubr.f32.gmra.mxu0 %v1486
    %v1554 = vpop.f32.mrf.mxu0
    %v1555 = vadd.f32 %v1480, %v1554
    %v1556 = vpop.f32.mrf.mxu0
    %1557 = vdwg.mxu0
    %v1558 = vadd.f32 %v1555, %v198
    %v1559 = vxor.u32 %v1558, 2147483648
    %v1560 = vmul.f32 %v1559, 1.442695
    %v1561 = vpow.pop %v1560
    %v1562 = vadd.f32 %v1561, 1.0
    %v1563 = vrcp.pop %v1562
    %v1564 = vmul.f32 1.0, %v1563
    %v1565 = vtanh.pop %v1558
    %v1566 = vmul.f32 %v1564, %v1062
    %1568 = vrot.lane.b32.xlu0 %v1565, 64
    %v1569 = vpop.permute.xlu0 %1568
    %v1571 = vmul.f32 %v1564, %v1569
    %1573 = vrot.lane.b32.xlu0 %v1571, 32
    %v1574 = vpop.permute.xlu0 %1573
    %v1576 = vadd.f32 %v1566, %v1574
    %v1577 = vtanh.pop %v1576
    %1579 = vrot.lane.b32.xlu0 %v1577, 64
    %v1580 = vpop.permute.xlu0 %1579
    %v1582 = vmul.f32 %v1564, %v1580
    %1584 = vrot.lane.b32.xlu0 %v1582, 32
    %v1585 = vpop.permute.xlu0 %1584
    %v1586 = vsel %vm224, %v1585, 0
    %1588 = vmatprep.subr.mxu0 0.0
    %1589 = vmatpush1.msra.mxu0 0.0
    %1590 = vmatprep.subr.mxu0 0.0
    %1591 = vmatpush1.msra.mxu0 0.0
    %1592 = vmatprep.subr.mxu0 0.0
    %1593 = vmatpush1.msra.mxu0 0.0
    %1594 = vmatprep.subr.mxu0 0.0
    %1595 = vmatpush1.msra.mxu0 0.0
    %1596 = vmatprep.subr.mxu0 0.0
    %1597 = vmatpush1.msra.mxu0 0.0
    %1598 = vmatprep.subr.mxu0 0.0
    %1599 = vmatpush1.msra.mxu0 0.0
    %1600 = vmatprep.subr.mxu0 0.0
    %1601 = vmatpush1.msra.mxu0 0.0
    %1602 = vmatprep.subr.mxu0 0.0
    %1603 = vmatpush1.msra.mxu0 0.0
    %1604 = vmatprep.subr.mxu0 0.0
    %1605 = vmatpush1.msra.mxu0 0.0
    %1606 = vmatprep.subr.mxu0 0.0
    %1607 = vmatpush1.msra.mxu0 0.0
    %1608 = vmatprep.subr.mxu0 0.0
    %1609 = vmatpush1.msra.mxu0 0.0
    %1610 = vmatprep.subr.mxu0 0.0
    %1611 = vmatpush1.msra.mxu0 0.0
    %1612 = vmatprep.subr.mxu0 0.0
    %1613 = vmatpush1.msra.mxu0 %v184
    %1614 = vmatprep.subr.mxu0 0.0
    %1615 = vmatpush1.msra.mxu0 %v183
    %1616 = vmatprep.subr.mxu0 0.0
    %1617 = vmatpush1.msra.mxu0 %v182
    %1618 = vmatprep.subr.mxu0 0.0
    %1619 = vmatpush1.msra.mxu0 %v181
    %1620 = vmatprep.subr.mxu0 0.0
    %1621 = vmatpush2.msra.mxu0 0.0
    %1622 = vmatprep.subr.mxu0 0.0
    %1623 = vmatpush2.msra.mxu0 0.0
    %1624 = vmatprep.subr.mxu0 0.0
    %1625 = vmatpush2.msra.mxu0 0.0
    %1626 = vmatprep.subr.mxu0 0.0
    %1627 = vmatpush2.msra.mxu0 0.0
    %1628 = vmatprep.subr.mxu0 0.0
    %1629 = vmatpush2.msra.mxu0 0.0
    %1630 = vmatprep.subr.mxu0 0.0
    %1631 = vmatpush2.msra.mxu0 0.0
    %1632 = vmatprep.subr.mxu0 0.0
    %1633 = vmatpush2.msra.mxu0 0.0
    %1634 = vmatprep.subr.mxu0 0.0
    %1635 = vmatpush2.msra.mxu0 0.0
    %1636 = vmatprep.subr.mxu0 0.0
    %1637 = vmatpush2.msra.mxu0 0.0
    %1638 = vmatprep.subr.mxu0 0.0
    %1639 = vmatpush2.msra.mxu0 0.0
    %1640 = vmatprep.subr.mxu0 0.0
    %1641 = vmatpush2.msra.mxu0 0.0
    %1642 = vmatprep.subr.mxu0 0.0
    %1643 = vmatpush2.msra.mxu0 0.0
    %1644 = vmatprep.subr.mxu0 0.0
    %1645 = vmatpush2.msra.mxu0 0.0
    %1646 = vmatprep.subr.mxu0 0.0
    %1647 = vmatpush2.msra.mxu0 0.0
    %1648 = vmatprep.subr.mxu0 0.0
    %1649 = vmatpush2.msra.mxu0 0.0
    %1650 = vmatprep.subr.mxu0 0.0
    %1651 = vmatpush2.msra.mxu0 0.0
    %1652 = vmatprep.mubr.f32.mxu0 0.0
    %1653 = vmatmul.mubr.f32.gmra.mxu0 %v1586
    %v1654 = vpop.f32.mrf.mxu0
    %v1655 = vadd.f32 0.0, %v1654
    %v1656 = vpop.f32.mrf.mxu0
    %1657 = vdwg.mxu0
    %v1658 = vadd.f32 %v1655, %v205
    %v1661 = vunpack.c.l.s4 1966171168
    %v1662 = vunpack.c.0.s8 %v1661
    %v1663 = vlaneseq
    %v1664 = vshrl.u32 %v1663, 7
    %v1665 = vsub.s32 %v1662, %v1664
    %v1666 = vrot.slane %v1658, %v1665
    %v1667 = vcombine.high %v1666, %v1666
    %v1669 = vunpack.c.l.s4 1966171168
    %v1670 = vunpack.c.0.s8 %v1669
    %v1671 = vlaneseq
    %v1672 = vshrl.u32 %v1671, 7
    %v1673 = vsub.s32 %v1670, %v1672
    %v1674 = vrot.slane %v1666, %v1673
    %v1676 = vunpack.c.l.s4 1966171168
    %v1677 = vunpack.c.0.s8 %v1676
    %v1678 = vlaneseq
    %v1679 = vshrl.u32 %v1678, 7
    %v1680 = vsub.s32 %v1677, %v1679
    %v1681 = vrot.slane %v1667, %v1680
    %v1682 = vlaneseq
    %v1683 = vshrl.u32 %v1682, 7
    %v1684 = vsub.s32 0, %v1683
    %v1685 = vrot.slane %v1674, %v1684
    %v1686 = vlaneseq
    %v1687 = vshrl.u32 %v1686, 7
    %v1688 = vsub.s32 0, %v1687
    %v1689 = vrot.slane %v1681, %v1688
    %v1692 = vadd.f32 %v1685, %v298
    %v1693 = vadd.f32 %v1689, %v303
    %v1694 = vtanh.pop %v1692
    %v1695 = vtanh.pop %v1693
    %v1696 = vmul.f32 %v1694, %v604
    %v1697 = vmul.f32 %v1695, %v604
    %v1698 = vsel %vm224, %v1696, 0.0
    %1699 = vadd.xlane.f32.xlu0 %v1698
    %v1700 = vpop.xlane.xlu0 %1699
    %v1701 = vsel %vm224, %v1697, 0.0
    %1702 = vadd.xlane.f32.xlu0 %v1701
    %v1703 = vpop.xlane.xlu0 %1702
    %vm1704 = vcmp.eq.f32.partialorder %v1348, 0.0
    %v1707 = vlaneseq
    %v1708 = vshrl.u32 %v1707, 7
    %v1709 = vsub.s32 %v307, %v1708
    %v1710 = vrot.slane %v1700, %v1709
    %v1711 = vlaneseq
    %v1712 = vshrl.u32 %v1711, 7
    %v1713 = vsub.s32 %v307, %v1712
    %v1714 = vrot.slane %v1703, %v1713
    %v1715 = vsel %vm627, %v1714, %v1710
    %v1717 = vsel %vm1704, -inf, %v1715
    %v1718 = vsel %vm630, %v1717, -inf
    %1719 = vmax.xlane.f32.xlu0 %v1718
    %v1720 = vpop.xlane.xlu0 %1719
    %v1721 = vsub.f32 %v1717, %v1720
    %v1722 = vmul.f32 %v1721, 1.442695
    %v1723 = vpow.pop %v1722
    %v1724 = vsel %vm630, %v1723, 0.0
    %1725 = vadd.xlane.f32.xlu0 %v1724
    %v1726 = vpop.xlane.xlu0 %1725
    %v1727 = vrcp.pop %v1726
    %v1728 = vmul.f32 1.0, %v1727
    %v1729 = vmul.f32 %v1723, %v1728
    %v1730 = vlaneseq
    %v1731 = vshrl.u32 %v1730, 7
    %v1732 = vsub.s32 0, %v1731
    %v1733 = vrot.slane %v1729, %v1732
    %1735 = vbcast.lane.b32.xlu0 %v1733, 256
    %v1736 = vpop.permute.xlu0 %1735
    %v1737 = vlaneseq
    %v1738 = vshrl.u32 %v1737, 7
    %v1739 = vsub.s32 1, %v1738
    %v1740 = vrot.slane %v1729, %v1739
    %1742 = vbcast.lane.b32.xlu0 %v1740, 256
    %v1743 = vpop.permute.xlu0 %1742
    %v1744 = vmul.f32 %v1736, %v298
    %v1745 = vmul.f32 %v1743, %v303
    %v1746 = vsel %vm224, %v1744, 0.0
    %v1747 = vrot.slane %v1746, 4
    %v1748 = vadd.f32 %v1746, %v1747
    %v1749 = vrot.slane %v1748, 2
    %v1750 = vadd.f32 %v1748, %v1749
    %v1751 = vrot.slane %v1750, 1
    %v1752 = vadd.f32 %v1750, %v1751
    %v1753 = vsel %vm224, %v1745, 0.0
    %v1754 = vrot.slane %v1753, 4
    %v1755 = vadd.f32 %v1753, %v1754
    %v1756 = vrot.slane %v1755, 2
    %v1757 = vadd.f32 %v1755, %v1756
    %v1758 = vrot.slane %v1757, 1
    %v1759 = vadd.f32 %v1757, %v1758
    %v1762 = vsel %vm627, %v1759, %v1752
    %1764 = vrot.lane.b32.xlu0 %v1655, 96
    %v1765 = vpop.permute.xlu0 %1764
    %v1767 = vsel %vm224, %v1762, 0
    %1769 = vmatprep.subr.mxu0 0.0
    %1770 = vmatpush1.msra.mxu0 0.0
    %1771 = vmatprep.subr.mxu0 0.0
    %1772 = vmatpush1.msra.mxu0 0.0
    %1773 = vmatprep.subr.mxu0 0.0
    %1774 = vmatpush1.msra.mxu0 0.0
    %1775 = vmatprep.subr.mxu0 0.0
    %1776 = vmatpush1.msra.mxu0 0.0
    %1777 = vmatprep.subr.mxu0 0.0
    %1778 = vmatpush1.msra.mxu0 0.0
    %1779 = vmatprep.subr.mxu0 0.0
    %1780 = vmatpush1.msra.mxu0 0.0
    %1781 = vmatprep.subr.mxu0 0.0
    %1782 = vmatpush1.msra.mxu0 0.0
    %1783 = vmatprep.subr.mxu0 0.0
    %1784 = vmatpush1.msra.mxu0 0.0
    %1785 = vmatprep.subr.mxu0 0.0
    %1786 = vmatpush1.msra.mxu0 0.0
    %1787 = vmatprep.subr.mxu0 0.0
    %1788 = vmatpush1.msra.mxu0 0.0
    %1789 = vmatprep.subr.mxu0 0.0
    %1790 = vmatpush1.msra.mxu0 0.0
    %1791 = vmatprep.subr.mxu0 0.0
    %1792 = vmatpush1.msra.mxu0 0.0
    %1793 = vmatprep.subr.mxu0 0.0
    %1794 = vmatpush1.msra.mxu0 %v188
    %1795 = vmatprep.subr.mxu0 0.0
    %1796 = vmatpush1.msra.mxu0 %v187
    %1797 = vmatprep.subr.mxu0 0.0
    %1798 = vmatpush1.msra.mxu0 %v186
    %1799 = vmatprep.subr.mxu0 0.0
    %1800 = vmatpush1.msra.mxu0 %v185
    %1801 = vmatprep.subr.mxu0 0.0
    %1802 = vmatpush2.msra.mxu0 0.0
    %1803 = vmatprep.subr.mxu0 0.0
    %1804 = vmatpush2.msra.mxu0 0.0
    %1805 = vmatprep.subr.mxu0 0.0
    %1806 = vmatpush2.msra.mxu0 0.0
    %1807 = vmatprep.subr.mxu0 0.0
    %1808 = vmatpush2.msra.mxu0 0.0
    %1809 = vmatprep.subr.mxu0 0.0
    %1810 = vmatpush2.msra.mxu0 0.0
    %1811 = vmatprep.subr.mxu0 0.0
    %1812 = vmatpush2.msra.mxu0 0.0
    %1813 = vmatprep.subr.mxu0 0.0
    %1814 = vmatpush2.msra.mxu0 0.0
    %1815 = vmatprep.subr.mxu0 0.0
    %1816 = vmatpush2.msra.mxu0 0.0
    %1817 = vmatprep.subr.mxu0 0.0
    %1818 = vmatpush2.msra.mxu0 0.0
    %1819 = vmatprep.subr.mxu0 0.0
    %1820 = vmatpush2.msra.mxu0 0.0
    %1821 = vmatprep.subr.mxu0 0.0
    %1822 = vmatpush2.msra.mxu0 0.0
    %1823 = vmatprep.subr.mxu0 0.0
    %1824 = vmatpush2.msra.mxu0 0.0
    %1825 = vmatprep.subr.mxu0 0.0
    %1826 = vmatpush2.msra.mxu0 0.0
    %1827 = vmatprep.subr.mxu0 0.0
    %1828 = vmatpush2.msra.mxu0 0.0
    %1829 = vmatprep.subr.mxu0 0.0
    %1830 = vmatpush2.msra.mxu0 0.0
    %1831 = vmatprep.subr.mxu0 0.0
    %1832 = vmatpush2.msra.mxu0 0.0
    %1833 = vmatprep.mubr.f32.mxu0 0.0
    %1834 = vmatmul.mubr.f32.gmra.mxu0 %v1767
    %v1835 = vpop.f32.mrf.mxu0
    %v1836 = vadd.f32 %v1765, %v1835
    %v1837 = vpop.f32.mrf.mxu0
    %1838 = vdwg.mxu0
    %v1839 = vadd.f32 %v1836, %v212
    %v1840 = vtanh.pop %v1839
    %v1841 = vsel %vm630, %v1729, -inf
    %1842 = vmax.xlane.f32.xlu0 %v1841
    %v1843 = vpop.xlane.xlu0 %1842
    %vm1844 = vcmp.eq.f32.partialorder %v1729, %v1843
    %v1845 = vsel %vm1844, %v307, 8
    %v1846 = vsel %vm630, %v1845, 2147483647
    %v1847 = vand.u32 %v1846, 65535
    %v1848 = vshra.s32 %v1846, 16
    %v1849 = vcvt.s32.f32 %v1847
    %v1850 = vcvt.s32.f32 %v1848
    %1851 = vmin.xlane.f32.xlu0 %v1850
    %v1852 = vpop.xlane.xlu0 %1851
    %vm1853 = vcmp.eq.f32.partialorder %v1850, %v1852
    %v1854 = vsel %vm1853, %v1849, inf
    %1855 = vmin.xlane.f32.xlu0 %v1854
    %v1856 = vpop.xlane.xlu0 %1855
    %v1857 = vcvt.f32.s32 %v1856
    %v1858 = vcvt.f32.s32 %v1852
    %v1859 = vshll.u32 %v1858, 16
    %v1860 = vadd.s32 %v1859, %v1857
    %vm1861 = vcmp.eq.s32.totalorder %v307, %v1860
    %v1862 = vsel %vm1861, 0.0, %v1348
    %v1863 = vsel %vm1861, 1, 0
    %v1864 = vcvt.s32.f32 %v1863
    %v1865 = vlaneseq
    %v1866 = vshrl.u32 %v1865, 7
    %v1867 = vsub.s32 0, %v1866
    %v1868 = vrot.slane %v1864, %v1867
    %1870 = vbcast.lane.b32.xlu0 %v1868, 256
    %v1871 = vpop.permute.xlu0 %1870
    %v1872 = vlaneseq
    %v1873 = vshrl.u32 %v1872, 7
    %v1874 = vsub.s32 1, %v1873
    %v1875 = vrot.slane %v1864, %v1874
    %1877 = vbcast.lane.b32.xlu0 %v1875, 256
    %v1878 = vpop.permute.xlu0 %1877
    %v1879 = vmul.f32 %v1871, %v173
    %v1880 = vmul.f32 %v1878, %v174
    %v1881 = vsel %vm384, %v1879, 0.0
    %v1882 = vrot.slane %v1881, 4
    %v1883 = vadd.f32 %v1881, %v1882
    %v1884 = vrot.slane %v1883, 2
    %v1885 = vadd.f32 %v1883, %v1884
    %v1886 = vrot.slane %v1885, 1
    %v1887 = vadd.f32 %v1885, %v1886
    %v1888 = vsel %vm384, %v1880, 0.0
    %v1889 = vrot.slane %v1888, 4
    %v1890 = vadd.f32 %v1888, %v1889
    %v1891 = vrot.slane %v1890, 2
    %v1892 = vadd.f32 %v1890, %v1891
    %v1893 = vrot.slane %v1892, 1
    %v1894 = vadd.f32 %v1892, %v1893
    %v1897 = vunpack.c.l.s4 1966171168
    %v1898 = vunpack.c.0.s8 %v1897
    %v1899 = vlaneseq
    %v1900 = vshrl.u32 %v1899, 7
    %v1901 = vsub.s32 %v1898, %v1900
    %v1902 = vrot.slane %v1729, %v1901
    %v1903 = vcombine.high %v1902, %v1902
    %v1905 = vunpack.c.l.s4 1966171168
    %v1906 = vunpack.c.0.s8 %v1905
    %v1907 = vlaneseq
    %v1908 = vshrl.u32 %v1907, 7
    %v1909 = vsub.s32 %v1906, %v1908
    %v1910 = vrot.slane %v1902, %v1909
    %v1912 = vunpack.c.l.s4 1966171168
    %v1913 = vunpack.c.0.s8 %v1912
    %v1914 = vlaneseq
    %v1915 = vshrl.u32 %v1914, 7
    %v1916 = vsub.s32 %v1913, %v1915
    %v1917 = vrot.slane %v1903, %v1916
    %1920 = vst.msk [vmem:[#allocation17 + $0x2] sm:$0x1] %vm891, %v1910
    %1921 = vst.msk [vmem:[#allocation17 + $0xa] sm:$0x1] %vm891, %v1917
    %vm1922 = vcmask 17424
    %1923 = vst.msk [vmem:[#allocation18] sm:$0x3] %vm1922, %v1860
    %v1925 = vsel %vm224, %v1840, 0
    %1927 = vmatprep.subr.mxu0 0.0
    %1928 = vmatpush1.msra.mxu0 0.0
    %1929 = vmatprep.subr.mxu0 0.0
    %1930 = vmatpush1.msra.mxu0 0.0
    %1931 = vmatprep.subr.mxu0 0.0
    %1932 = vmatpush1.msra.mxu0 0.0
    %1933 = vmatprep.subr.mxu0 0.0
    %1934 = vmatpush1.msra.mxu0 0.0
    %1935 = vmatprep.subr.mxu0 0.0
    %1936 = vmatpush1.msra.mxu0 0.0
    %1937 = vmatprep.subr.mxu0 0.0
    %1938 = vmatpush1.msra.mxu0 0.0
    %1939 = vmatprep.subr.mxu0 0.0
    %1940 = vmatpush1.msra.mxu0 0.0
    %1941 = vmatprep.subr.mxu0 0.0
    %1942 = vmatpush1.msra.mxu0 0.0
    %1943 = vmatprep.subr.mxu0 0.0
    %1944 = vmatpush1.msra.mxu0 0.0
    %1945 = vmatprep.subr.mxu0 0.0
    %1946 = vmatpush1.msra.mxu0 0.0
    %1947 = vmatprep.subr.mxu0 0.0
    %1948 = vmatpush1.msra.mxu0 0.0
    %1949 = vmatprep.subr.mxu0 0.0
    %1950 = vmatpush1.msra.mxu0 0.0
    %1951 = vmatprep.subr.mxu0 0.0
    %1952 = vmatpush1.msra.mxu0 %v180
    %1953 = vmatprep.subr.mxu0 0.0
    %1954 = vmatpush1.msra.mxu0 %v179
    %1955 = vmatprep.subr.mxu0 0.0
    %1956 = vmatpush1.msra.mxu0 %v178
    %1957 = vmatprep.subr.mxu0 0.0
    %1958 = vmatpush1.msra.mxu0 %v177
    %1959 = vmatprep.subr.mxu0 0.0
    %1960 = vmatpush2.msra.mxu0 0.0
    %1961 = vmatprep.subr.mxu0 0.0
    %1962 = vmatpush2.msra.mxu0 0.0
    %1963 = vmatprep.subr.mxu0 0.0
    %1964 = vmatpush2.msra.mxu0 0.0
    %1965 = vmatprep.subr.mxu0 0.0
    %1966 = vmatpush2.msra.mxu0 0.0
    %1967 = vmatprep.subr.mxu0 0.0
    %1968 = vmatpush2.msra.mxu0 0.0
    %1969 = vmatprep.subr.mxu0 0.0
    %1970 = vmatpush2.msra.mxu0 0.0
    %1971 = vmatprep.subr.mxu0 0.0
    %1972 = vmatpush2.msra.mxu0 0.0
    %1973 = vmatprep.subr.mxu0 0.0
    %1974 = vmatpush2.msra.mxu0 0.0
    %1975 = vmatprep.subr.mxu0 0.0
    %1976 = vmatpush2.msra.mxu0 0.0
    %1977 = vmatprep.subr.mxu0 0.0
    %1978 = vmatpush2.msra.mxu0 0.0
    %1979 = vmatprep.subr.mxu0 0.0
    %1980 = vmatpush2.msra.mxu0 0.0
    %1981 = vmatprep.subr.mxu0 0.0
    %1982 = vmatpush2.msra.mxu0 0.0
    %1983 = vmatprep.subr.mxu0 0.0
    %1984 = vmatpush2.msra.mxu0 0.0
    %1985 = vmatprep.subr.mxu0 0.0
    %1986 = vmatpush2.msra.mxu0 0.0
    %1987 = vmatprep.subr.mxu0 0.0
    %1988 = vmatpush2.msra.mxu0 0.0
    %1989 = vmatprep.subr.mxu0 0.0
    %1990 = vmatpush2.msra.mxu0 0.0
    %1991 = vmatprep.mubr.f32.mxu0 0.0
    %1992 = vmatmul.mubr.f32.gmra.mxu0 %v1925
    %v1993 = vpop.f32.mrf.mxu0
    %v1994 = vadd.f32 0.0, %v1993
    %v1995 = vpop.f32.mrf.mxu0
    %1996 = vdwg.mxu0
    %v1999 = vsel %vm627, %v1894, %v1887
    %v2000 = vsel %vm384, %v1999, 0
    %2002 = vmatprep.subr.mxu0 0.0
    %2003 = vmatpush1.msra.mxu0 0.0
    %2004 = vmatprep.subr.mxu0 0.0
    %2005 = vmatpush1.msra.mxu0 0.0
    %2006 = vmatprep.subr.mxu0 0.0
    %2007 = vmatpush1.msra.mxu0 0.0
    %2008 = vmatprep.subr.mxu0 0.0
    %2009 = vmatpush1.msra.mxu0 0.0
    %2010 = vmatprep.subr.mxu0 0.0
    %2011 = vmatpush1.msra.mxu0 0.0
    %2012 = vmatprep.subr.mxu0 0.0
    %2013 = vmatpush1.msra.mxu0 0.0
    %2014 = vmatprep.subr.mxu0 0.0
    %2015 = vmatpush1.msra.mxu0 0.0
    %2016 = vmatprep.subr.mxu0 0.0
    %2017 = vmatpush1.msra.mxu0 0.0
    %2018 = vmatprep.subr.mxu0 0.0
    %2019 = vmatpush1.msra.mxu0 0.0
    %2020 = vmatprep.subr.mxu0 0.0
    %2021 = vmatpush1.msra.mxu0 0.0
    %2022 = vmatprep.subr.mxu0 0.0
    %2023 = vmatpush1.msra.mxu0 0.0
    %2024 = vmatprep.subr.mxu0 0.0
    %2025 = vmatpush1.msra.mxu0 0.0
    %2026 = vmatprep.subr.mxu0 0.0
    %2027 = vmatpush1.msra.mxu0 0.0
    %2028 = vmatprep.subr.mxu0 0.0
    %2029 = vmatpush1.msra.mxu0 0.0
    %2030 = vmatprep.subr.mxu0 0.0
    %2031 = vmatpush1.msra.mxu0 %v176
    %2032 = vmatprep.subr.mxu0 0.0
    %2033 = vmatpush1.msra.mxu0 %v175
    %2034 = vmatprep.subr.mxu0 0.0
    %2035 = vmatpush2.msra.mxu0 0.0
    %2036 = vmatprep.subr.mxu0 0.0
    %2037 = vmatpush2.msra.mxu0 0.0
    %2038 = vmatprep.subr.mxu0 0.0
    %2039 = vmatpush2.msra.mxu0 0.0
    %2040 = vmatprep.subr.mxu0 0.0
    %2041 = vmatpush2.msra.mxu0 0.0
    %2042 = vmatprep.subr.mxu0 0.0
    %2043 = vmatpush2.msra.mxu0 0.0
    %2044 = vmatprep.subr.mxu0 0.0
    %2045 = vmatpush2.msra.mxu0 0.0
    %2046 = vmatprep.subr.mxu0 0.0
    %2047 = vmatpush2.msra.mxu0 0.0
    %2048 = vmatprep.subr.mxu0 0.0
    %2049 = vmatpush2.msra.mxu0 0.0
    %2050 = vmatprep.subr.mxu0 0.0
    %2051 = vmatpush2.msra.mxu0 0.0
    %2052 = vmatprep.subr.mxu0 0.0
    %2053 = vmatpush2.msra.mxu0 0.0
    %2054 = vmatprep.subr.mxu0 0.0
    %2055 = vmatpush2.msra.mxu0 0.0
    %2056 = vmatprep.subr.mxu0 0.0
    %2057 = vmatpush2.msra.mxu0 0.0
    %2058 = vmatprep.subr.mxu0 0.0
    %2059 = vmatpush2.msra.mxu0 0.0
    %2060 = vmatprep.subr.mxu0 0.0
    %2061 = vmatpush2.msra.mxu0 0.0
    %2062 = vmatprep.subr.mxu0 0.0
    %2063 = vmatpush2.msra.mxu0 0.0
    %2064 = vmatprep.subr.mxu0 0.0
    %2065 = vmatpush2.msra.mxu0 0.0
    %2066 = vmatprep.mubr.f32.mxu0 0.0
    %2067 = vmatmul.mubr.f32.gmra.mxu0 %v2000
    %v2068 = vpop.f32.mrf.mxu0
    %v2069 = vadd.f32 %v1994, %v2068
    %v2070 = vpop.f32.mrf.mxu0
    %2071 = vdwg.mxu0
    %v2072 = vadd.f32 %v2069, %v198
    %v2073 = vxor.u32 %v2072, 2147483648
    %v2074 = vmul.f32 %v2073, 1.442695
    %v2075 = vpow.pop %v2074
    %v2076 = vadd.f32 %v2075, 1.0
    %v2077 = vrcp.pop %v2076
    %v2078 = vmul.f32 1.0, %v2077
    %v2079 = vtanh.pop %v2072
    %v2080 = vmul.f32 %v2078, %v1576
    %2082 = vrot.lane.b32.xlu0 %v2079, 64
    %v2083 = vpop.permute.xlu0 %2082
    %v2085 = vmul.f32 %v2078, %v2083
    %2087 = vrot.lane.b32.xlu0 %v2085, 32
    %v2088 = vpop.permute.xlu0 %2087
    %v2090 = vadd.f32 %v2080, %v2088
    %v2091 = vtanh.pop %v2090
    %2093 = vrot.lane.b32.xlu0 %v2091, 64
    %v2094 = vpop.permute.xlu0 %2093
    %v2096 = vmul.f32 %v2078, %v2094
    %2098 = vrot.lane.b32.xlu0 %v2096, 32
    %v2099 = vpop.permute.xlu0 %2098
    %v2100 = vsel %vm224, %v2099, 0
    %2102 = vmatprep.subr.mxu0 0.0
    %2103 = vmatpush1.msra.mxu0 0.0
    %2104 = vmatprep.subr.mxu0 0.0
    %2105 = vmatpush1.msra.mxu0 0.0
    %2106 = vmatprep.subr.mxu0 0.0
    %2107 = vmatpush1.msra.mxu0 0.0
    %2108 = vmatprep.subr.mxu0 0.0
    %2109 = vmatpush1.msra.mxu0 0.0
    %2110 = vmatprep.subr.mxu0 0.0
    %2111 = vmatpush1.msra.mxu0 0.0
    %2112 = vmatprep.subr.mxu0 0.0
    %2113 = vmatpush1.msra.mxu0 0.0
    %2114 = vmatprep.subr.mxu0 0.0
    %2115 = vmatpush1.msra.mxu0 0.0
    %2116 = vmatprep.subr.mxu0 0.0
    %2117 = vmatpush1.msra.mxu0 0.0
    %2118 = vmatprep.subr.mxu0 0.0
    %2119 = vmatpush1.msra.mxu0 0.0
    %2120 = vmatprep.subr.mxu0 0.0
    %2121 = vmatpush1.msra.mxu0 0.0
    %2122 = vmatprep.subr.mxu0 0.0
    %2123 = vmatpush1.msra.mxu0 0.0
    %2124 = vmatprep.subr.mxu0 0.0
    %2125 = vmatpush1.msra.mxu0 0.0
    %2126 = vmatprep.subr.mxu0 0.0
    %2127 = vmatpush1.msra.mxu0 %v184
    %2128 = vmatprep.subr.mxu0 0.0
    %2129 = vmatpush1.msra.mxu0 %v183
    %2130 = vmatprep.subr.mxu0 0.0
    %2131 = vmatpush1.msra.mxu0 %v182
    %2132 = vmatprep.subr.mxu0 0.0
    %2133 = vmatpush1.msra.mxu0 %v181
    %2134 = vmatprep.subr.mxu0 0.0
    %2135 = vmatpush2.msra.mxu0 0.0
    %2136 = vmatprep.subr.mxu0 0.0
    %2137 = vmatpush2.msra.mxu0 0.0
    %2138 = vmatprep.subr.mxu0 0.0
    %2139 = vmatpush2.msra.mxu0 0.0
    %2140 = vmatprep.subr.mxu0 0.0
    %2141 = vmatpush2.msra.mxu0 0.0
    %2142 = vmatprep.subr.mxu0 0.0
    %2143 = vmatpush2.msra.mxu0 0.0
    %2144 = vmatprep.subr.mxu0 0.0
    %2145 = vmatpush2.msra.mxu0 0.0
    %2146 = vmatprep.subr.mxu0 0.0
    %2147 = vmatpush2.msra.mxu0 0.0
    %2148 = vmatprep.subr.mxu0 0.0
    %2149 = vmatpush2.msra.mxu0 0.0
    %2150 = vmatprep.subr.mxu0 0.0
    %2151 = vmatpush2.msra.mxu0 0.0
    %2152 = vmatprep.subr.mxu0 0.0
    %2153 = vmatpush2.msra.mxu0 0.0
    %2154 = vmatprep.subr.mxu0 0.0
    %2155 = vmatpush2.msra.mxu0 0.0
    %2156 = vmatprep.subr.mxu0 0.0
    %2157 = vmatpush2.msra.mxu0 0.0
    %2158 = vmatprep.subr.mxu0 0.0
    %2159 = vmatpush2.msra.mxu0 0.0
    %2160 = vmatprep.subr.mxu0 0.0
    %2161 = vmatpush2.msra.mxu0 0.0
    %2162 = vmatprep.subr.mxu0 0.0
    %2163 = vmatpush2.msra.mxu0 0.0
    %2164 = vmatprep.subr.mxu0 0.0
    %2165 = vmatpush2.msra.mxu0 0.0
    %2166 = vmatprep.mubr.f32.mxu0 0.0
    %2167 = vmatmul.mubr.f32.gmra.mxu0 %v2100
    %v2168 = vpop.f32.mrf.mxu0
    %v2169 = vadd.f32 0.0, %v2168
    %v2170 = vpop.f32.mrf.mxu0
    %2171 = vdwg.mxu0
    %v2172 = vadd.f32 %v2169, %v205
    %v2175 = vunpack.c.l.s4 1966171168
    %v2176 = vunpack.c.0.s8 %v2175
    %v2177 = vlaneseq
    %v2178 = vshrl.u32 %v2177, 7
    %v2179 = vsub.s32 %v2176, %v2178
    %v2180 = vrot.slane %v2172, %v2179
    %v2181 = vcombine.high %v2180, %v2180
    %v2183 = vunpack.c.l.s4 1966171168
    %v2184 = vunpack.c.0.s8 %v2183
    %v2185 = vlaneseq
    %v2186 = vshrl.u32 %v2185, 7
    %v2187 = vsub.s32 %v2184, %v2186
    %v2188 = vrot.slane %v2180, %v2187
    %v2190 = vunpack.c.l.s4 1966171168
    %v2191 = vunpack.c.0.s8 %v2190
    %v2192 = vlaneseq
    %v2193 = vshrl.u32 %v2192, 7
    %v2194 = vsub.s32 %v2191, %v2193
    %v2195 = vrot.slane %v2181, %v2194
    %v2196 = vlaneseq
    %v2197 = vshrl.u32 %v2196, 7
    %v2198 = vsub.s32 0, %v2197
    %v2199 = vrot.slane %v2188, %v2198
    %v2200 = vlaneseq
    %v2201 = vshrl.u32 %v2200, 7
    %v2202 = vsub.s32 0, %v2201
    %v2203 = vrot.slane %v2195, %v2202
    %v2206 = vadd.f32 %v2199, %v298
    %v2207 = vadd.f32 %v2203, %v303
    %v2208 = vtanh.pop %v2206
    %v2209 = vtanh.pop %v2207
    %v2210 = vmul.f32 %v2208, %v604
    %v2211 = vmul.f32 %v2209, %v604
    %v2212 = vsel %vm224, %v2210, 0.0
    %2213 = vadd.xlane.f32.xlu0 %v2212
    %v2214 = vpop.xlane.xlu0 %2213
    %v2215 = vsel %vm224, %v2211, 0.0
    %2216 = vadd.xlane.f32.xlu0 %v2215
    %v2217 = vpop.xlane.xlu0 %2216
    %vm2218 = vcmp.eq.f32.partialorder %v1862, 0.0
    %v2221 = vlaneseq
    %v2222 = vshrl.u32 %v2221, 7
    %v2223 = vsub.s32 %v307, %v2222
    %v2224 = vrot.slane %v2214, %v2223
    %v2225 = vlaneseq
    %v2226 = vshrl.u32 %v2225, 7
    %v2227 = vsub.s32 %v307, %v2226
    %v2228 = vrot.slane %v2217, %v2227
    %v2229 = vsel %vm627, %v2228, %v2224
    %v2231 = vsel %vm2218, -inf, %v2229
    %v2232 = vsel %vm630, %v2231, -inf
    %2233 = vmax.xlane.f32.xlu0 %v2232
    %v2234 = vpop.xlane.xlu0 %2233
    %v2235 = vsub.f32 %v2231, %v2234
    %v2236 = vmul.f32 %v2235, 1.442695
    %v2237 = vpow.pop %v2236
    %v2238 = vsel %vm630, %v2237, 0.0
    %2239 = vadd.xlane.f32.xlu0 %v2238
    %v2240 = vpop.xlane.xlu0 %2239
    %v2241 = vrcp.pop %v2240
    %v2242 = vmul.f32 1.0, %v2241
    %v2243 = vmul.f32 %v2237, %v2242
    %v2244 = vlaneseq
    %v2245 = vshrl.u32 %v2244, 7
    %v2246 = vsub.s32 0, %v2245
    %v2247 = vrot.slane %v2243, %v2246
    %2249 = vbcast.lane.b32.xlu0 %v2247, 256
    %v2250 = vpop.permute.xlu0 %2249
    %v2251 = vlaneseq
    %v2252 = vshrl.u32 %v2251, 7
    %v2253 = vsub.s32 1, %v2252
    %v2254 = vrot.slane %v2243, %v2253
    %2256 = vbcast.lane.b32.xlu0 %v2254, 256
    %v2257 = vpop.permute.xlu0 %2256
    %v2258 = vmul.f32 %v2250, %v298
    %v2259 = vmul.f32 %v2257, %v303
    %v2260 = vsel %vm224, %v2258, 0.0
    %v2261 = vrot.slane %v2260, 4
    %v2262 = vadd.f32 %v2260, %v2261
    %v2263 = vrot.slane %v2262, 2
    %v2264 = vadd.f32 %v2262, %v2263
    %v2265 = vrot.slane %v2264, 1
    %v2266 = vadd.f32 %v2264, %v2265
    %v2267 = vsel %vm224, %v2259, 0.0
    %v2268 = vrot.slane %v2267, 4
    %v2269 = vadd.f32 %v2267, %v2268
    %v2270 = vrot.slane %v2269, 2
    %v2271 = vadd.f32 %v2269, %v2270
    %v2272 = vrot.slane %v2271, 1
    %v2273 = vadd.f32 %v2271, %v2272
    %v2276 = vsel %vm627, %v2273, %v2266
    %2278 = vrot.lane.b32.xlu0 %v2169, 96
    %v2279 = vpop.permute.xlu0 %2278
    %v2281 = vsel %vm224, %v2276, 0
    %2283 = vmatprep.subr.mxu0 0.0
    %2284 = vmatpush1.msra.mxu0 0.0
    %2285 = vmatprep.subr.mxu0 0.0
    %2286 = vmatpush1.msra.mxu0 0.0
    %2287 = vmatprep.subr.mxu0 0.0
    %2288 = vmatpush1.msra.mxu0 0.0
    %2289 = vmatprep.subr.mxu0 0.0
    %2290 = vmatpush1.msra.mxu0 0.0
    %2291 = vmatprep.subr.mxu0 0.0
    %2292 = vmatpush1.msra.mxu0 0.0
    %2293 = vmatprep.subr.mxu0 0.0
    %2294 = vmatpush1.msra.mxu0 0.0
    %2295 = vmatprep.subr.mxu0 0.0
    %2296 = vmatpush1.msra.mxu0 0.0
    %2297 = vmatprep.subr.mxu0 0.0
    %2298 = vmatpush1.msra.mxu0 0.0
    %2299 = vmatprep.subr.mxu0 0.0
    %2300 = vmatpush1.msra.mxu0 0.0
    %2301 = vmatprep.subr.mxu0 0.0
    %2302 = vmatpush1.msra.mxu0 0.0
    %2303 = vmatprep.subr.mxu0 0.0
    %2304 = vmatpush1.msra.mxu0 0.0
    %2305 = vmatprep.subr.mxu0 0.0
    %2306 = vmatpush1.msra.mxu0 0.0
    %2307 = vmatprep.subr.mxu0 0.0
    %2308 = vmatpush1.msra.mxu0 %v188
    %2309 = vmatprep.subr.mxu0 0.0
    %2310 = vmatpush1.msra.mxu0 %v187
    %2311 = vmatprep.subr.mxu0 0.0
    %2312 = vmatpush1.msra.mxu0 %v186
    %2313 = vmatprep.subr.mxu0 0.0
    %2314 = vmatpush1.msra.mxu0 %v185
    %2315 = vmatprep.subr.mxu0 0.0
    %2316 = vmatpush2.msra.mxu0 0.0
    %2317 = vmatprep.subr.mxu0 0.0
    %2318 = vmatpush2.msra.mxu0 0.0
    %2319 = vmatprep.subr.mxu0 0.0
    %2320 = vmatpush2.msra.mxu0 0.0
    %2321 = vmatprep.subr.mxu0 0.0
    %2322 = vmatpush2.msra.mxu0 0.0
    %2323 = vmatprep.subr.mxu0 0.0
    %2324 = vmatpush2.msra.mxu0 0.0
    %2325 = vmatprep.subr.mxu0 0.0
    %2326 = vmatpush2.msra.mxu0 0.0
    %2327 = vmatprep.subr.mxu0 0.0
    %2328 = vmatpush2.msra.mxu0 0.0
    %2329 = vmatprep.subr.mxu0 0.0
    %2330 = vmatpush2.msra.mxu0 0.0
    %2331 = vmatprep.subr.mxu0 0.0
    %2332 = vmatpush2.msra.mxu0 0.0
    %2333 = vmatprep.subr.mxu0 0.0
    %2334 = vmatpush2.msra.mxu0 0.0
    %2335 = vmatprep.subr.mxu0 0.0
    %2336 = vmatpush2.msra.mxu0 0.0
    %2337 = vmatprep.subr.mxu0 0.0
    %2338 = vmatpush2.msra.mxu0 0.0
    %2339 = vmatprep.subr.mxu0 0.0
    %2340 = vmatpush2.msra.mxu0 0.0
    %2341 = vmatprep.subr.mxu0 0.0
    %2342 = vmatpush2.msra.mxu0 0.0
    %2343 = vmatprep.subr.mxu0 0.0
    %2344 = vmatpush2.msra.mxu0 0.0
    %2345 = vmatprep.subr.mxu0 0.0
    %2346 = vmatpush2.msra.mxu0 0.0
    %2347 = vmatprep.mubr.f32.mxu0 0.0
    %2348 = vmatmul.mubr.f32.gmra.mxu0 %v2281
    %v2349 = vpop.f32.mrf.mxu0
    %v2350 = vadd.f32 %v2279, %v2349
    %v2351 = vpop.f32.mrf.mxu0
    %2352 = vdwg.mxu0
    %v2353 = vadd.f32 %v2350, %v212
    %v2354 = vtanh.pop %v2353
    %v2355 = vsel %vm630, %v2243, -inf
    %2356 = vmax.xlane.f32.xlu0 %v2355
    %v2357 = vpop.xlane.xlu0 %2356
    %vm2358 = vcmp.eq.f32.partialorder %v2243, %v2357
    %v2359 = vsel %vm2358, %v307, 8
    %v2360 = vsel %vm630, %v2359, 2147483647
    %v2361 = vand.u32 %v2360, 65535
    %v2362 = vshra.s32 %v2360, 16
    %v2363 = vcvt.s32.f32 %v2361
    %v2364 = vcvt.s32.f32 %v2362
    %2365 = vmin.xlane.f32.xlu0 %v2364
    %v2366 = vpop.xlane.xlu0 %2365
    %vm2367 = vcmp.eq.f32.partialorder %v2364, %v2366
    %v2368 = vsel %vm2367, %v2363, inf
    %2369 = vmin.xlane.f32.xlu0 %v2368
    %v2370 = vpop.xlane.xlu0 %2369
    %v2371 = vcvt.f32.s32 %v2370
    %v2372 = vcvt.f32.s32 %v2366
    %v2373 = vshll.u32 %v2372, 16
    %v2374 = vadd.s32 %v2373, %v2371
    %vm2375 = vcmp.eq.s32.totalorder %v307, %v2374
    %v2376 = vsel %vm2375, 0.0, %v1862
    %v2377 = vsel %vm2375, 1, 0
    %v2378 = vcvt.s32.f32 %v2377
    %v2379 = vlaneseq
    %v2380 = vshrl.u32 %v2379, 7
    %v2381 = vsub.s32 0, %v2380
    %v2382 = vrot.slane %v2378, %v2381
    %2384 = vbcast.lane.b32.xlu0 %v2382, 256
    %v2385 = vpop.permute.xlu0 %2384
    %v2386 = vlaneseq
    %v2387 = vshrl.u32 %v2386, 7
    %v2388 = vsub.s32 1, %v2387
    %v2389 = vrot.slane %v2378, %v2388
    %2391 = vbcast.lane.b32.xlu0 %v2389, 256
    %v2392 = vpop.permute.xlu0 %2391
    %v2393 = vmul.f32 %v2385, %v173
    %v2394 = vmul.f32 %v2392, %v174
    %v2395 = vsel %vm384, %v2393, 0.0
    %v2396 = vrot.slane %v2395, 4
    %v2397 = vadd.f32 %v2395, %v2396
    %v2398 = vrot.slane %v2397, 2
    %v2399 = vadd.f32 %v2397, %v2398
    %v2400 = vrot.slane %v2399, 1
    %v2401 = vadd.f32 %v2399, %v2400
    %v2402 = vsel %vm384, %v2394, 0.0
    %v2403 = vrot.slane %v2402, 4
    %v2404 = vadd.f32 %v2402, %v2403
    %v2405 = vrot.slane %v2404, 2
    %v2406 = vadd.f32 %v2404, %v2405
    %v2407 = vrot.slane %v2406, 1
    %v2408 = vadd.f32 %v2406, %v2407
    %v2411 = vunpack.c.l.s4 1966171168
    %v2412 = vunpack.c.0.s8 %v2411
    %v2413 = vlaneseq
    %v2414 = vshrl.u32 %v2413, 7
    %v2415 = vsub.s32 %v2412, %v2414
    %v2416 = vrot.slane %v2243, %v2415
    %v2417 = vcombine.high %v2416, %v2416
    %v2419 = vunpack.c.l.s4 1966171168
    %v2420 = vunpack.c.0.s8 %v2419
    %v2421 = vlaneseq
    %v2422 = vshrl.u32 %v2421, 7
    %v2423 = vsub.s32 %v2420, %v2422
    %v2424 = vrot.slane %v2416, %v2423
    %v2426 = vunpack.c.l.s4 1966171168
    %v2427 = vunpack.c.0.s8 %v2426
    %v2428 = vlaneseq
    %v2429 = vshrl.u32 %v2428, 7
    %v2430 = vsub.s32 %v2427, %v2429
    %v2431 = vrot.slane %v2417, %v2430
    %2434 = vst.msk [vmem:[#allocation17 + $0x3] sm:$0x1] %vm891, %v2424
    %2435 = vst.msk [vmem:[#allocation17 + $0xb] sm:$0x1] %vm891, %v2431
    %vm2436 = vcmask 25624
    %2437 = vst.msk [vmem:[#allocation18] sm:$0x3] %vm2436, %v2374
    %v2439 = vsel %vm224, %v2354, 0
    %2441 = vmatprep.subr.mxu0 0.0
    %2442 = vmatpush1.msra.mxu0 0.0
    %2443 = vmatprep.subr.mxu0 0.0
    %2444 = vmatpush1.msra.mxu0 0.0
    %2445 = vmatprep.subr.mxu0 0.0
    %2446 = vmatpush1.msra.mxu0 0.0
    %2447 = vmatprep.subr.mxu0 0.0
    %2448 = vmatpush1.msra.mxu0 0.0
    %2449 = vmatprep.subr.mxu0 0.0
    %2450 = vmatpush1.msra.mxu0 0.0
    %2451 = vmatprep.subr.mxu0 0.0
    %2452 = vmatpush1.msra.mxu0 0.0
    %2453 = vmatprep.subr.mxu0 0.0
    %2454 = vmatpush1.msra.mxu0 0.0
    %2455 = vmatprep.subr.mxu0 0.0
    %2456 = vmatpush1.msra.mxu0 0.0
    %2457 = vmatprep.subr.mxu0 0.0
    %2458 = vmatpush1.msra.mxu0 0.0
    %2459 = vmatprep.subr.mxu0 0.0
    %2460 = vmatpush1.msra.mxu0 0.0
    %2461 = vmatprep.subr.mxu0 0.0
    %2462 = vmatpush1.msra.mxu0 0.0
    %2463 = vmatprep.subr.mxu0 0.0
    %2464 = vmatpush1.msra.mxu0 0.0
    %2465 = vmatprep.subr.mxu0 0.0
    %2466 = vmatpush1.msra.mxu0 %v180
    %2467 = vmatprep.subr.mxu0 0.0
    %2468 = vmatpush1.msra.mxu0 %v179
    %2469 = vmatprep.subr.mxu0 0.0
    %2470 = vmatpush1.msra.mxu0 %v178
    %2471 = vmatprep.subr.mxu0 0.0
    %2472 = vmatpush1.msra.mxu0 %v177
    %2473 = vmatprep.subr.mxu0 0.0
    %2474 = vmatpush2.msra.mxu0 0.0
    %2475 = vmatprep.subr.mxu0 0.0
    %2476 = vmatpush2.msra.mxu0 0.0
    %2477 = vmatprep.subr.mxu0 0.0
    %2478 = vmatpush2.msra.mxu0 0.0
    %2479 = vmatprep.subr.mxu0 0.0
    %2480 = vmatpush2.msra.mxu0 0.0
    %2481 = vmatprep.subr.mxu0 0.0
    %2482 = vmatpush2.msra.mxu0 0.0
    %2483 = vmatprep.subr.mxu0 0.0
    %2484 = vmatpush2.msra.mxu0 0.0
    %2485 = vmatprep.subr.mxu0 0.0
    %2486 = vmatpush2.msra.mxu0 0.0
    %2487 = vmatprep.subr.mxu0 0.0
    %2488 = vmatpush2.msra.mxu0 0.0
    %2489 = vmatprep.subr.mxu0 0.0
    %2490 = vmatpush2.msra.mxu0 0.0
    %2491 = vmatprep.subr.mxu0 0.0
    %2492 = vmatpush2.msra.mxu0 0.0
    %2493 = vmatprep.subr.mxu0 0.0
    %2494 = vmatpush2.msra.mxu0 0.0
    %2495 = vmatprep.subr.mxu0 0.0
    %2496 = vmatpush2.msra.mxu0 0.0
    %2497 = vmatprep.subr.mxu0 0.0
    %2498 = vmatpush2.msra.mxu0 0.0
    %2499 = vmatprep.subr.mxu0 0.0
    %2500 = vmatpush2.msra.mxu0 0.0
    %2501 = vmatprep.subr.mxu0 0.0
    %2502 = vmatpush2.msra.mxu0 0.0
    %2503 = vmatprep.subr.mxu0 0.0
    %2504 = vmatpush2.msra.mxu0 0.0
    %2505 = vmatprep.mubr.f32.mxu0 0.0
    %2506 = vmatmul.mubr.f32.gmra.mxu0 %v2439
    %v2507 = vpop.f32.mrf.mxu0
    %v2508 = vadd.f32 0.0, %v2507
    %v2509 = vpop.f32.mrf.mxu0
    %2510 = vdwg.mxu0
    %v2513 = vsel %vm627, %v2408, %v2401
    %v2514 = vsel %vm384, %v2513, 0
    %2516 = vmatprep.subr.mxu0 0.0
    %2517 = vmatpush1.msra.mxu0 0.0
    %2518 = vmatprep.subr.mxu0 0.0
    %2519 = vmatpush1.msra.mxu0 0.0
    %2520 = vmatprep.subr.mxu0 0.0
    %2521 = vmatpush1.msra.mxu0 0.0
    %2522 = vmatprep.subr.mxu0 0.0
    %2523 = vmatpush1.msra.mxu0 0.0
    %2524 = vmatprep.subr.mxu0 0.0
    %2525 = vmatpush1.msra.mxu0 0.0
    %2526 = vmatprep.subr.mxu0 0.0
    %2527 = vmatpush1.msra.mxu0 0.0
    %2528 = vmatprep.subr.mxu0 0.0
    %2529 = vmatpush1.msra.mxu0 0.0
    %2530 = vmatprep.subr.mxu0 0.0
    %2531 = vmatpush1.msra.mxu0 0.0
    %2532 = vmatprep.subr.mxu0 0.0
    %2533 = vmatpush1.msra.mxu0 0.0
    %2534 = vmatprep.subr.mxu0 0.0
    %2535 = vmatpush1.msra.mxu0 0.0
    %2536 = vmatprep.subr.mxu0 0.0
    %2537 = vmatpush1.msra.mxu0 0.0
    %2538 = vmatprep.subr.mxu0 0.0
    %2539 = vmatpush1.msra.mxu0 0.0
    %2540 = vmatprep.subr.mxu0 0.0
    %2541 = vmatpush1.msra.mxu0 0.0
    %2542 = vmatprep.subr.mxu0 0.0
    %2543 = vmatpush1.msra.mxu0 0.0
    %2544 = vmatprep.subr.mxu0 0.0
    %2545 = vmatpush1.msra.mxu0 %v176
    %2546 = vmatprep.subr.mxu0 0.0
    %2547 = vmatpush1.msra.mxu0 %v175
    %2548 = vmatprep.subr.mxu0 0.0
    %2549 = vmatpush2.msra.mxu0 0.0
    %2550 = vmatprep.subr.mxu0 0.0
    %2551 = vmatpush2.msra.mxu0 0.0
    %2552 = vmatprep.subr.mxu0 0.0
    %2553 = vmatpush2.msra.mxu0 0.0
    %2554 = vmatprep.subr.mxu0 0.0
    %2555 = vmatpush2.msra.mxu0 0.0
    %2556 = vmatprep.subr.mxu0 0.0
    %2557 = vmatpush2.msra.mxu0 0.0
    %2558 = vmatprep.subr.mxu0 0.0
    %2559 = vmatpush2.msra.mxu0 0.0
    %2560 = vmatprep.subr.mxu0 0.0
    %2561 = vmatpush2.msra.mxu0 0.0
    %2562 = vmatprep.subr.mxu0 0.0
    %2563 = vmatpush2.msra.mxu0 0.0
    %2564 = vmatprep.subr.mxu0 0.0
    %2565 = vmatpush2.msra.mxu0 0.0
    %2566 = vmatprep.subr.mxu0 0.0
    %2567 = vmatpush2.msra.mxu0 0.0
    %2568 = vmatprep.subr.mxu0 0.0
    %2569 = vmatpush2.msra.mxu0 0.0
    %2570 = vmatprep.subr.mxu0 0.0
    %2571 = vmatpush2.msra.mxu0 0.0
    %2572 = vmatprep.subr.mxu0 0.0
    %2573 = vmatpush2.msra.mxu0 0.0
    %2574 = vmatprep.subr.mxu0 0.0
    %2575 = vmatpush2.msra.mxu0 0.0
    %2576 = vmatprep.subr.mxu0 0.0
    %2577 = vmatpush2.msra.mxu0 0.0
    %2578 = vmatprep.subr.mxu0 0.0
    %2579 = vmatpush2.msra.mxu0 0.0
    %2580 = vmatprep.mubr.f32.mxu0 0.0
    %2581 = vmatmul.mubr.f32.gmra.mxu0 %v2514
    %v2582 = vpop.f32.mrf.mxu0
    %v2583 = vadd.f32 %v2508, %v2582
    %v2584 = vpop.f32.mrf.mxu0
    %2585 = vdwg.mxu0
    %v2586 = vadd.f32 %v2583, %v198
    %v2587 = vxor.u32 %v2586, 2147483648
    %v2588 = vmul.f32 %v2587, 1.442695
    %v2589 = vpow.pop %v2588
    %v2590 = vadd.f32 %v2589, 1.0
    %v2591 = vrcp.pop %v2590
    %v2592 = vmul.f32 1.0, %v2591
    %v2593 = vtanh.pop %v2586
    %v2594 = vmul.f32 %v2592, %v2090
    %2596 = vrot.lane.b32.xlu0 %v2593, 64
    %v2597 = vpop.permute.xlu0 %2596
    %v2599 = vmul.f32 %v2592, %v2597
    %2601 = vrot.lane.b32.xlu0 %v2599, 32
    %v2602 = vpop.permute.xlu0 %2601
    %v2604 = vadd.f32 %v2594, %v2602
    %v2605 = vtanh.pop %v2604
    %2607 = vrot.lane.b32.xlu0 %v2605, 64
    %v2608 = vpop.permute.xlu0 %2607
    %v2610 = vmul.f32 %v2592, %v2608
    %2612 = vrot.lane.b32.xlu0 %v2610, 32
    %v2613 = vpop.permute.xlu0 %2612
    %v2614 = vsel %vm224, %v2613, 0
    %2616 = vmatprep.subr.mxu0 0.0
    %2617 = vmatpush1.msra.mxu0 0.0
    %2618 = vmatprep.subr.mxu0 0.0
    %2619 = vmatpush1.msra.mxu0 0.0
    %2620 = vmatprep.subr.mxu0 0.0
    %2621 = vmatpush1.msra.mxu0 0.0
    %2622 = vmatprep.subr.mxu0 0.0
    %2623 = vmatpush1.msra.mxu0 0.0
    %2624 = vmatprep.subr.mxu0 0.0
    %2625 = vmatpush1.msra.mxu0 0.0
    %2626 = vmatprep.subr.mxu0 0.0
    %2627 = vmatpush1.msra.mxu0 0.0
    %2628 = vmatprep.subr.mxu0 0.0
    %2629 = vmatpush1.msra.mxu0 0.0
    %2630 = vmatprep.subr.mxu0 0.0
    %2631 = vmatpush1.msra.mxu0 0.0
    %2632 = vmatprep.subr.mxu0 0.0
    %2633 = vmatpush1.msra.mxu0 0.0
    %2634 = vmatprep.subr.mxu0 0.0
    %2635 = vmatpush1.msra.mxu0 0.0
    %2636 = vmatprep.subr.mxu0 0.0
    %2637 = vmatpush1.msra.mxu0 0.0
    %2638 = vmatprep.subr.mxu0 0.0
    %2639 = vmatpush1.msra.mxu0 0.0
    %2640 = vmatprep.subr.mxu0 0.0
    %2641 = vmatpush1.msra.mxu0 %v184
    %2642 = vmatprep.subr.mxu0 0.0
    %2643 = vmatpush1.msra.mxu0 %v183
    %2644 = vmatprep.subr.mxu0 0.0
    %2645 = vmatpush1.msra.mxu0 %v182
    %2646 = vmatprep.subr.mxu0 0.0
    %2647 = vmatpush1.msra.mxu0 %v181
    %2648 = vmatprep.subr.mxu0 0.0
    %2649 = vmatpush2.msra.mxu0 0.0
    %2650 = vmatprep.subr.mxu0 0.0
    %2651 = vmatpush2.msra.mxu0 0.0
    %2652 = vmatprep.subr.mxu0 0.0
    %2653 = vmatpush2.msra.mxu0 0.0
    %2654 = vmatprep.subr.mxu0 0.0
    %2655 = vmatpush2.msra.mxu0 0.0
    %2656 = vmatprep.subr.mxu0 0.0
    %2657 = vmatpush2.msra.mxu0 0.0
    %2658 = vmatprep.subr.mxu0 0.0
    %2659 = vmatpush2.msra.mxu0 0.0
    %2660 = vmatprep.subr.mxu0 0.0
    %2661 = vmatpush2.msra.mxu0 0.0
    %2662 = vmatprep.subr.mxu0 0.0
    %2663 = vmatpush2.msra.mxu0 0.0
    %2664 = vmatprep.subr.mxu0 0.0
    %2665 = vmatpush2.msra.mxu0 0.0
    %2666 = vmatprep.subr.mxu0 0.0
    %2667 = vmatpush2.msra.mxu0 0.0
    %2668 = vmatprep.subr.mxu0 0.0
    %2669 = vmatpush2.msra.mxu0 0.0
    %2670 = vmatprep.subr.mxu0 0.0
    %2671 = vmatpush2.msra.mxu0 0.0
    %2672 = vmatprep.subr.mxu0 0.0
    %2673 = vmatpush2.msra.mxu0 0.0
    %2674 = vmatprep.subr.mxu0 0.0
    %2675 = vmatpush2.msra.mxu0 0.0
    %2676 = vmatprep.subr.mxu0 0.0
    %2677 = vmatpush2.msra.mxu0 0.0
    %2678 = vmatprep.subr.mxu0 0.0
    %2679 = vmatpush2.msra.mxu0 0.0
    %2680 = vmatprep.mubr.f32.mxu0 0.0
    %2681 = vmatmul.mubr.f32.gmra.mxu0 %v2614
    %v2682 = vpop.f32.mrf.mxu0
    %v2683 = vadd.f32 0.0, %v2682
    %v2684 = vpop.f32.mrf.mxu0
    %2685 = vdwg.mxu0
    %v2686 = vadd.f32 %v2683, %v205
    %v2689 = vunpack.c.l.s4 1966171168
    %v2690 = vunpack.c.0.s8 %v2689
    %v2691 = vlaneseq
    %v2692 = vshrl.u32 %v2691, 7
    %v2693 = vsub.s32 %v2690, %v2692
    %v2694 = vrot.slane %v2686, %v2693
    %v2695 = vcombine.high %v2694, %v2694
    %v2697 = vunpack.c.l.s4 1966171168
    %v2698 = vunpack.c.0.s8 %v2697
    %v2699 = vlaneseq
    %v2700 = vshrl.u32 %v2699, 7
    %v2701 = vsub.s32 %v2698, %v2700
    %v2702 = vrot.slane %v2694, %v2701
    %v2704 = vunpack.c.l.s4 1966171168
    %v2705 = vunpack.c.0.s8 %v2704
    %v2706 = vlaneseq
    %v2707 = vshrl.u32 %v2706, 7
    %v2708 = vsub.s32 %v2705, %v2707
    %v2709 = vrot.slane %v2695, %v2708
    %v2710 = vlaneseq
    %v2711 = vshrl.u32 %v2710, 7
    %v2712 = vsub.s32 0, %v2711
    %v2713 = vrot.slane %v2702, %v2712
    %v2714 = vlaneseq
    %v2715 = vshrl.u32 %v2714, 7
    %v2716 = vsub.s32 0, %v2715
    %v2717 = vrot.slane %v2709, %v2716
    %v2720 = vadd.f32 %v2713, %v298
    %v2721 = vadd.f32 %v2717, %v303
    %v2722 = vtanh.pop %v2720
    %v2723 = vtanh.pop %v2721
    %v2724 = vmul.f32 %v2722, %v604
    %v2725 = vmul.f32 %v2723, %v604
    %v2726 = vsel %vm224, %v2724, 0.0
    %2727 = vadd.xlane.f32.xlu0 %v2726
    %v2728 = vpop.xlane.xlu0 %2727
    %v2729 = vsel %vm224, %v2725, 0.0
    %2730 = vadd.xlane.f32.xlu0 %v2729
    %v2731 = vpop.xlane.xlu0 %2730
    %vm2732 = vcmp.eq.f32.partialorder %v2376, 0.0
    %v2735 = vlaneseq
    %v2736 = vshrl.u32 %v2735, 7
    %v2737 = vsub.s32 %v307, %v2736
    %v2738 = vrot.slane %v2728, %v2737
    %v2739 = vlaneseq
    %v2740 = vshrl.u32 %v2739, 7
    %v2741 = vsub.s32 %v307, %v2740
    %v2742 = vrot.slane %v2731, %v2741
    %v2743 = vsel %vm627, %v2742, %v2738
    %v2745 = vsel %vm2732, -inf, %v2743
    %v2746 = vsel %vm630, %v2745, -inf
    %2747 = vmax.xlane.f32.xlu0 %v2746
    %v2748 = vpop.xlane.xlu0 %2747
    %v2749 = vsub.f32 %v2745, %v2748
    %v2750 = vmul.f32 %v2749, 1.442695
    %v2751 = vpow.pop %v2750
    %v2752 = vsel %vm630, %v2751, 0.0
    %2753 = vadd.xlane.f32.xlu0 %v2752
    %v2754 = vpop.xlane.xlu0 %2753
    %v2755 = vrcp.pop %v2754
    %v2756 = vmul.f32 1.0, %v2755
    %v2757 = vmul.f32 %v2751, %v2756
    %v2758 = vlaneseq
    %v2759 = vshrl.u32 %v2758, 7
    %v2760 = vsub.s32 0, %v2759
    %v2761 = vrot.slane %v2757, %v2760
    %2763 = vbcast.lane.b32.xlu0 %v2761, 256
    %v2764 = vpop.permute.xlu0 %2763
    %v2765 = vlaneseq
    %v2766 = vshrl.u32 %v2765, 7
    %v2767 = vsub.s32 1, %v2766
    %v2768 = vrot.slane %v2757, %v2767
    %2770 = vbcast.lane.b32.xlu0 %v2768, 256
    %v2771 = vpop.permute.xlu0 %2770
    %v2772 = vmul.f32 %v2764, %v298
    %v2773 = vmul.f32 %v2771, %v303
    %v2774 = vsel %vm224, %v2772, 0.0
    %v2775 = vrot.slane %v2774, 4
    %v2776 = vadd.f32 %v2774, %v2775
    %v2777 = vrot.slane %v2776, 2
    %v2778 = vadd.f32 %v2776, %v2777
    %v2779 = vrot.slane %v2778, 1
    %v2780 = vadd.f32 %v2778, %v2779
    %v2781 = vsel %vm224, %v2773, 0.0
    %v2782 = vrot.slane %v2781, 4
    %v2783 = vadd.f32 %v2781, %v2782
    %v2784 = vrot.slane %v2783, 2
    %v2785 = vadd.f32 %v2783, %v2784
    %v2786 = vrot.slane %v2785, 1
    %v2787 = vadd.f32 %v2785, %v2786
    %v2790 = vsel %vm627, %v2787, %v2780
    %2792 = vrot.lane.b32.xlu0 %v2683, 96
    %v2793 = vpop.permute.xlu0 %2792
    %v2795 = vsel %vm224, %v2790, 0
    %2797 = vmatprep.subr.mxu0 0.0
    %2798 = vmatpush1.msra.mxu0 0.0
    %2799 = vmatprep.subr.mxu0 0.0
    %2800 = vmatpush1.msra.mxu0 0.0
    %2801 = vmatprep.subr.mxu0 0.0
    %2802 = vmatpush1.msra.mxu0 0.0
    %2803 = vmatprep.subr.mxu0 0.0
    %2804 = vmatpush1.msra.mxu0 0.0
    %2805 = vmatprep.subr.mxu0 0.0
    %2806 = vmatpush1.msra.mxu0 0.0
    %2807 = vmatprep.subr.mxu0 0.0
    %2808 = vmatpush1.msra.mxu0 0.0
    %2809 = vmatprep.subr.mxu0 0.0
    %2810 = vmatpush1.msra.mxu0 0.0
    %2811 = vmatprep.subr.mxu0 0.0
    %2812 = vmatpush1.msra.mxu0 0.0
    %2813 = vmatprep.subr.mxu0 0.0
    %2814 = vmatpush1.msra.mxu0 0.0
    %2815 = vmatprep.subr.mxu0 0.0
    %2816 = vmatpush1.msra.mxu0 0.0
    %2817 = vmatprep.subr.mxu0 0.0
    %2818 = vmatpush1.msra.mxu0 0.0
    %2819 = vmatprep.subr.mxu0 0.0
    %2820 = vmatpush1.msra.mxu0 0.0
    %2821 = vmatprep.subr.mxu0 0.0
    %2822 = vmatpush1.msra.mxu0 %v188
    %2823 = vmatprep.subr.mxu0 0.0
    %2824 = vmatpush1.msra.mxu0 %v187
    %2825 = vmatprep.subr.mxu0 0.0
    %2826 = vmatpush1.msra.mxu0 %v186
    %2827 = vmatprep.subr.mxu0 0.0
    %2828 = vmatpush1.msra.mxu0 %v185
    %2829 = vmatprep.subr.mxu0 0.0
    %2830 = vmatpush2.msra.mxu0 0.0
    %2831 = vmatprep.subr.mxu0 0.0
    %2832 = vmatpush2.msra.mxu0 0.0
    %2833 = vmatprep.subr.mxu0 0.0
    %2834 = vmatpush2.msra.mxu0 0.0
    %2835 = vmatprep.subr.mxu0 0.0
    %2836 = vmatpush2.msra.mxu0 0.0
    %2837 = vmatprep.subr.mxu0 0.0
    %2838 = vmatpush2.msra.mxu0 0.0
    %2839 = vmatprep.subr.mxu0 0.0
    %2840 = vmatpush2.msra.mxu0 0.0
    %2841 = vmatprep.subr.mxu0 0.0
    %2842 = vmatpush2.msra.mxu0 0.0
    %2843 = vmatprep.subr.mxu0 0.0
    %2844 = vmatpush2.msra.mxu0 0.0
    %2845 = vmatprep.subr.mxu0 0.0
    %2846 = vmatpush2.msra.mxu0 0.0
    %2847 = vmatprep.subr.mxu0 0.0
    %2848 = vmatpush2.msra.mxu0 0.0
    %2849 = vmatprep.subr.mxu0 0.0
    %2850 = vmatpush2.msra.mxu0 0.0
    %2851 = vmatprep.subr.mxu0 0.0
    %2852 = vmatpush2.msra.mxu0 0.0
    %2853 = vmatprep.subr.mxu0 0.0
    %2854 = vmatpush2.msra.mxu0 0.0
    %2855 = vmatprep.subr.mxu0 0.0
    %2856 = vmatpush2.msra.mxu0 0.0
    %2857 = vmatprep.subr.mxu0 0.0
    %2858 = vmatpush2.msra.mxu0 0.0
    %2859 = vmatprep.subr.mxu0 0.0
    %2860 = vmatpush2.msra.mxu0 0.0
    %2861 = vmatprep.mubr.f32.mxu0 0.0
    %2862 = vmatmul.mubr.f32.gmra.mxu0 %v2795
    %v2863 = vpop.f32.mrf.mxu0
    %v2864 = vadd.f32 %v2793, %v2863
    %v2865 = vpop.f32.mrf.mxu0
    %2866 = vdwg.mxu0
    %v2867 = vadd.f32 %v2864, %v212
    %v2868 = vtanh.pop %v2867
    %v2869 = vsel %vm630, %v2757, -inf
    %2870 = vmax.xlane.f32.xlu0 %v2869
    %v2871 = vpop.xlane.xlu0 %2870
    %vm2872 = vcmp.eq.f32.partialorder %v2757, %v2871
    %v2873 = vsel %vm2872, %v307, 8
    %v2874 = vsel %vm630, %v2873, 2147483647
    %v2875 = vand.u32 %v2874, 65535
    %v2876 = vshra.s32 %v2874, 16
    %v2877 = vcvt.s32.f32 %v2875
    %v2878 = vcvt.s32.f32 %v2876
    %2879 = vmin.xlane.f32.xlu0 %v2878
    %v2880 = vpop.xlane.xlu0 %2879
    %vm2881 = vcmp.eq.f32.partialorder %v2878, %v2880
    %v2882 = vsel %vm2881, %v2877, inf
    %2883 = vmin.xlane.f32.xlu0 %v2882
    %v2884 = vpop.xlane.xlu0 %2883
    %v2885 = vcvt.f32.s32 %v2884
    %v2886 = vcvt.f32.s32 %v2880
    %v2887 = vshll.u32 %v2886, 16
    %v2888 = vadd.s32 %v2887, %v2885
    %vm2889 = vcmp.eq.s32.totalorder %v307, %v2888
    %v2890 = vsel %vm2889, 0.0, %v2376
    %v2891 = vsel %vm2889, 1, 0
    %v2892 = vcvt.s32.f32 %v2891
    %v2893 = vlaneseq
    %v2894 = vshrl.u32 %v2893, 7
    %v2895 = vsub.s32 0, %v2894
    %v2896 = vrot.slane %v2892, %v2895
    %2898 = vbcast.lane.b32.xlu0 %v2896, 256
    %v2899 = vpop.permute.xlu0 %2898
    %v2900 = vlaneseq
    %v2901 = vshrl.u32 %v2900, 7
    %v2902 = vsub.s32 1, %v2901
    %v2903 = vrot.slane %v2892, %v2902
    %2905 = vbcast.lane.b32.xlu0 %v2903, 256
    %v2906 = vpop.permute.xlu0 %2905
    %v2907 = vmul.f32 %v2899, %v173
    %v2908 = vmul.f32 %v2906, %v174
    %v2909 = vsel %vm384, %v2907, 0.0
    %v2910 = vrot.slane %v2909, 4
    %v2911 = vadd.f32 %v2909, %v2910
    %v2912 = vrot.slane %v2911, 2
    %v2913 = vadd.f32 %v2911, %v2912
    %v2914 = vrot.slane %v2913, 1
    %v2915 = vadd.f32 %v2913, %v2914
    %v2916 = vsel %vm384, %v2908, 0.0
    %v2917 = vrot.slane %v2916, 4
    %v2918 = vadd.f32 %v2916, %v2917
    %v2919 = vrot.slane %v2918, 2
    %v2920 = vadd.f32 %v2918, %v2919
    %v2921 = vrot.slane %v2920, 1
    %v2922 = vadd.f32 %v2920, %v2921
    %v2925 = vunpack.c.l.s4 1966171168
    %v2926 = vunpack.c.0.s8 %v2925
    %v2927 = vlaneseq
    %v2928 = vshrl.u32 %v2927, 7
    %v2929 = vsub.s32 %v2926, %v2928
    %v2930 = vrot.slane %v2757, %v2929
    %v2931 = vcombine.high %v2930, %v2930
    %v2933 = vunpack.c.l.s4 1966171168
    %v2934 = vunpack.c.0.s8 %v2933
    %v2935 = vlaneseq
    %v2936 = vshrl.u32 %v2935, 7
    %v2937 = vsub.s32 %v2934, %v2936
    %v2938 = vrot.slane %v2930, %v2937
    %v2940 = vunpack.c.l.s4 1966171168
    %v2941 = vunpack.c.0.s8 %v2940
    %v2942 = vlaneseq
    %v2943 = vshrl.u32 %v2942, 7
    %v2944 = vsub.s32 %v2941, %v2943
    %v2945 = vrot.slane %v2931, %v2944
    %2948 = vst.msk [vmem:[#allocation17 + $0x4] sm:$0x1] %vm891, %v2938
    %2949 = vst.msk [vmem:[#allocation17 + $0xc] sm:$0x1] %vm891, %v2945
    %vm2950 = vcmask 33824
    %2951 = vst.msk [vmem:[#allocation18] sm:$0x3] %vm2950, %v2888
    %v2953 = vsel %vm224, %v2868, 0
    %2955 = vmatprep.subr.mxu0 0.0
    %2956 = vmatpush1.msra.mxu0 0.0
    %2957 = vmatprep.subr.mxu0 0.0
    %2958 = vmatpush1.msra.mxu0 0.0
    %2959 = vmatprep.subr.mxu0 0.0
    %2960 = vmatpush1.msra.mxu0 0.0
    %2961 = vmatprep.subr.mxu0 0.0
    %2962 = vmatpush1.msra.mxu0 0.0
    %2963 = vmatprep.subr.mxu0 0.0
    %2964 = vmatpush1.msra.mxu0 0.0
    %2965 = vmatprep.subr.mxu0 0.0
    %2966 = vmatpush1.msra.mxu0 0.0
    %2967 = vmatprep.subr.mxu0 0.0
    %2968 = vmatpush1.msra.mxu0 0.0
    %2969 = vmatprep.subr.mxu0 0.0
    %2970 = vmatpush1.msra.mxu0 0.0
    %2971 = vmatprep.subr.mxu0 0.0
    %2972 = vmatpush1.msra.mxu0 0.0
    %2973 = vmatprep.subr.mxu0 0.0
    %2974 = vmatpush1.msra.mxu0 0.0
    %2975 = vmatprep.subr.mxu0 0.0
    %2976 = vmatpush1.msra.mxu0 0.0
    %2977 = vmatprep.subr.mxu0 0.0
    %2978 = vmatpush1.msra.mxu0 0.0
    %2979 = vmatprep.subr.mxu0 0.0
    %2980 = vmatpush1.msra.mxu0 %v180
    %2981 = vmatprep.subr.mxu0 0.0
    %2982 = vmatpush1.msra.mxu0 %v179
    %2983 = vmatprep.subr.mxu0 0.0
    %2984 = vmatpush1.msra.mxu0 %v178
    %2985 = vmatprep.subr.mxu0 0.0
    %2986 = vmatpush1.msra.mxu0 %v177
    %2987 = vmatprep.subr.mxu0 0.0
    %2988 = vmatpush2.msra.mxu0 0.0
    %2989 = vmatprep.subr.mxu0 0.0
    %2990 = vmatpush2.msra.mxu0 0.0
    %2991 = vmatprep.subr.mxu0 0.0
    %2992 = vmatpush2.msra.mxu0 0.0
    %2993 = vmatprep.subr.mxu0 0.0
    %2994 = vmatpush2.msra.mxu0 0.0
    %2995 = vmatprep.subr.mxu0 0.0
    %2996 = vmatpush2.msra.mxu0 0.0
    %2997 = vmatprep.subr.mxu0 0.0
    %2998 = vmatpush2.msra.mxu0 0.0
    %2999 = vmatprep.subr.mxu0 0.0
    %3000 = vmatpush2.msra.mxu0 0.0
    %3001 = vmatprep.subr.mxu0 0.0
    %3002 = vmatpush2.msra.mxu0 0.0
    %3003 = vmatprep.subr.mxu0 0.0
    %3004 = vmatpush2.msra.mxu0 0.0
    %3005 = vmatprep.subr.mxu0 0.0
    %3006 = vmatpush2.msra.mxu0 0.0
    %3007 = vmatprep.subr.mxu0 0.0
    %3008 = vmatpush2.msra.mxu0 0.0
    %3009 = vmatprep.subr.mxu0 0.0
    %3010 = vmatpush2.msra.mxu0 0.0
    %3011 = vmatprep.subr.mxu0 0.0
    %3012 = vmatpush2.msra.mxu0 0.0
    %3013 = vmatprep.subr.mxu0 0.0
    %3014 = vmatpush2.msra.mxu0 0.0
    %3015 = vmatprep.subr.mxu0 0.0
    %3016 = vmatpush2.msra.mxu0 0.0
    %3017 = vmatprep.subr.mxu0 0.0
    %3018 = vmatpush2.msra.mxu0 0.0
    %3019 = vmatprep.mubr.f32.mxu0 0.0
    %3020 = vmatmul.mubr.f32.gmra.mxu0 %v2953
    %v3021 = vpop.f32.mrf.mxu0
    %v3022 = vadd.f32 0.0, %v3021
    %v3023 = vpop.f32.mrf.mxu0
    %3024 = vdwg.mxu0
    %v3027 = vsel %vm627, %v2922, %v2915
    %v3028 = vsel %vm384, %v3027, 0
    %3030 = vmatprep.subr.mxu0 0.0
    %3031 = vmatpush1.msra.mxu0 0.0
    %3032 = vmatprep.subr.mxu0 0.0
    %3033 = vmatpush1.msra.mxu0 0.0
    %3034 = vmatprep.subr.mxu0 0.0
    %3035 = vmatpush1.msra.mxu0 0.0
    %3036 = vmatprep.subr.mxu0 0.0
    %3037 = vmatpush1.msra.mxu0 0.0
    %3038 = vmatprep.subr.mxu0 0.0
    %3039 = vmatpush1.msra.mxu0 0.0
    %3040 = vmatprep.subr.mxu0 0.0
    %3041 = vmatpush1.msra.mxu0 0.0
    %3042 = vmatprep.subr.mxu0 0.0
    %3043 = vmatpush1.msra.mxu0 0.0
    %3044 = vmatprep.subr.mxu0 0.0
    %3045 = vmatpush1.msra.mxu0 0.0
    %3046 = vmatprep.subr.mxu0 0.0
    %3047 = vmatpush1.msra.mxu0 0.0
    %3048 = vmatprep.subr.mxu0 0.0
    %3049 = vmatpush1.msra.mxu0 0.0
    %3050 = vmatprep.subr.mxu0 0.0
    %3051 = vmatpush1.msra.mxu0 0.0
    %3052 = vmatprep.subr.mxu0 0.0
    %3053 = vmatpush1.msra.mxu0 0.0
    %3054 = vmatprep.subr.mxu0 0.0
    %3055 = vmatpush1.msra.mxu0 0.0
    %3056 = vmatprep.subr.mxu0 0.0
    %3057 = vmatpush1.msra.mxu0 0.0
    %3058 = vmatprep.subr.mxu0 0.0
    %3059 = vmatpush1.msra.mxu0 %v176
    %3060 = vmatprep.subr.mxu0 0.0
    %3061 = vmatpush1.msra.mxu0 %v175
    %3062 = vmatprep.subr.mxu0 0.0
    %3063 = vmatpush2.msra.mxu0 0.0
    %3064 = vmatprep.subr.mxu0 0.0
    %3065 = vmatpush2.msra.mxu0 0.0
    %3066 = vmatprep.subr.mxu0 0.0
    %3067 = vmatpush2.msra.mxu0 0.0
    %3068 = vmatprep.subr.mxu0 0.0
    %3069 = vmatpush2.msra.mxu0 0.0
    %3070 = vmatprep.subr.mxu0 0.0
    %3071 = vmatpush2.msra.mxu0 0.0
    %3072 = vmatprep.subr.mxu0 0.0
    %3073 = vmatpush2.msra.mxu0 0.0
    %3074 = vmatprep.subr.mxu0 0.0
    %3075 = vmatpush2.msra.mxu0 0.0
    %3076 = vmatprep.subr.mxu0 0.0
    %3077 = vmatpush2.msra.mxu0 0.0
    %3078 = vmatprep.subr.mxu0 0.0
    %3079 = vmatpush2.msra.mxu0 0.0
    %3080 = vmatprep.subr.mxu0 0.0
    %3081 = vmatpush2.msra.mxu0 0.0
    %3082 = vmatprep.subr.mxu0 0.0
    %3083 = vmatpush2.msra.mxu0 0.0
    %3084 = vmatprep.subr.mxu0 0.0
    %3085 = vmatpush2.msra.mxu0 0.0
    %3086 = vmatprep.subr.mxu0 0.0
    %3087 = vmatpush2.msra.mxu0 0.0
    %3088 = vmatprep.subr.mxu0 0.0
    %3089 = vmatpush2.msra.mxu0 0.0
    %3090 = vmatprep.subr.mxu0 0.0
    %3091 = vmatpush2.msra.mxu0 0.0
    %3092 = vmatprep.subr.mxu0 0.0
    %3093 = vmatpush2.msra.mxu0 0.0
    %3094 = vmatprep.mubr.f32.mxu0 0.0
    %3095 = vmatmul.mubr.f32.gmra.mxu0 %v3028
    %v3096 = vpop.f32.mrf.mxu0
    %v3097 = vadd.f32 %v3022, %v3096
    %v3098 = vpop.f32.mrf.mxu0
    %3099 = vdwg.mxu0
    %v3100 = vadd.f32 %v3097, %v198
    %v3101 = vxor.u32 %v3100, 2147483648
    %v3102 = vmul.f32 %v3101, 1.442695
    %v3103 = vpow.pop %v3102
    %v3104 = vadd.f32 %v3103, 1.0
    %v3105 = vrcp.pop %v3104
    %v3106 = vmul.f32 1.0, %v3105
    %v3107 = vtanh.pop %v3100
    %v3108 = vmul.f32 %v3106, %v2604
    %3110 = vrot.lane.b32.xlu0 %v3107, 64
    %v3111 = vpop.permute.xlu0 %3110
    %v3113 = vmul.f32 %v3106, %v3111
    %3115 = vrot.lane.b32.xlu0 %v3113, 32
    %v3116 = vpop.permute.xlu0 %3115
    %v3118 = vadd.f32 %v3108, %v3116
    %v3119 = vtanh.pop %v3118
    %3121 = vrot.lane.b32.xlu0 %v3119, 64
    %v3122 = vpop.permute.xlu0 %3121
    %v3124 = vmul.f32 %v3106, %v3122
    %3126 = vrot.lane.b32.xlu0 %v3124, 32
    %v3127 = vpop.permute.xlu0 %3126
    %v3128 = vsel %vm224, %v3127, 0
    %3130 = vmatprep.subr.mxu0 0.0
    %3131 = vmatpush1.msra.mxu0 0.0
    %3132 = vmatprep.subr.mxu0 0.0
    %3133 = vmatpush1.msra.mxu0 0.0
    %3134 = vmatprep.subr.mxu0 0.0
    %3135 = vmatpush1.msra.mxu0 0.0
    %3136 = vmatprep.subr.mxu0 0.0
    %3137 = vmatpush1.msra.mxu0 0.0
    %3138 = vmatprep.subr.mxu0 0.0
    %3139 = vmatpush1.msra.mxu0 0.0
    %3140 = vmatprep.subr.mxu0 0.0
    %3141 = vmatpush1.msra.mxu0 0.0
    %3142 = vmatprep.subr.mxu0 0.0
    %3143 = vmatpush1.msra.mxu0 0.0
    %3144 = vmatprep.subr.mxu0 0.0
    %3145 = vmatpush1.msra.mxu0 0.0
    %3146 = vmatprep.subr.mxu0 0.0
    %3147 = vmatpush1.msra.mxu0 0.0
    %3148 = vmatprep.subr.mxu0 0.0
    %3149 = vmatpush1.msra.mxu0 0.0
    %3150 = vmatprep.subr.mxu0 0.0
    %3151 = vmatpush1.msra.mxu0 0.0
    %3152 = vmatprep.subr.mxu0 0.0
    %3153 = vmatpush1.msra.mxu0 0.0
    %3154 = vmatprep.subr.mxu0 0.0
    %3155 = vmatpush1.msra.mxu0 %v184
    %3156 = vmatprep.subr.mxu0 0.0
    %3157 = vmatpush1.msra.mxu0 %v183
    %3158 = vmatprep.subr.mxu0 0.0
    %3159 = vmatpush1.msra.mxu0 %v182
    %3160 = vmatprep.subr.mxu0 0.0
    %3161 = vmatpush1.msra.mxu0 %v181
    %3162 = vmatprep.subr.mxu0 0.0
    %3163 = vmatpush2.msra.mxu0 0.0
    %3164 = vmatprep.subr.mxu0 0.0
    %3165 = vmatpush2.msra.mxu0 0.0
    %3166 = vmatprep.subr.mxu0 0.0
    %3167 = vmatpush2.msra.mxu0 0.0
    %3168 = vmatprep.subr.mxu0 0.0
    %3169 = vmatpush2.msra.mxu0 0.0
    %3170 = vmatprep.subr.mxu0 0.0
    %3171 = vmatpush2.msra.mxu0 0.0
    %3172 = vmatprep.subr.mxu0 0.0
    %3173 = vmatpush2.msra.mxu0 0.0
    %3174 = vmatprep.subr.mxu0 0.0
    %3175 = vmatpush2.msra.mxu0 0.0
    %3176 = vmatprep.subr.mxu0 0.0
    %3177 = vmatpush2.msra.mxu0 0.0
    %3178 = vmatprep.subr.mxu0 0.0
    %3179 = vmatpush2.msra.mxu0 0.0
    %3180 = vmatprep.subr.mxu0 0.0
    %3181 = vmatpush2.msra.mxu0 0.0
    %3182 = vmatprep.subr.mxu0 0.0
    %3183 = vmatpush2.msra.mxu0 0.0
    %3184 = vmatprep.subr.mxu0 0.0
    %3185 = vmatpush2.msra.mxu0 0.0
    %3186 = vmatprep.subr.mxu0 0.0
    %3187 = vmatpush2.msra.mxu0 0.0
    %3188 = vmatprep.subr.mxu0 0.0
    %3189 = vmatpush2.msra.mxu0 0.0
    %3190 = vmatprep.subr.mxu0 0.0
    %3191 = vmatpush2.msra.mxu0 0.0
    %3192 = vmatprep.subr.mxu0 0.0
    %3193 = vmatpush2.msra.mxu0 0.0
    %3194 = vmatprep.mubr.f32.mxu0 0.0
    %3195 = vmatmul.mubr.f32.gmra.mxu0 %v3128
    %v3196 = vpop.f32.mrf.mxu0
    %v3197 = vadd.f32 0.0, %v3196
    %v3198 = vpop.f32.mrf.mxu0
    %3199 = vdwg.mxu0
    %v3200 = vadd.f32 %v3197, %v205
    %v3203 = vunpack.c.l.s4 1966171168
    %v3204 = vunpack.c.0.s8 %v3203
    %v3205 = vlaneseq
    %v3206 = vshrl.u32 %v3205, 7
    %v3207 = vsub.s32 %v3204, %v3206
    %v3208 = vrot.slane %v3200, %v3207
    %v3209 = vcombine.high %v3208, %v3208
    %v3211 = vunpack.c.l.s4 1966171168
    %v3212 = vunpack.c.0.s8 %v3211
    %v3213 = vlaneseq
    %v3214 = vshrl.u32 %v3213, 7
    %v3215 = vsub.s32 %v3212, %v3214
    %v3216 = vrot.slane %v3208, %v3215
    %v3218 = vunpack.c.l.s4 1966171168
    %v3219 = vunpack.c.0.s8 %v3218
    %v3220 = vlaneseq
    %v3221 = vshrl.u32 %v3220, 7
    %v3222 = vsub.s32 %v3219, %v3221
    %v3223 = vrot.slane %v3209, %v3222
    %v3224 = vlaneseq
    %v3225 = vshrl.u32 %v3224, 7
    %v3226 = vsub.s32 0, %v3225
    %v3227 = vrot.slane %v3216, %v3226
    %v3228 = vlaneseq
    %v3229 = vshrl.u32 %v3228, 7
    %v3230 = vsub.s32 0, %v3229
    %v3231 = vrot.slane %v3223, %v3230
    %v3234 = vadd.f32 %v3227, %v298
    %v3235 = vadd.f32 %v3231, %v303
    %v3236 = vtanh.pop %v3234
    %v3237 = vtanh.pop %v3235
    %v3238 = vmul.f32 %v3236, %v604
    %v3239 = vmul.f32 %v3237, %v604
    %v3240 = vsel %vm224, %v3238, 0.0
    %3241 = vadd.xlane.f32.xlu0 %v3240
    %v3242 = vpop.xlane.xlu0 %3241
    %v3243 = vsel %vm224, %v3239, 0.0
    %3244 = vadd.xlane.f32.xlu0 %v3243
    %v3245 = vpop.xlane.xlu0 %3244
    %vm3246 = vcmp.eq.f32.partialorder %v2890, 0.0
    %v3249 = vlaneseq
    %v3250 = vshrl.u32 %v3249, 7
    %v3251 = vsub.s32 %v307, %v3250
    %v3252 = vrot.slane %v3242, %v3251
    %v3253 = vlaneseq
    %v3254 = vshrl.u32 %v3253, 7
    %v3255 = vsub.s32 %v307, %v3254
    %v3256 = vrot.slane %v3245, %v3255
    %v3257 = vsel %vm627, %v3256, %v3252
    %v3259 = vsel %vm3246, -inf, %v3257
    %v3260 = vsel %vm630, %v3259, -inf
    %3261 = vmax.xlane.f32.xlu0 %v3260
    %v3262 = vpop.xlane.xlu0 %3261
    %v3263 = vsub.f32 %v3259, %v3262
    %v3264 = vmul.f32 %v3263, 1.442695
    %v3265 = vpow.pop %v3264
    %v3266 = vsel %vm630, %v3265, 0.0
    %3267 = vadd.xlane.f32.xlu0 %v3266
    %v3268 = vpop.xlane.xlu0 %3267
    %v3269 = vrcp.pop %v3268
    %v3270 = vmul.f32 1.0, %v3269
    %v3271 = vmul.f32 %v3265, %v3270
    %v3272 = vlaneseq
    %v3273 = vshrl.u32 %v3272, 7
    %v3274 = vsub.s32 0, %v3273
    %v3275 = vrot.slane %v3271, %v3274
    %3277 = vbcast.lane.b32.xlu0 %v3275, 256
    %v3278 = vpop.permute.xlu0 %3277
    %v3279 = vlaneseq
    %v3280 = vshrl.u32 %v3279, 7
    %v3281 = vsub.s32 1, %v3280
    %v3282 = vrot.slane %v3271, %v3281
    %3284 = vbcast.lane.b32.xlu0 %v3282, 256
    %v3285 = vpop.permute.xlu0 %3284
    %v3286 = vmul.f32 %v3278, %v298
    %v3287 = vmul.f32 %v3285, %v303
    %v3288 = vsel %vm224, %v3286, 0.0
    %v3289 = vrot.slane %v3288, 4
    %v3290 = vadd.f32 %v3288, %v3289
    %v3291 = vrot.slane %v3290, 2
    %v3292 = vadd.f32 %v3290, %v3291
    %v3293 = vrot.slane %v3292, 1
    %v3294 = vadd.f32 %v3292, %v3293
    %v3295 = vsel %vm224, %v3287, 0.0
    %v3296 = vrot.slane %v3295, 4
    %v3297 = vadd.f32 %v3295, %v3296
    %v3298 = vrot.slane %v3297, 2
    %v3299 = vadd.f32 %v3297, %v3298
    %v3300 = vrot.slane %v3299, 1
    %v3301 = vadd.f32 %v3299, %v3300
    %v3304 = vsel %vm627, %v3301, %v3294
    %3306 = vrot.lane.b32.xlu0 %v3197, 96
    %v3307 = vpop.permute.xlu0 %3306
    %v3309 = vsel %vm224, %v3304, 0
    %3311 = vmatprep.subr.mxu0 0.0
    %3312 = vmatpush1.msra.mxu0 0.0
    %3313 = vmatprep.subr.mxu0 0.0
    %3314 = vmatpush1.msra.mxu0 0.0
    %3315 = vmatprep.subr.mxu0 0.0
    %3316 = vmatpush1.msra.mxu0 0.0
    %3317 = vmatprep.subr.mxu0 0.0
    %3318 = vmatpush1.msra.mxu0 0.0
    %3319 = vmatprep.subr.mxu0 0.0
    %3320 = vmatpush1.msra.mxu0 0.0
    %3321 = vmatprep.subr.mxu0 0.0
    %3322 = vmatpush1.msra.mxu0 0.0
    %3323 = vmatprep.subr.mxu0 0.0
    %3324 = vmatpush1.msra.mxu0 0.0
    %3325 = vmatprep.subr.mxu0 0.0
    %3326 = vmatpush1.msra.mxu0 0.0
    %3327 = vmatprep.subr.mxu0 0.0
    %3328 = vmatpush1.msra.mxu0 0.0
    %3329 = vmatprep.subr.mxu0 0.0
    %3330 = vmatpush1.msra.mxu0 0.0
    %3331 = vmatprep.subr.mxu0 0.0
    %3332 = vmatpush1.msra.mxu0 0.0
    %3333 = vmatprep.subr.mxu0 0.0
    %3334 = vmatpush1.msra.mxu0 0.0
    %3335 = vmatprep.subr.mxu0 0.0
    %3336 = vmatpush1.msra.mxu0 %v188
    %3337 = vmatprep.subr.mxu0 0.0
    %3338 = vmatpush1.msra.mxu0 %v187
    %3339 = vmatprep.subr.mxu0 0.0
    %3340 = vmatpush1.msra.mxu0 %v186
    %3341 = vmatprep.subr.mxu0 0.0
    %3342 = vmatpush1.msra.mxu0 %v185
    %3343 = vmatprep.subr.mxu0 0.0
    %3344 = vmatpush2.msra.mxu0 0.0
    %3345 = vmatprep.subr.mxu0 0.0
    %3346 = vmatpush2.msra.mxu0 0.0
    %3347 = vmatprep.subr.mxu0 0.0
    %3348 = vmatpush2.msra.mxu0 0.0
    %3349 = vmatprep.subr.mxu0 0.0
    %3350 = vmatpush2.msra.mxu0 0.0
    %3351 = vmatprep.subr.mxu0 0.0
    %3352 = vmatpush2.msra.mxu0 0.0
    %3353 = vmatprep.subr.mxu0 0.0
    %3354 = vmatpush2.msra.mxu0 0.0
    %3355 = vmatprep.subr.mxu0 0.0
    %3356 = vmatpush2.msra.mxu0 0.0
    %3357 = vmatprep.subr.mxu0 0.0
    %3358 = vmatpush2.msra.mxu0 0.0
    %3359 = vmatprep.subr.mxu0 0.0
    %3360 = vmatpush2.msra.mxu0 0.0
    %3361 = vmatprep.subr.mxu0 0.0
    %3362 = vmatpush2.msra.mxu0 0.0
    %3363 = vmatprep.subr.mxu0 0.0
    %3364 = vmatpush2.msra.mxu0 0.0
    %3365 = vmatprep.subr.mxu0 0.0
    %3366 = vmatpush2.msra.mxu0 0.0
    %3367 = vmatprep.subr.mxu0 0.0
    %3368 = vmatpush2.msra.mxu0 0.0
    %3369 = vmatprep.subr.mxu0 0.0
    %3370 = vmatpush2.msra.mxu0 0.0
    %3371 = vmatprep.subr.mxu0 0.0
    %3372 = vmatpush2.msra.mxu0 0.0
    %3373 = vmatprep.subr.mxu0 0.0
    %3374 = vmatpush2.msra.mxu0 0.0
    %3375 = vmatprep.mubr.f32.mxu0 0.0
    %3376 = vmatmul.mubr.f32.gmra.mxu0 %v3309
    %v3377 = vpop.f32.mrf.mxu0
    %v3378 = vadd.f32 %v3307, %v3377
    %v3379 = vpop.f32.mrf.mxu0
    %3380 = vdwg.mxu0
    %v3381 = vadd.f32 %v3378, %v212
    %v3382 = vtanh.pop %v3381
    %v3383 = vsel %vm630, %v3271, -inf
    %3384 = vmax.xlane.f32.xlu0 %v3383
    %v3385 = vpop.xlane.xlu0 %3384
    %vm3386 = vcmp.eq.f32.partialorder %v3271, %v3385
    %v3387 = vsel %vm3386, %v307, 8
    %v3388 = vsel %vm630, %v3387, 2147483647
    %v3389 = vand.u32 %v3388, 65535
    %v3390 = vshra.s32 %v3388, 16
    %v3391 = vcvt.s32.f32 %v3389
    %v3392 = vcvt.s32.f32 %v3390
    %3393 = vmin.xlane.f32.xlu0 %v3392
    %v3394 = vpop.xlane.xlu0 %3393
    %vm3395 = vcmp.eq.f32.partialorder %v3392, %v3394
    %v3396 = vsel %vm3395, %v3391, inf
    %3397 = vmin.xlane.f32.xlu0 %v3396
    %v3398 = vpop.xlane.xlu0 %3397
    %v3399 = vcvt.f32.s32 %v3398
    %v3400 = vcvt.f32.s32 %v3394
    %v3401 = vshll.u32 %v3400, 16
    %v3402 = vadd.s32 %v3401, %v3399
    %vm3403 = vcmp.eq.s32.totalorder %v307, %v3402
    %v3404 = vsel %vm3403, 0.0, %v2890
    %v3405 = vsel %vm3403, 1, 0
    %v3406 = vcvt.s32.f32 %v3405
    %v3407 = vlaneseq
    %v3408 = vshrl.u32 %v3407, 7
    %v3409 = vsub.s32 0, %v3408
    %v3410 = vrot.slane %v3406, %v3409
    %3412 = vbcast.lane.b32.xlu0 %v3410, 256
    %v3413 = vpop.permute.xlu0 %3412
    %v3414 = vlaneseq
    %v3415 = vshrl.u32 %v3414, 7
    %v3416 = vsub.s32 1, %v3415
    %v3417 = vrot.slane %v3406, %v3416
    %3419 = vbcast.lane.b32.xlu0 %v3417, 256
    %v3420 = vpop.permute.xlu0 %3419
    %v3421 = vmul.f32 %v3413, %v173
    %v3422 = vmul.f32 %v3420, %v174
    %v3423 = vsel %vm384, %v3421, 0.0
    %v3424 = vrot.slane %v3423, 4
    %v3425 = vadd.f32 %v3423, %v3424
    %v3426 = vrot.slane %v3425, 2
    %v3427 = vadd.f32 %v3425, %v3426
    %v3428 = vrot.slane %v3427, 1
    %v3429 = vadd.f32 %v3427, %v3428
    %v3430 = vsel %vm384, %v3422, 0.0
    %v3431 = vrot.slane %v3430, 4
    %v3432 = vadd.f32 %v3430, %v3431
    %v3433 = vrot.slane %v3432, 2
    %v3434 = vadd.f32 %v3432, %v3433
    %v3435 = vrot.slane %v3434, 1
    %v3436 = vadd.f32 %v3434, %v3435
    %v3439 = vunpack.c.l.s4 1966171168
    %v3440 = vunpack.c.0.s8 %v3439
    %v3441 = vlaneseq
    %v3442 = vshrl.u32 %v3441, 7
    %v3443 = vsub.s32 %v3440, %v3442
    %v3444 = vrot.slane %v3271, %v3443
    %v3445 = vcombine.high %v3444, %v3444
    %v3447 = vunpack.c.l.s4 1966171168
    %v3448 = vunpack.c.0.s8 %v3447
    %v3449 = vlaneseq
    %v3450 = vshrl.u32 %v3449, 7
    %v3451 = vsub.s32 %v3448, %v3450
    %v3452 = vrot.slane %v3444, %v3451
    %v3454 = vunpack.c.l.s4 1966171168
    %v3455 = vunpack.c.0.s8 %v3454
    %v3456 = vlaneseq
    %v3457 = vshrl.u32 %v3456, 7
    %v3458 = vsub.s32 %v3455, %v3457
    %v3459 = vrot.slane %v3445, %v3458
    %3462 = vst.msk [vmem:[#allocation17 + $0x5] sm:$0x1] %vm891, %v3452
    %3463 = vst.msk [vmem:[#allocation17 + $0xd] sm:$0x1] %vm891, %v3459
    %vm3464 = vcmask 42024
    %3465 = vst.msk [vmem:[#allocation18] sm:$0x3] %vm3464, %v3402
    %v3467 = vsel %vm224, %v3382, 0
    %3469 = vmatprep.subr.mxu0 0.0
    %3470 = vmatpush1.msra.mxu0 0.0
    %3471 = vmatprep.subr.mxu0 0.0
    %3472 = vmatpush1.msra.mxu0 0.0
    %3473 = vmatprep.subr.mxu0 0.0
    %3474 = vmatpush1.msra.mxu0 0.0
    %3475 = vmatprep.subr.mxu0 0.0
    %3476 = vmatpush1.msra.mxu0 0.0
    %3477 = vmatprep.subr.mxu0 0.0
    %3478 = vmatpush1.msra.mxu0 0.0
    %3479 = vmatprep.subr.mxu0 0.0
    %3480 = vmatpush1.msra.mxu0 0.0
    %3481 = vmatprep.subr.mxu0 0.0
    %3482 = vmatpush1.msra.mxu0 0.0
    %3483 = vmatprep.subr.mxu0 0.0
    %3484 = vmatpush1.msra.mxu0 0.0
    %3485 = vmatprep.subr.mxu0 0.0
    %3486 = vmatpush1.msra.mxu0 0.0
    %3487 = vmatprep.subr.mxu0 0.0
    %3488 = vmatpush1.msra.mxu0 0.0
    %3489 = vmatprep.subr.mxu0 0.0
    %3490 = vmatpush1.msra.mxu0 0.0
    %3491 = vmatprep.subr.mxu0 0.0
    %3492 = vmatpush1.msra.mxu0 0.0
    %3493 = vmatprep.subr.mxu0 0.0
    %3494 = vmatpush1.msra.mxu0 %v180
    %3495 = vmatprep.subr.mxu0 0.0
    %3496 = vmatpush1.msra.mxu0 %v179
    %3497 = vmatprep.subr.mxu0 0.0
    %3498 = vmatpush1.msra.mxu0 %v178
    %3499 = vmatprep.subr.mxu0 0.0
    %3500 = vmatpush1.msra.mxu0 %v177
    %3501 = vmatprep.subr.mxu0 0.0
    %3502 = vmatpush2.msra.mxu0 0.0
    %3503 = vmatprep.subr.mxu0 0.0
    %3504 = vmatpush2.msra.mxu0 0.0
    %3505 = vmatprep.subr.mxu0 0.0
    %3506 = vmatpush2.msra.mxu0 0.0
    %3507 = vmatprep.subr.mxu0 0.0
    %3508 = vmatpush2.msra.mxu0 0.0
    %3509 = vmatprep.subr.mxu0 0.0
    %3510 = vmatpush2.msra.mxu0 0.0
    %3511 = vmatprep.subr.mxu0 0.0
    %3512 = vmatpush2.msra.mxu0 0.0
    %3513 = vmatprep.subr.mxu0 0.0
    %3514 = vmatpush2.msra.mxu0 0.0
    %3515 = vmatprep.subr.mxu0 0.0
    %3516 = vmatpush2.msra.mxu0 0.0
    %3517 = vmatprep.subr.mxu0 0.0
    %3518 = vmatpush2.msra.mxu0 0.0
    %3519 = vmatprep.subr.mxu0 0.0
    %3520 = vmatpush2.msra.mxu0 0.0
    %3521 = vmatprep.subr.mxu0 0.0
    %3522 = vmatpush2.msra.mxu0 0.0
    %3523 = vmatprep.subr.mxu0 0.0
    %3524 = vmatpush2.msra.mxu0 0.0
    %3525 = vmatprep.subr.mxu0 0.0
    %3526 = vmatpush2.msra.mxu0 0.0
    %3527 = vmatprep.subr.mxu0 0.0
    %3528 = vmatpush2.msra.mxu0 0.0
    %3529 = vmatprep.subr.mxu0 0.0
    %3530 = vmatpush2.msra.mxu0 0.0
    %3531 = vmatprep.subr.mxu0 0.0
    %3532 = vmatpush2.msra.mxu0 0.0
    %3533 = vmatprep.mubr.f32.mxu0 0.0
    %3534 = vmatmul.mubr.f32.gmra.mxu0 %v3467
    %v3535 = vpop.f32.mrf.mxu0
    %v3536 = vadd.f32 0.0, %v3535
    %v3537 = vpop.f32.mrf.mxu0
    %3538 = vdwg.mxu0
    %v3541 = vsel %vm627, %v3436, %v3429
    %v3542 = vsel %vm384, %v3541, 0
    %3544 = vmatprep.subr.mxu0 0.0
    %3545 = vmatpush1.msra.mxu0 0.0
    %3546 = vmatprep.subr.mxu0 0.0
    %3547 = vmatpush1.msra.mxu0 0.0
    %3548 = vmatprep.subr.mxu0 0.0
    %3549 = vmatpush1.msra.mxu0 0.0
    %3550 = vmatprep.subr.mxu0 0.0
    %3551 = vmatpush1.msra.mxu0 0.0
    %3552 = vmatprep.subr.mxu0 0.0
    %3553 = vmatpush1.msra.mxu0 0.0
    %3554 = vmatprep.subr.mxu0 0.0
    %3555 = vmatpush1.msra.mxu0 0.0
    %3556 = vmatprep.subr.mxu0 0.0
    %3557 = vmatpush1.msra.mxu0 0.0
    %3558 = vmatprep.subr.mxu0 0.0
    %3559 = vmatpush1.msra.mxu0 0.0
    %3560 = vmatprep.subr.mxu0 0.0
    %3561 = vmatpush1.msra.mxu0 0.0
    %3562 = vmatprep.subr.mxu0 0.0
    %3563 = vmatpush1.msra.mxu0 0.0
    %3564 = vmatprep.subr.mxu0 0.0
    %3565 = vmatpush1.msra.mxu0 0.0
    %3566 = vmatprep.subr.mxu0 0.0
    %3567 = vmatpush1.msra.mxu0 0.0
    %3568 = vmatprep.subr.mxu0 0.0
    %3569 = vmatpush1.msra.mxu0 0.0
    %3570 = vmatprep.subr.mxu0 0.0
    %3571 = vmatpush1.msra.mxu0 0.0
    %3572 = vmatprep.subr.mxu0 0.0
    %3573 = vmatpush1.msra.mxu0 %v176
    %3574 = vmatprep.subr.mxu0 0.0
    %3575 = vmatpush1.msra.mxu0 %v175
    %3576 = vmatprep.subr.mxu0 0.0
    %3577 = vmatpush2.msra.mxu0 0.0
    %3578 = vmatprep.subr.mxu0 0.0
    %3579 = vmatpush2.msra.mxu0 0.0
    %3580 = vmatprep.subr.mxu0 0.0
    %3581 = vmatpush2.msra.mxu0 0.0
    %3582 = vmatprep.subr.mxu0 0.0
    %3583 = vmatpush2.msra.mxu0 0.0
    %3584 = vmatprep.subr.mxu0 0.0
    %3585 = vmatpush2.msra.mxu0 0.0
    %3586 = vmatprep.subr.mxu0 0.0
    %3587 = vmatpush2.msra.mxu0 0.0
    %3588 = vmatprep.subr.mxu0 0.0
    %3589 = vmatpush2.msra.mxu0 0.0
    %3590 = vmatprep.subr.mxu0 0.0
    %3591 = vmatpush2.msra.mxu0 0.0
    %3592 = vmatprep.subr.mxu0 0.0
    %3593 = vmatpush2.msra.mxu0 0.0
    %3594 = vmatprep.subr.mxu0 0.0
    %3595 = vmatpush2.msra.mxu0 0.0
    %3596 = vmatprep.subr.mxu0 0.0
    %3597 = vmatpush2.msra.mxu0 0.0
    %3598 = vmatprep.subr.mxu0 0.0
    %3599 = vmatpush2.msra.mxu0 0.0
    %3600 = vmatprep.subr.mxu0 0.0
    %3601 = vmatpush2.msra.mxu0 0.0
    %3602 = vmatprep.subr.mxu0 0.0
    %3603 = vmatpush2.msra.mxu0 0.0
    %3604 = vmatprep.subr.mxu0 0.0
    %3605 = vmatpush2.msra.mxu0 0.0
    %3606 = vmatprep.subr.mxu0 0.0
    %3607 = vmatpush2.msra.mxu0 0.0
    %3608 = vmatprep.mubr.f32.mxu0 0.0
    %3609 = vmatmul.mubr.f32.gmra.mxu0 %v3542
    %v3610 = vpop.f32.mrf.mxu0
    %v3611 = vadd.f32 %v3536, %v3610
    %v3612 = vpop.f32.mrf.mxu0
    %3613 = vdwg.mxu0
    %v3614 = vadd.f32 %v3611, %v198
    %v3615 = vxor.u32 %v3614, 2147483648
    %v3616 = vmul.f32 %v3615, 1.442695
    %v3617 = vpow.pop %v3616
    %v3618 = vadd.f32 %v3617, 1.0
    %v3619 = vrcp.pop %v3618
    %v3620 = vmul.f32 1.0, %v3619
    %v3621 = vtanh.pop %v3614
    %v3622 = vmul.f32 %v3620, %v3118
    %3624 = vrot.lane.b32.xlu0 %v3621, 64
    %v3625 = vpop.permute.xlu0 %3624
    %v3627 = vmul.f32 %v3620, %v3625
    %3629 = vrot.lane.b32.xlu0 %v3627, 32
    %v3630 = vpop.permute.xlu0 %3629
    %v3632 = vadd.f32 %v3622, %v3630
    %v3633 = vtanh.pop %v3632
    %3635 = vrot.lane.b32.xlu0 %v3633, 64
    %v3636 = vpop.permute.xlu0 %3635
    %v3638 = vmul.f32 %v3620, %v3636
    %3640 = vrot.lane.b32.xlu0 %v3638, 32
    %v3641 = vpop.permute.xlu0 %3640
    %v3642 = vsel %vm224, %v3641, 0
    %3644 = vmatprep.subr.mxu0 0.0
    %3645 = vmatpush1.msra.mxu0 0.0
    %3646 = vmatprep.subr.mxu0 0.0
    %3647 = vmatpush1.msra.mxu0 0.0
    %3648 = vmatprep.subr.mxu0 0.0
    %3649 = vmatpush1.msra.mxu0 0.0
    %3650 = vmatprep.subr.mxu0 0.0
    %3651 = vmatpush1.msra.mxu0 0.0
    %3652 = vmatprep.subr.mxu0 0.0
    %3653 = vmatpush1.msra.mxu0 0.0
    %3654 = vmatprep.subr.mxu0 0.0
    %3655 = vmatpush1.msra.mxu0 0.0
    %3656 = vmatprep.subr.mxu0 0.0
    %3657 = vmatpush1.msra.mxu0 0.0
    %3658 = vmatprep.subr.mxu0 0.0
    %3659 = vmatpush1.msra.mxu0 0.0
    %3660 = vmatprep.subr.mxu0 0.0
    %3661 = vmatpush1.msra.mxu0 0.0
    %3662 = vmatprep.subr.mxu0 0.0
    %3663 = vmatpush1.msra.mxu0 0.0
    %3664 = vmatprep.subr.mxu0 0.0
    %3665 = vmatpush1.msra.mxu0 0.0
    %3666 = vmatprep.subr.mxu0 0.0
    %3667 = vmatpush1.msra.mxu0 0.0
    %3668 = vmatprep.subr.mxu0 0.0
    %3669 = vmatpush1.msra.mxu0 %v184
    %3670 = vmatprep.subr.mxu0 0.0
    %3671 = vmatpush1.msra.mxu0 %v183
    %3672 = vmatprep.subr.mxu0 0.0
    %3673 = vmatpush1.msra.mxu0 %v182
    %3674 = vmatprep.subr.mxu0 0.0
    %3675 = vmatpush1.msra.mxu0 %v181
    %3676 = vmatprep.subr.mxu0 0.0
    %3677 = vmatpush2.msra.mxu0 0.0
    %3678 = vmatprep.subr.mxu0 0.0
    %3679 = vmatpush2.msra.mxu0 0.0
    %3680 = vmatprep.subr.mxu0 0.0
    %3681 = vmatpush2.msra.mxu0 0.0
    %3682 = vmatprep.subr.mxu0 0.0
    %3683 = vmatpush2.msra.mxu0 0.0
    %3684 = vmatprep.subr.mxu0 0.0
    %3685 = vmatpush2.msra.mxu0 0.0
    %3686 = vmatprep.subr.mxu0 0.0
    %3687 = vmatpush2.msra.mxu0 0.0
    %3688 = vmatprep.subr.mxu0 0.0
    %3689 = vmatpush2.msra.mxu0 0.0
    %3690 = vmatprep.subr.mxu0 0.0
    %3691 = vmatpush2.msra.mxu0 0.0
    %3692 = vmatprep.subr.mxu0 0.0
    %3693 = vmatpush2.msra.mxu0 0.0
    %3694 = vmatprep.subr.mxu0 0.0
    %3695 = vmatpush2.msra.mxu0 0.0
    %3696 = vmatprep.subr.mxu0 0.0
    %3697 = vmatpush2.msra.mxu0 0.0
    %3698 = vmatprep.subr.mxu0 0.0
    %3699 = vmatpush2.msra.mxu0 0.0
    %3700 = vmatprep.subr.mxu0 0.0
    %3701 = vmatpush2.msra.mxu0 0.0
    %3702 = vmatprep.subr.mxu0 0.0
    %3703 = vmatpush2.msra.mxu0 0.0
    %3704 = vmatprep.subr.mxu0 0.0
    %3705 = vmatpush2.msra.mxu0 0.0
    %3706 = vmatprep.subr.mxu0 0.0
    %3707 = vmatpush2.msra.mxu0 0.0
    %3708 = vmatprep.mubr.f32.mxu0 0.0
    %3709 = vmatmul.mubr.f32.gmra.mxu0 %v3642
    %v3710 = vpop.f32.mrf.mxu0
    %v3711 = vadd.f32 0.0, %v3710
    %v3712 = vpop.f32.mrf.mxu0
    %3713 = vdwg.mxu0
    %v3714 = vadd.f32 %v3711, %v205
    %v3717 = vunpack.c.l.s4 1966171168
    %v3718 = vunpack.c.0.s8 %v3717
    %v3719 = vlaneseq
    %v3720 = vshrl.u32 %v3719, 7
    %v3721 = vsub.s32 %v3718, %v3720
    %v3722 = vrot.slane %v3714, %v3721
    %v3723 = vcombine.high %v3722, %v3722
    %v3725 = vunpack.c.l.s4 1966171168
    %v3726 = vunpack.c.0.s8 %v3725
    %v3727 = vlaneseq
    %v3728 = vshrl.u32 %v3727, 7
    %v3729 = vsub.s32 %v3726, %v3728
    %v3730 = vrot.slane %v3722, %v3729
    %v3732 = vunpack.c.l.s4 1966171168
    %v3733 = vunpack.c.0.s8 %v3732
    %v3734 = vlaneseq
    %v3735 = vshrl.u32 %v3734, 7
    %v3736 = vsub.s32 %v3733, %v3735
    %v3737 = vrot.slane %v3723, %v3736
    %v3738 = vlaneseq
    %v3739 = vshrl.u32 %v3738, 7
    %v3740 = vsub.s32 0, %v3739
    %v3741 = vrot.slane %v3730, %v3740
    %v3742 = vlaneseq
    %v3743 = vshrl.u32 %v3742, 7
    %v3744 = vsub.s32 0, %v3743
    %v3745 = vrot.slane %v3737, %v3744
    %v3748 = vadd.f32 %v3741, %v298
    %v3749 = vadd.f32 %v3745, %v303
    %v3750 = vtanh.pop %v3748
    %v3751 = vtanh.pop %v3749
    %v3752 = vmul.f32 %v3750, %v604
    %v3753 = vmul.f32 %v3751, %v604
    %v3754 = vsel %vm224, %v3752, 0.0
    %3755 = vadd.xlane.f32.xlu0 %v3754
    %v3756 = vpop.xlane.xlu0 %3755
    %v3757 = vsel %vm224, %v3753, 0.0
    %3758 = vadd.xlane.f32.xlu0 %v3757
    %v3759 = vpop.xlane.xlu0 %3758
    %vm3760 = vcmp.eq.f32.partialorder %v3404, 0.0
    %v3763 = vlaneseq
    %v3764 = vshrl.u32 %v3763, 7
    %v3765 = vsub.s32 %v307, %v3764
    %v3766 = vrot.slane %v3756, %v3765
    %v3767 = vlaneseq
    %v3768 = vshrl.u32 %v3767, 7
    %v3769 = vsub.s32 %v307, %v3768
    %v3770 = vrot.slane %v3759, %v3769
    %v3771 = vsel %vm627, %v3770, %v3766
    %v3773 = vsel %vm3760, -inf, %v3771
    %v3774 = vsel %vm630, %v3773, -inf
    %3775 = vmax.xlane.f32.xlu0 %v3774
    %v3776 = vpop.xlane.xlu0 %3775
    %v3777 = vsub.f32 %v3773, %v3776
    %v3778 = vmul.f32 %v3777, 1.442695
    %v3779 = vpow.pop %v3778
    %v3780 = vsel %vm630, %v3779, 0.0
    %3781 = vadd.xlane.f32.xlu0 %v3780
    %v3782 = vpop.xlane.xlu0 %3781
    %v3783 = vrcp.pop %v3782
    %v3784 = vmul.f32 1.0, %v3783
    %v3785 = vmul.f32 %v3779, %v3784
    %v3786 = vlaneseq
    %v3787 = vshrl.u32 %v3786, 7
    %v3788 = vsub.s32 0, %v3787
    %v3789 = vrot.slane %v3785, %v3788
    %3791 = vbcast.lane.b32.xlu0 %v3789, 256
    %v3792 = vpop.permute.xlu0 %3791
    %v3793 = vlaneseq
    %v3794 = vshrl.u32 %v3793, 7
    %v3795 = vsub.s32 1, %v3794
    %v3796 = vrot.slane %v3785, %v3795
    %3798 = vbcast.lane.b32.xlu0 %v3796, 256
    %v3799 = vpop.permute.xlu0 %3798
    %v3800 = vmul.f32 %v3792, %v298
    %v3801 = vmul.f32 %v3799, %v303
    %v3802 = vsel %vm224, %v3800, 0.0
    %v3803 = vrot.slane %v3802, 4
    %v3804 = vadd.f32 %v3802, %v3803
    %v3805 = vrot.slane %v3804, 2
    %v3806 = vadd.f32 %v3804, %v3805
    %v3807 = vrot.slane %v3806, 1
    %v3808 = vadd.f32 %v3806, %v3807
    %v3809 = vsel %vm224, %v3801, 0.0
    %v3810 = vrot.slane %v3809, 4
    %v3811 = vadd.f32 %v3809, %v3810
    %v3812 = vrot.slane %v3811, 2
    %v3813 = vadd.f32 %v3811, %v3812
    %v3814 = vrot.slane %v3813, 1
    %v3815 = vadd.f32 %v3813, %v3814
    %v3818 = vsel %vm627, %v3815, %v3808
    %3820 = vrot.lane.b32.xlu0 %v3711, 96
    %v3821 = vpop.permute.xlu0 %3820
    %v3823 = vsel %vm224, %v3818, 0
    %3825 = vmatprep.subr.mxu0 0.0
    %3826 = vmatpush1.msra.mxu0 0.0
    %3827 = vmatprep.subr.mxu0 0.0
    %3828 = vmatpush1.msra.mxu0 0.0
    %3829 = vmatprep.subr.mxu0 0.0
    %3830 = vmatpush1.msra.mxu0 0.0
    %3831 = vmatprep.subr.mxu0 0.0
    %3832 = vmatpush1.msra.mxu0 0.0
    %3833 = vmatprep.subr.mxu0 0.0
    %3834 = vmatpush1.msra.mxu0 0.0
    %3835 = vmatprep.subr.mxu0 0.0
    %3836 = vmatpush1.msra.mxu0 0.0
    %3837 = vmatprep.subr.mxu0 0.0
    %3838 = vmatpush1.msra.mxu0 0.0
    %3839 = vmatprep.subr.mxu0 0.0
    %3840 = vmatpush1.msra.mxu0 0.0
    %3841 = vmatprep.subr.mxu0 0.0
    %3842 = vmatpush1.msra.mxu0 0.0
    %3843 = vmatprep.subr.mxu0 0.0
    %3844 = vmatpush1.msra.mxu0 0.0
    %3845 = vmatprep.subr.mxu0 0.0
    %3846 = vmatpush1.msra.mxu0 0.0
    %3847 = vmatprep.subr.mxu0 0.0
    %3848 = vmatpush1.msra.mxu0 0.0
    %3849 = vmatprep.subr.mxu0 0.0
    %3850 = vmatpush1.msra.mxu0 %v188
    %3851 = vmatprep.subr.mxu0 0.0
    %3852 = vmatpush1.msra.mxu0 %v187
    %3853 = vmatprep.subr.mxu0 0.0
    %3854 = vmatpush1.msra.mxu0 %v186
    %3855 = vmatprep.subr.mxu0 0.0
    %3856 = vmatpush1.msra.mxu0 %v185
    %3857 = vmatprep.subr.mxu0 0.0
    %3858 = vmatpush2.msra.mxu0 0.0
    %3859 = vmatprep.subr.mxu0 0.0
    %3860 = vmatpush2.msra.mxu0 0.0
    %3861 = vmatprep.subr.mxu0 0.0
    %3862 = vmatpush2.msra.mxu0 0.0
    %3863 = vmatprep.subr.mxu0 0.0
    %3864 = vmatpush2.msra.mxu0 0.0
    %3865 = vmatprep.subr.mxu0 0.0
    %3866 = vmatpush2.msra.mxu0 0.0
    %3867 = vmatprep.subr.mxu0 0.0
    %3868 = vmatpush2.msra.mxu0 0.0
    %3869 = vmatprep.subr.mxu0 0.0
    %3870 = vmatpush2.msra.mxu0 0.0
    %3871 = vmatprep.subr.mxu0 0.0
    %3872 = vmatpush2.msra.mxu0 0.0
    %3873 = vmatprep.subr.mxu0 0.0
    %3874 = vmatpush2.msra.mxu0 0.0
    %3875 = vmatprep.subr.mxu0 0.0
    %3876 = vmatpush2.msra.mxu0 0.0
    %3877 = vmatprep.subr.mxu0 0.0
    %3878 = vmatpush2.msra.mxu0 0.0
    %3879 = vmatprep.subr.mxu0 0.0
    %3880 = vmatpush2.msra.mxu0 0.0
    %3881 = vmatprep.subr.mxu0 0.0
    %3882 = vmatpush2.msra.mxu0 0.0
    %3883 = vmatprep.subr.mxu0 0.0
    %3884 = vmatpush2.msra.mxu0 0.0
    %3885 = vmatprep.subr.mxu0 0.0
    %3886 = vmatpush2.msra.mxu0 0.0
    %3887 = vmatprep.subr.mxu0 0.0
    %3888 = vmatpush2.msra.mxu0 0.0
    %3889 = vmatprep.mubr.f32.mxu0 0.0
    %3890 = vmatmul.mubr.f32.gmra.mxu0 %v3823
    %v3891 = vpop.f32.mrf.mxu0
    %v3892 = vadd.f32 %v3821, %v3891
    %v3893 = vpop.f32.mrf.mxu0
    %3894 = vdwg.mxu0
    %v3895 = vadd.f32 %v3892, %v212
    %v3896 = vtanh.pop %v3895
    %v3897 = vsel %vm630, %v3785, -inf
    %3898 = vmax.xlane.f32.xlu0 %v3897
    %v3899 = vpop.xlane.xlu0 %3898
    %vm3900 = vcmp.eq.f32.partialorder %v3785, %v3899
    %v3901 = vsel %vm3900, %v307, 8
    %v3902 = vsel %vm630, %v3901, 2147483647
    %v3903 = vand.u32 %v3902, 65535
    %v3904 = vshra.s32 %v3902, 16
    %v3905 = vcvt.s32.f32 %v3903
    %v3906 = vcvt.s32.f32 %v3904
    %3907 = vmin.xlane.f32.xlu0 %v3906
    %v3908 = vpop.xlane.xlu0 %3907
    %vm3909 = vcmp.eq.f32.partialorder %v3906, %v3908
    %v3910 = vsel %vm3909, %v3905, inf
    %3911 = vmin.xlane.f32.xlu0 %v3910
    %v3912 = vpop.xlane.xlu0 %3911
    %v3913 = vcvt.f32.s32 %v3912
    %v3914 = vcvt.f32.s32 %v3908
    %v3915 = vshll.u32 %v3914, 16
    %v3916 = vadd.s32 %v3915, %v3913
    %vm3917 = vcmp.eq.s32.totalorder %v307, %v3916
    %v3918 = vsel %vm3917, 0.0, %v3404
    %v3919 = vsel %vm3917, 1, 0
    %v3920 = vcvt.s32.f32 %v3919
    %v3921 = vlaneseq
    %v3922 = vshrl.u32 %v3921, 7
    %v3923 = vsub.s32 0, %v3922
    %v3924 = vrot.slane %v3920, %v3923
    %3926 = vbcast.lane.b32.xlu0 %v3924, 256
    %v3927 = vpop.permute.xlu0 %3926
    %v3928 = vlaneseq
    %v3929 = vshrl.u32 %v3928, 7
    %v3930 = vsub.s32 1, %v3929
    %v3931 = vrot.slane %v3920, %v3930
    %3933 = vbcast.lane.b32.xlu0 %v3931, 256
    %v3934 = vpop.permute.xlu0 %3933
    %v3935 = vmul.f32 %v3927, %v173
    %v3936 = vmul.f32 %v3934, %v174
    %v3937 = vsel %vm384, %v3935, 0.0
    %v3938 = vrot.slane %v3937, 4
    %v3939 = vadd.f32 %v3937, %v3938
    %v3940 = vrot.slane %v3939, 2
    %v3941 = vadd.f32 %v3939, %v3940
    %v3942 = vrot.slane %v3941, 1
    %v3943 = vadd.f32 %v3941, %v3942
    %v3944 = vsel %vm384, %v3936, 0.0
    %v3945 = vrot.slane %v3944, 4
    %v3946 = vadd.f32 %v3944, %v3945
    %v3947 = vrot.slane %v3946, 2
    %v3948 = vadd.f32 %v3946, %v3947
    %v3949 = vrot.slane %v3948, 1
    %v3950 = vadd.f32 %v3948, %v3949
    %v3953 = vunpack.c.l.s4 1966171168
    %v3954 = vunpack.c.0.s8 %v3953
    %v3955 = vlaneseq
    %v3956 = vshrl.u32 %v3955, 7
    %v3957 = vsub.s32 %v3954, %v3956
    %v3958 = vrot.slane %v3785, %v3957
    %v3959 = vcombine.high %v3958, %v3958
    %v3961 = vunpack.c.l.s4 1966171168
    %v3962 = vunpack.c.0.s8 %v3961
    %v3963 = vlaneseq
    %v3964 = vshrl.u32 %v3963, 7
    %v3965 = vsub.s32 %v3962, %v3964
    %v3966 = vrot.slane %v3958, %v3965
    %v3968 = vunpack.c.l.s4 1966171168
    %v3969 = vunpack.c.0.s8 %v3968
    %v3970 = vlaneseq
    %v3971 = vshrl.u32 %v3970, 7
    %v3972 = vsub.s32 %v3969, %v3971
    %v3973 = vrot.slane %v3959, %v3972
    %3976 = vst.msk [vmem:[#allocation17 + $0x6] sm:$0x1] %vm891, %v3966
    %3977 = vst.msk [vmem:[#allocation17 + $0xe] sm:$0x1] %vm891, %v3973
    %vm3978 = vcmask 50224
    %3979 = vst.msk [vmem:[#allocation18] sm:$0x3] %vm3978, %v3916
    %v3981 = vsel %vm224, %v3896, 0
    %3983 = vmatprep.subr.mxu0 0.0
    %3984 = vmatpush1.msra.mxu0 0.0
    %3985 = vmatprep.subr.mxu0 0.0
    %3986 = vmatpush1.msra.mxu0 0.0
    %3987 = vmatprep.subr.mxu0 0.0
    %3988 = vmatpush1.msra.mxu0 0.0
    %3989 = vmatprep.subr.mxu0 0.0
    %3990 = vmatpush1.msra.mxu0 0.0
    %3991 = vmatprep.subr.mxu0 0.0
    %3992 = vmatpush1.msra.mxu0 0.0
    %3993 = vmatprep.subr.mxu0 0.0
    %3994 = vmatpush1.msra.mxu0 0.0
    %3995 = vmatprep.subr.mxu0 0.0
    %3996 = vmatpush1.msra.mxu0 0.0
    %3997 = vmatprep.subr.mxu0 0.0
    %3998 = vmatpush1.msra.mxu0 0.0
    %3999 = vmatprep.subr.mxu0 0.0
    %4000 = vmatpush1.msra.mxu0 0.0
    %4001 = vmatprep.subr.mxu0 0.0
    %4002 = vmatpush1.msra.mxu0 0.0
    %4003 = vmatprep.subr.mxu0 0.0
    %4004 = vmatpush1.msra.mxu0 0.0
    %4005 = vmatprep.subr.mxu0 0.0
    %4006 = vmatpush1.msra.mxu0 0.0
    %4007 = vmatprep.subr.mxu0 0.0
    %4008 = vmatpush1.msra.mxu0 %v180
    %4009 = vmatprep.subr.mxu0 0.0
    %4010 = vmatpush1.msra.mxu0 %v179
    %4011 = vmatprep.subr.mxu0 0.0
    %4012 = vmatpush1.msra.mxu0 %v178
    %4013 = vmatprep.subr.mxu0 0.0
    %4014 = vmatpush1.msra.mxu0 %v177
    %4015 = vmatprep.subr.mxu0 0.0
    %4016 = vmatpush2.msra.mxu0 0.0
    %4017 = vmatprep.subr.mxu0 0.0
    %4018 = vmatpush2.msra.mxu0 0.0
    %4019 = vmatprep.subr.mxu0 0.0
    %4020 = vmatpush2.msra.mxu0 0.0
    %4021 = vmatprep.subr.mxu0 0.0
    %4022 = vmatpush2.msra.mxu0 0.0
    %4023 = vmatprep.subr.mxu0 0.0
    %4024 = vmatpush2.msra.mxu0 0.0
    %4025 = vmatprep.subr.mxu0 0.0
    %4026 = vmatpush2.msra.mxu0 0.0
    %4027 = vmatprep.subr.mxu0 0.0
    %4028 = vmatpush2.msra.mxu0 0.0
    %4029 = vmatprep.subr.mxu0 0.0
    %4030 = vmatpush2.msra.mxu0 0.0
    %4031 = vmatprep.subr.mxu0 0.0
    %4032 = vmatpush2.msra.mxu0 0.0
    %4033 = vmatprep.subr.mxu0 0.0
    %4034 = vmatpush2.msra.mxu0 0.0
    %4035 = vmatprep.subr.mxu0 0.0
    %4036 = vmatpush2.msra.mxu0 0.0
    %4037 = vmatprep.subr.mxu0 0.0
    %4038 = vmatpush2.msra.mxu0 0.0
    %4039 = vmatprep.subr.mxu0 0.0
    %4040 = vmatpush2.msra.mxu0 0.0
    %4041 = vmatprep.subr.mxu0 0.0
    %4042 = vmatpush2.msra.mxu0 0.0
    %4043 = vmatprep.subr.mxu0 0.0
    %4044 = vmatpush2.msra.mxu0 0.0
    %4045 = vmatprep.subr.mxu0 0.0
    %4046 = vmatpush2.msra.mxu0 0.0
    %4047 = vmatprep.mubr.f32.mxu0 0.0
    %4048 = vmatmul.mubr.f32.gmra.mxu0 %v3981
    %v4049 = vpop.f32.mrf.mxu0
    %v4050 = vadd.f32 0.0, %v4049
    %v4051 = vpop.f32.mrf.mxu0
    %4052 = vdwg.mxu0
    %v4055 = vsel %vm627, %v3950, %v3943
    %v4056 = vsel %vm384, %v4055, 0
    %4058 = vmatprep.subr.mxu0 0.0
    %4059 = vmatpush1.msra.mxu0 0.0
    %4060 = vmatprep.subr.mxu0 0.0
    %4061 = vmatpush1.msra.mxu0 0.0
    %4062 = vmatprep.subr.mxu0 0.0
    %4063 = vmatpush1.msra.mxu0 0.0
    %4064 = vmatprep.subr.mxu0 0.0
    %4065 = vmatpush1.msra.mxu0 0.0
    %4066 = vmatprep.subr.mxu0 0.0
    %4067 = vmatpush1.msra.mxu0 0.0
    %4068 = vmatprep.subr.mxu0 0.0
    %4069 = vmatpush1.msra.mxu0 0.0
    %4070 = vmatprep.subr.mxu0 0.0
    %4071 = vmatpush1.msra.mxu0 0.0
    %4072 = vmatprep.subr.mxu0 0.0
    %4073 = vmatpush1.msra.mxu0 0.0
    %4074 = vmatprep.subr.mxu0 0.0
    %4075 = vmatpush1.msra.mxu0 0.0
    %4076 = vmatprep.subr.mxu0 0.0
    %4077 = vmatpush1.msra.mxu0 0.0
    %4078 = vmatprep.subr.mxu0 0.0
    %4079 = vmatpush1.msra.mxu0 0.0
    %4080 = vmatprep.subr.mxu0 0.0
    %4081 = vmatpush1.msra.mxu0 0.0
    %4082 = vmatprep.subr.mxu0 0.0
    %4083 = vmatpush1.msra.mxu0 0.0
    %4084 = vmatprep.subr.mxu0 0.0
    %4085 = vmatpush1.msra.mxu0 0.0
    %4086 = vmatprep.subr.mxu0 0.0
    %4087 = vmatpush1.msra.mxu0 %v176
    %4088 = vmatprep.subr.mxu0 0.0
    %4089 = vmatpush1.msra.mxu0 %v175
    %4090 = vmatprep.subr.mxu0 0.0
    %4091 = vmatpush2.msra.mxu0 0.0
    %4092 = vmatprep.subr.mxu0 0.0
    %4093 = vmatpush2.msra.mxu0 0.0
    %4094 = vmatprep.subr.mxu0 0.0
    %4095 = vmatpush2.msra.mxu0 0.0
    %4096 = vmatprep.subr.mxu0 0.0
    %4097 = vmatpush2.msra.mxu0 0.0
    %4098 = vmatprep.subr.mxu0 0.0
    %4099 = vmatpush2.msra.mxu0 0.0
    %4100 = vmatprep.subr.mxu0 0.0
    %4101 = vmatpush2.msra.mxu0 0.0
    %4102 = vmatprep.subr.mxu0 0.0
    %4103 = vmatpush2.msra.mxu0 0.0
    %4104 = vmatprep.subr.mxu0 0.0
    %4105 = vmatpush2.msra.mxu0 0.0
    %4106 = vmatprep.subr.mxu0 0.0
    %4107 = vmatpush2.msra.mxu0 0.0
    %4108 = vmatprep.subr.mxu0 0.0
    %4109 = vmatpush2.msra.mxu0 0.0
    %4110 = vmatprep.subr.mxu0 0.0
    %4111 = vmatpush2.msra.mxu0 0.0
    %4112 = vmatprep.subr.mxu0 0.0
    %4113 = vmatpush2.msra.mxu0 0.0
    %4114 = vmatprep.subr.mxu0 0.0
    %4115 = vmatpush2.msra.mxu0 0.0
    %4116 = vmatprep.subr.mxu0 0.0
    %4117 = vmatpush2.msra.mxu0 0.0
    %4118 = vmatprep.subr.mxu0 0.0
    %4119 = vmatpush2.msra.mxu0 0.0
    %4120 = vmatprep.subr.mxu0 0.0
    %4121 = vmatpush2.msra.mxu0 0.0
    %4122 = vmatprep.mubr.f32.mxu0 0.0
    %4123 = vmatmul.mubr.f32.gmra.mxu0 %v4056
    %v4124 = vpop.f32.mrf.mxu0
    %v4125 = vadd.f32 %v4050, %v4124
    %v4126 = vpop.f32.mrf.mxu0
    %4127 = vdwg.mxu0
    %v4128 = vadd.f32 %v4125, %v198
    %v4129 = vxor.u32 %v4128, 2147483648
    %v4130 = vmul.f32 %v4129, 1.442695
    %v4131 = vpow.pop %v4130
    %v4132 = vadd.f32 %v4131, 1.0
    %v4133 = vrcp.pop %v4132
    %v4134 = vmul.f32 1.0, %v4133
    %v4135 = vtanh.pop %v4128
    %v4136 = vmul.f32 %v4134, %v3632
    %4138 = vrot.lane.b32.xlu0 %v4135, 64
    %v4139 = vpop.permute.xlu0 %4138
    %v4141 = vmul.f32 %v4134, %v4139
    %4143 = vrot.lane.b32.xlu0 %v4141, 32
    %v4144 = vpop.permute.xlu0 %4143
    %v4146 = vadd.f32 %v4136, %v4144
    %v4147 = vtanh.pop %v4146
    %4149 = vrot.lane.b32.xlu0 %v4147, 64
    %v4150 = vpop.permute.xlu0 %4149
    %v4152 = vmul.f32 %v4134, %v4150
    %4154 = vrot.lane.b32.xlu0 %v4152, 32
    %v4155 = vpop.permute.xlu0 %4154
    %v4156 = vsel %vm224, %v4155, 0
    %4158 = vmatprep.subr.mxu0 0.0
    %4159 = vmatpush1.msra.mxu0 0.0
    %4160 = vmatprep.subr.mxu0 0.0
    %4161 = vmatpush1.msra.mxu0 0.0
    %4162 = vmatprep.subr.mxu0 0.0
    %4163 = vmatpush1.msra.mxu0 0.0
    %4164 = vmatprep.subr.mxu0 0.0
    %4165 = vmatpush1.msra.mxu0 0.0
    %4166 = vmatprep.subr.mxu0 0.0
    %4167 = vmatpush1.msra.mxu0 0.0
    %4168 = vmatprep.subr.mxu0 0.0
    %4169 = vmatpush1.msra.mxu0 0.0
    %4170 = vmatprep.subr.mxu0 0.0
    %4171 = vmatpush1.msra.mxu0 0.0
    %4172 = vmatprep.subr.mxu0 0.0
    %4173 = vmatpush1.msra.mxu0 0.0
    %4174 = vmatprep.subr.mxu0 0.0
    %4175 = vmatpush1.msra.mxu0 0.0
    %4176 = vmatprep.subr.mxu0 0.0
    %4177 = vmatpush1.msra.mxu0 0.0
    %4178 = vmatprep.subr.mxu0 0.0
    %4179 = vmatpush1.msra.mxu0 0.0
    %4180 = vmatprep.subr.mxu0 0.0
    %4181 = vmatpush1.msra.mxu0 0.0
    %4182 = vmatprep.subr.mxu0 0.0
    %4183 = vmatpush1.msra.mxu0 %v184
    %4184 = vmatprep.subr.mxu0 0.0
    %4185 = vmatpush1.msra.mxu0 %v183
    %4186 = vmatprep.subr.mxu0 0.0
    %4187 = vmatpush1.msra.mxu0 %v182
    %4188 = vmatprep.subr.mxu0 0.0
    %4189 = vmatpush1.msra.mxu0 %v181
    %4190 = vmatprep.subr.mxu0 0.0
    %4191 = vmatpush2.msra.mxu0 0.0
    %4192 = vmatprep.subr.mxu0 0.0
    %4193 = vmatpush2.msra.mxu0 0.0
    %4194 = vmatprep.subr.mxu0 0.0
    %4195 = vmatpush2.msra.mxu0 0.0
    %4196 = vmatprep.subr.mxu0 0.0
    %4197 = vmatpush2.msra.mxu0 0.0
    %4198 = vmatprep.subr.mxu0 0.0
    %4199 = vmatpush2.msra.mxu0 0.0
    %4200 = vmatprep.subr.mxu0 0.0
    %4201 = vmatpush2.msra.mxu0 0.0
    %4202 = vmatprep.subr.mxu0 0.0
    %4203 = vmatpush2.msra.mxu0 0.0
    %4204 = vmatprep.subr.mxu0 0.0
    %4205 = vmatpush2.msra.mxu0 0.0
    %4206 = vmatprep.subr.mxu0 0.0
    %4207 = vmatpush2.msra.mxu0 0.0
    %4208 = vmatprep.subr.mxu0 0.0
    %4209 = vmatpush2.msra.mxu0 0.0
    %4210 = vmatprep.subr.mxu0 0.0
    %4211 = vmatpush2.msra.mxu0 0.0
    %4212 = vmatprep.subr.mxu0 0.0
    %4213 = vmatpush2.msra.mxu0 0.0
    %4214 = vmatprep.subr.mxu0 0.0
    %4215 = vmatpush2.msra.mxu0 0.0
    %4216 = vmatprep.subr.mxu0 0.0
    %4217 = vmatpush2.msra.mxu0 0.0
    %4218 = vmatprep.subr.mxu0 0.0
    %4219 = vmatpush2.msra.mxu0 0.0
    %4220 = vmatprep.subr.mxu0 0.0
    %4221 = vmatpush2.msra.mxu0 0.0
    %4222 = vmatprep.mubr.f32.mxu0 0.0
    %4223 = vmatmul.mubr.f32.gmra.mxu0 %v4156
    %v4224 = vpop.f32.mrf.mxu0
    %v4225 = vadd.f32 0.0, %v4224
    %v4226 = vpop.f32.mrf.mxu0
    %4227 = vdwg.mxu0
    %v4228 = vadd.f32 %v4225, %v205
    %v4231 = vunpack.c.l.s4 1966171168
    %v4232 = vunpack.c.0.s8 %v4231
    %v4233 = vlaneseq
    %v4234 = vshrl.u32 %v4233, 7
    %v4235 = vsub.s32 %v4232, %v4234
    %v4236 = vrot.slane %v4228, %v4235
    %v4237 = vcombine.high %v4236, %v4236
    %v4239 = vunpack.c.l.s4 1966171168
    %v4240 = vunpack.c.0.s8 %v4239
    %v4241 = vlaneseq
    %v4242 = vshrl.u32 %v4241, 7
    %v4243 = vsub.s32 %v4240, %v4242
    %v4244 = vrot.slane %v4236, %v4243
    %v4246 = vunpack.c.l.s4 1966171168
    %v4247 = vunpack.c.0.s8 %v4246
    %v4248 = vlaneseq
    %v4249 = vshrl.u32 %v4248, 7
    %v4250 = vsub.s32 %v4247, %v4249
    %v4251 = vrot.slane %v4237, %v4250
    %v4252 = vlaneseq
    %v4253 = vshrl.u32 %v4252, 7
    %v4254 = vsub.s32 0, %v4253
    %v4255 = vrot.slane %v4244, %v4254
    %v4256 = vlaneseq
    %v4257 = vshrl.u32 %v4256, 7
    %v4258 = vsub.s32 0, %v4257
    %v4259 = vrot.slane %v4251, %v4258
    %v4262 = vadd.f32 %v4255, %v298
    %v4263 = vadd.f32 %v4259, %v303
    %v4264 = vtanh.pop %v4262
    %v4265 = vtanh.pop %v4263
    %v4266 = vmul.f32 %v4264, %v604
    %v4267 = vmul.f32 %v4265, %v604
    %v4268 = vsel %vm224, %v4266, 0.0
    %4269 = vadd.xlane.f32.xlu0 %v4268
    %v4270 = vpop.xlane.xlu0 %4269
    %v4271 = vsel %vm224, %v4267, 0.0
    %4272 = vadd.xlane.f32.xlu0 %v4271
    %v4273 = vpop.xlane.xlu0 %4272
    %vm4274 = vcmp.eq.f32.partialorder %v3918, 0.0
    %v4277 = vlaneseq
    %v4278 = vshrl.u32 %v4277, 7
    %v4279 = vsub.s32 %v307, %v4278
    %v4280 = vrot.slane %v4270, %v4279
    %v4281 = vlaneseq
    %v4282 = vshrl.u32 %v4281, 7
    %v4283 = vsub.s32 %v307, %v4282
    %v4284 = vrot.slane %v4273, %v4283
    %v4285 = vsel %vm627, %v4284, %v4280
    %v4287 = vsel %vm4274, -inf, %v4285
    %v4288 = vsel %vm630, %v4287, -inf
    %4289 = vmax.xlane.f32.xlu0 %v4288
    %v4290 = vpop.xlane.xlu0 %4289
    %v4291 = vsub.f32 %v4287, %v4290
    %v4292 = vmul.f32 %v4291, 1.442695
    %v4293 = vpow.pop %v4292
    %v4294 = vsel %vm630, %v4293, 0.0
    %4295 = vadd.xlane.f32.xlu0 %v4294
    %v4296 = vpop.xlane.xlu0 %4295
    %v4297 = vrcp.pop %v4296
    %v4298 = vmul.f32 1.0, %v4297
    %v4299 = vmul.f32 %v4293, %v4298
    %v4300 = vlaneseq
    %v4301 = vshrl.u32 %v4300, 7
    %v4302 = vsub.s32 0, %v4301
    %v4303 = vrot.slane %v4299, %v4302
    %4305 = vbcast.lane.b32.xlu0 %v4303, 256
    %v4306 = vpop.permute.xlu0 %4305
    %v4307 = vlaneseq
    %v4308 = vshrl.u32 %v4307, 7
    %v4309 = vsub.s32 1, %v4308
    %v4310 = vrot.slane %v4299, %v4309
    %4312 = vbcast.lane.b32.xlu0 %v4310, 256
    %v4313 = vpop.permute.xlu0 %4312
    %v4314 = vmul.f32 %v4306, %v298
    %v4315 = vmul.f32 %v4313, %v303
    %v4316 = vsel %vm224, %v4314, 0.0
    %v4317 = vrot.slane %v4316, 4
    %v4318 = vadd.f32 %v4316, %v4317
    %v4319 = vrot.slane %v4318, 2
    %v4320 = vadd.f32 %v4318, %v4319
    %v4321 = vrot.slane %v4320, 1
    %v4322 = vadd.f32 %v4320, %v4321
    %v4323 = vsel %vm224, %v4315, 0.0
    %v4324 = vrot.slane %v4323, 4
    %v4325 = vadd.f32 %v4323, %v4324
    %v4326 = vrot.slane %v4325, 2
    %v4327 = vadd.f32 %v4325, %v4326
    %v4328 = vrot.slane %v4327, 1
    %v4329 = vadd.f32 %v4327, %v4328
    %v4332 = vsel %vm627, %v4329, %v4322
    %4334 = vrot.lane.b32.xlu0 %v4225, 96
    %v4335 = vpop.permute.xlu0 %4334
    %v4337 = vsel %vm224, %v4332, 0
    %4339 = vmatprep.subr.mxu0 0.0
    %4340 = vmatpush1.msra.mxu0 0.0
    %4341 = vmatprep.subr.mxu0 0.0
    %4342 = vmatpush1.msra.mxu0 0.0
    %4343 = vmatprep.subr.mxu0 0.0
    %4344 = vmatpush1.msra.mxu0 0.0
    %4345 = vmatprep.subr.mxu0 0.0
    %4346 = vmatpush1.msra.mxu0 0.0
    %4347 = vmatprep.subr.mxu0 0.0
    %4348 = vmatpush1.msra.mxu0 0.0
    %4349 = vmatprep.subr.mxu0 0.0
    %4350 = vmatpush1.msra.mxu0 0.0
    %4351 = vmatprep.subr.mxu0 0.0
    %4352 = vmatpush1.msra.mxu0 0.0
    %4353 = vmatprep.subr.mxu0 0.0
    %4354 = vmatpush1.msra.mxu0 0.0
    %4355 = vmatprep.subr.mxu0 0.0
    %4356 = vmatpush1.msra.mxu0 0.0
    %4357 = vmatprep.subr.mxu0 0.0
    %4358 = vmatpush1.msra.mxu0 0.0
    %4359 = vmatprep.subr.mxu0 0.0
    %4360 = vmatpush1.msra.mxu0 0.0
    %4361 = vmatprep.subr.mxu0 0.0
    %4362 = vmatpush1.msra.mxu0 0.0
    %4363 = vmatprep.subr.mxu0 0.0
    %4364 = vmatpush1.msra.mxu0 %v188
    %4365 = vmatprep.subr.mxu0 0.0
    %4366 = vmatpush1.msra.mxu0 %v187
    %4367 = vmatprep.subr.mxu0 0.0
    %4368 = vmatpush1.msra.mxu0 %v186
    %4369 = vmatprep.subr.mxu0 0.0
    %4370 = vmatpush1.msra.mxu0 %v185
    %4371 = vmatprep.subr.mxu0 0.0
    %4372 = vmatpush2.msra.mxu0 0.0
    %4373 = vmatprep.subr.mxu0 0.0
    %4374 = vmatpush2.msra.mxu0 0.0
    %4375 = vmatprep.subr.mxu0 0.0
    %4376 = vmatpush2.msra.mxu0 0.0
    %4377 = vmatprep.subr.mxu0 0.0
    %4378 = vmatpush2.msra.mxu0 0.0
    %4379 = vmatprep.subr.mxu0 0.0
    %4380 = vmatpush2.msra.mxu0 0.0
    %4381 = vmatprep.subr.mxu0 0.0
    %4382 = vmatpush2.msra.mxu0 0.0
    %4383 = vmatprep.subr.mxu0 0.0
    %4384 = vmatpush2.msra.mxu0 0.0
    %4385 = vmatprep.subr.mxu0 0.0
    %4386 = vmatpush2.msra.mxu0 0.0
    %4387 = vmatprep.subr.mxu0 0.0
    %4388 = vmatpush2.msra.mxu0 0.0
    %4389 = vmatprep.subr.mxu0 0.0
    %4390 = vmatpush2.msra.mxu0 0.0
    %4391 = vmatprep.subr.mxu0 0.0
    %4392 = vmatpush2.msra.mxu0 0.0
    %4393 = vmatprep.subr.mxu0 0.0
    %4394 = vmatpush2.msra.mxu0 0.0
    %4395 = vmatprep.subr.mxu0 0.0
    %4396 = vmatpush2.msra.mxu0 0.0
    %4397 = vmatprep.subr.mxu0 0.0
    %4398 = vmatpush2.msra.mxu0 0.0
    %4399 = vmatprep.subr.mxu0 0.0
    %4400 = vmatpush2.msra.mxu0 0.0
    %4401 = vmatprep.subr.mxu0 0.0
    %4402 = vmatpush2.msra.mxu0 0.0
    %4403 = vmatprep.mubr.f32.mxu0 0.0
    %4404 = vmatmul.mubr.f32.gmra.mxu0 %v4337
    %v4405 = vpop.f32.mrf.mxu0
    %v4406 = vadd.f32 %v4335, %v4405
    %v4407 = vpop.f32.mrf.mxu0
    %4408 = vdwg.mxu0
    %v4409 = vadd.f32 %v4406, %v212
    %v4410 = vtanh.pop %v4409
    %v4411 = vsel %vm630, %v4299, -inf
    %4412 = vmax.xlane.f32.xlu0 %v4411
    %v4413 = vpop.xlane.xlu0 %4412
    %vm4414 = vcmp.eq.f32.partialorder %v4299, %v4413
    %v4415 = vsel %vm4414, %v307, 8
    %v4416 = vsel %vm630, %v4415, 2147483647
    %v4417 = vand.u32 %v4416, 65535
    %v4418 = vshra.s32 %v4416, 16
    %v4419 = vcvt.s32.f32 %v4417
    %v4420 = vcvt.s32.f32 %v4418
    %4421 = vmin.xlane.f32.xlu0 %v4420
    %v4422 = vpop.xlane.xlu0 %4421
    %vm4423 = vcmp.eq.f32.partialorder %v4420, %v4422
    %v4424 = vsel %vm4423, %v4419, inf
    %4425 = vmin.xlane.f32.xlu0 %v4424
    %v4426 = vpop.xlane.xlu0 %4425
    %v4427 = vcvt.f32.s32 %v4426
    %v4428 = vcvt.f32.s32 %v4422
    %v4429 = vshll.u32 %v4428, 16
    %v4430 = vadd.s32 %v4429, %v4427
    %v4433 = vunpack.c.l.s4 1966171168
    %v4434 = vunpack.c.0.s8 %v4433
    %v4435 = vlaneseq
    %v4436 = vshrl.u32 %v4435, 7
    %v4437 = vsub.s32 %v4434, %v4436
    %v4438 = vrot.slane %v4299, %v4437
    %v4439 = vcombine.high %v4438, %v4438
    %v4441 = vunpack.c.l.s4 1966171168
    %v4442 = vunpack.c.0.s8 %v4441
    %v4443 = vlaneseq
    %v4444 = vshrl.u32 %v4443, 7
    %v4445 = vsub.s32 %v4442, %v4444
    %v4446 = vrot.slane %v4438, %v4445
    %v4448 = vunpack.c.l.s4 1966171168
    %v4449 = vunpack.c.0.s8 %v4448
    %v4450 = vlaneseq
    %v4451 = vshrl.u32 %v4450, 7
    %v4452 = vsub.s32 %v4449, %v4451
    %v4453 = vrot.slane %v4439, %v4452
    %4456 = vst.msk [vmem:[#allocation17 + $0x7] sm:$0x1] %vm891, %v4446
    %4457 = vst.msk [vmem:[#allocation17 + $0xf] sm:$0x1] %vm891, %v4453
    %vm4458 = vcmask 58424
    %4459 = vst.msk [vmem:[#allocation18] sm:$0x3] %vm4458, %v4430
    %vm4460 = vcmask 254976
    %4461 = vst.msk [vmem:[#allocation20] sm:$0x3] %vm4460, %v4410
    %4463 = vrot.lane.b32.xlu0 %v4146, 96
    %v4464 = vpop.permute.xlu0 %4463
    %4466 = vst.msk [vmem:[#allocation21] sm:$0x3] %vm4460, %v4464
    // Predicated region
    $region98: #{tpu_custom_call.1} parent=1 // pred_check
      _
    $region99: #{tpu_custom_call.1} parent=1 // pred_check_branch
      %4468 = sbr.rel (0) target = $region101
    $region100: #{tpu_custom_call.1} parent=1 // pred_region
      %s4470 = ssub.s32 256, 256
      %4471 = vsyncadd [#allocation4], %s4470
      %s4472 = sshll.u32 [#allocation17], 4
      %s4473 = int_to_ptr.vmem [resolvable:$true] %s4472
      %4478 = dma.vmem_to_hbm [thread:$0]  %s4473, 256, %s15, [#allocation4], 128, 128, 8
    $region101: #{tpu_custom_call.1} parent=1 // pred_fallthru
      _
    // Predicated region
    $region102: #{tpu_custom_call.1} parent=1 // pred_check
      _
    $region103: #{tpu_custom_call.1} parent=1 // pred_check_branch
      %4480 = sbr.rel (0) target = $region105
    $region104: #{tpu_custom_call.1} parent=1 // pred_region
      %s4482 = ssub.s32 32, 32
      %4483 = vsyncadd [#allocation19], %s4482
      %s4485 = sshll.u32 [#allocation18], 4
      %s4486 = int_to_ptr.vmem [resolvable:$true] %s4485
      %4488 = dma.vmem_to_hbm [thread:$0]  %s4486, 32, %s16, [#allocation19]
    $region105: #{tpu_custom_call.1} parent=1 // pred_fallthru
      _
    // Predicated region
    $region106: #{tpu_custom_call.1} parent=1 // pred_check
      _
    $region107: #{tpu_custom_call.1} parent=1 // pred_check_branch
      %4490 = sbr.rel (0) target = $region109
    $region108: #{tpu_custom_call.1} parent=1 // pred_region
      %s4492 = ssub.s32 32, 32
      %4493 = vsyncadd [#allocation19], %s4492
      %s4495 = sshll.u32 [#allocation20], 4
      %s4496 = int_to_ptr.vmem [resolvable:$true] %s4495
      %4498 = dma.vmem_to_hbm [thread:$0]  %s4496, 32, %s17, [#allocation19]
    $region109: #{tpu_custom_call.1} parent=1 // pred_fallthru
      _
    // Predicated region
    $region110: #{tpu_custom_call.1} parent=1 // pred_check
      _
    $region111: #{tpu_custom_call.1} parent=1 // pred_check_branch
      %4500 = sbr.rel (0) target = $region113
    $region112: #{tpu_custom_call.1} parent=1 // pred_region
      %s4502 = ssub.s32 32, 32
      %4503 = vsyncadd [#allocation22], %s4502
      %s4505 = sshll.u32 [#allocation21], 4
      %s4506 = int_to_ptr.vmem [resolvable:$true] %s4505
      %4508 = dma.vmem_to_hbm [thread:$0]  %s4506, 32, %s18, [#allocation22]
    $region113: #{tpu_custom_call.1} parent=1 // pred_fallthru
      _
    // Predicated region
    $region114: #{tpu_custom_call.1} parent=1 // pred_check
      _
    $region115: #{tpu_custom_call.1} parent=1 // pred_check_branch
      %4510 = sbr.rel (0) target = $region117
    $region116: #{tpu_custom_call.1} parent=1 // pred_region
      %4511 = dma.done [#allocation4], 256
    $region117: #{tpu_custom_call.1} parent=1 // pred_fallthru
      _
    // Predicated region
    $region118: #{tpu_custom_call.1} parent=1 // pred_check
      _
    $region119: #{tpu_custom_call.1} parent=1 // pred_check_branch
      %4513 = sbr.rel (0) target = $region121
    $region120: #{tpu_custom_call.1} parent=1 // pred_region
      %4514 = dma.done [#allocation19], 32
    $region121: #{tpu_custom_call.1} parent=1 // pred_fallthru
      _
    // Predicated region
    $region122: #{tpu_custom_call.1} parent=1 // pred_check
      _
    $region123: #{tpu_custom_call.1} parent=1 // pred_check_branch
      %4516 = sbr.rel (0) target = $region125
    $region124: #{tpu_custom_call.1} parent=1 // pred_region
      %4517 = dma.done [#allocation19], 32
    $region125: #{tpu_custom_call.1} parent=1 // pred_fallthru
      _
    // Predicated region
    $region126: #{tpu_custom_call.1} parent=1 // pred_check
      _
    $region127: #{tpu_custom_call.1} parent=1 // pred_check_branch
      %4519 = sbr.rel (0) target = $region129
    $region128: #{tpu_custom_call.1} parent=1 // pred_region
      %4520 = dma.done [#allocation22], 32
    $region129: #{tpu_custom_call.1} parent=1 // pred_fallthru
      _
    %4521 = vsyncpa [#allocation3], 1
    %4522 = vsyncpa [#allocation6], 1
    %4523 = vsyncpa [#allocation9], 1
    %4524 = vsyncpa [#allocation12], 1
    %4525 = vsyncpa [#allocation15], 1
    %4526 = vsyncpa [#allocation4], 1
    %4527 = vsyncpa [#allocation19], 1
    %4528 = vsyncpa [#allocation22], 1

</llo_original>
